<compile_context>
chip_gen: v7x
topology: tpu7x:2x2x1
jax: 0.10.0
libtpu: 0.0.40
codegen_flags: <defaults>
</compile_context>

<pallas_src>
import math
import functools

import jax
import jax.numpy as jnp
from jax.experimental import pallas as pl
from jax.experimental.pallas import tpu as pltpu


# ----------------------------------------------------------------------------
# Pallas matmul: single-K-block, weight VMEM-resident, 1-D grid over M
# ----------------------------------------------------------------------------
def _round_up(x, m):
    return (x + m - 1) // m * m


def _mm_kernel(a_ref, b_ref, o_ref):
    # Single K block per call -> no accumulator scratch, direct store.
    o_ref[...] = jnp.dot(a_ref[...], b_ref[...],
                         preferred_element_type=jnp.float32).astype(o_ref.dtype)


def pallas_matmul(a, b, tm=512, out_dtype=jnp.float32):
    """(M,K) @ (K,N) -> (M,N) f32.  Operands cast to bf16 (MXU native), f32 accumulate.

    K and N are covered by single blocks (weight stays resident in VMEM for every M
    step); the grid is 1-D over M.  All calls in this model have K<=768, N<=384,
    M<=1536, so per-step VMEM is a few MB (safe on v5e/v6e/v7x scoped defaults).
    """
    M, K = a.shape
    K2, N = b.shape
    assert K == K2
    a = a.astype(jnp.bfloat16)
    b = b.astype(jnp.bfloat16)

    Kp = _round_up(K, 128)
    Np = _round_up(N, 128)
    Mp = _round_up(M, 8)
    tm = min(tm, Mp)
    Mp = _round_up(Mp, tm)

    if (Mp, Kp) != (M, K):
        a = jnp.pad(a, ((0, Mp - M), (0, Kp - K)))
    if (Kp, Np) != (K, N):
        b = jnp.pad(b, ((0, Kp - K), (0, Np - N)))

    out = pl.pallas_call(
        _mm_kernel,
        out_shape=jax.ShapeDtypeStruct((Mp, Np), out_dtype),
        grid_spec=pltpu.PrefetchScalarGridSpec(
            num_scalar_prefetch=0,
            grid=(Mp // tm,),
            in_specs=[
                pl.BlockSpec((tm, Kp), lambda i: (i, 0)),   # activations, tiled over M
                pl.BlockSpec((Kp, Np), lambda i: (0, 0)),   # weight: VMEM-resident
            ],
            out_specs=pl.BlockSpec((tm, Np), lambda i: (i, 0)),
        ),
        compiler_params=pltpu.CompilerParams(
            dimension_semantics=("parallel",)),
    )(a, b)
    return out[:M, :N]


# ----------------------------------------------------------------------------
# Convolutions
# ----------------------------------------------------------------------------
def conv2d_tapN(x_bhwc, w_oihw, bias):
    """3x3 conv, stride 1, padding 1, large Cin (FCN conv1).

    Taps-in-N: one Pallas matmul over channels (N = 9*Cout), activation read once,
    then an exact 9-tap shift-and-add in f32 on the small z tensor.
    """
    B, H, W, Cin = x_bhwc.shape
    Cout, _, KH, KW = w_oihw.shape
    Hp, Wp = H + 2, W + 2
    xp = jnp.pad(x_bhwc.astype(jnp.bfloat16), ((0, 0), (1, 1), (1, 1), (0, 0)))
    wall = jnp.transpose(w_oihw, (1, 2, 3, 0)).reshape(Cin, KH * KW * Cout)

    z = pallas_matmul(xp.reshape(B * Hp * Wp, Cin), wall)      # (B*Hp*Wp, 9*Cout) f32
    z = z.reshape(B, Hp, Wp, KH * KW, Cout)

    acc = jnp.zeros((B, H, W, Cout), jnp.float32)
    t = 0
    for kh in range(KH):
        for kw in range(KW):
            acc = acc + z[:, kh:kh + H, kw:kw + W, t, :]
            t += 1
    return acc + bias[None, None, None, :]


def conv3d_1_lerped(masked_bhwc, w, bias, out_depth=128):
    """Conv3d(768->8, kernel (4,3,3), stride 1, padding 1) applied to the depth-only
    trilinear upsample (B -> out_depth, H/W identity, align_corners=False) of the
    masked slices — computed WITHOUT materializing the interpolated volume.

    Because interpolation and convolution are linear, the conv of each interpolated
    depth is a lerp of per-source-slice partial results:
      z      = taps-in-N Pallas matmul on the B padded source slices
      S_src  = spatial 9-tap reduction per depth-tap kd  -> (B, H, W, KD, Cout)
      out    = einsum over depth-lerp coefficients       -> (D_out, H, W, Cout)
    Mathematically exact.
    """
    B, H, W, Cin = masked_bhwc.shape
    Cout, _, KD, KH, KW = w.shape
    Hp, Wp = H + 2, W + 2

    xp = jnp.pad(masked_bhwc.astype(jnp.bfloat16), ((0, 0), (1, 1), (1, 1), (0, 0)))
    wall = jnp.transpose(w, (1, 2, 3, 4, 0)).reshape(Cin, KD * KH * KW * Cout)

    z = pallas_matmul(xp.reshape(B * Hp * Wp, Cin), wall)       # (B*Hp*Wp, 36*Cout) f32
    z = z.reshape(B, Hp, Wp, KD, KH * KW, Cout)

    # Spatial tap reduction (f32), per depth-tap kd.
    S = jnp.zeros((B, H, W, KD, Cout), jnp.float32)
    t = 0
    for kh in range(KH):
        for kw in range(KW):
            S = S + z[:, kh:kh + H, kw:kw + W, :, t, :]
            t += 1

    # Depth-lerp coefficients (PyTorch trilinear, align_corners=False, H/W identity).
    scale = B / out_depth
    dd = jnp.arange(out_depth, dtype=jnp.float32)
    src = jnp.maximum((dd + 0.5) * scale - 0.5, 0.0)
    d0 = jnp.clip(jnp.floor(src).astype(jnp.int32), 0, B - 1)
    d1 = jnp.minimum(d0 + 1, B - 1)
    w1 = src - d0.astype(jnp.float32)
    coef = (jax.nn.one_hot(d0, B, dtype=jnp.float32) * (1.0 - w1)[:, None]
            + jax.nn.one_hot(d1, B, dtype=jnp.float32) * w1[:, None])    # (out_depth, B)

    # Zero rows at padded-depth boundaries (the conv's depth zero-padding of 1).
    coef_p = jnp.pad(coef, ((1, 1), (0, 0)))                             # (out_depth+2, B)
    D_out = out_depth + 2 - KD + 1                                       # 127
    idx = jnp.arange(D_out)[:, None] + jnp.arange(KD)[None, :]           # (D_out, KD)
    C = coef_p[idx]                                                      # (D_out, KD, B)

    out = jnp.einsum('oks,shwkc->ohwc', C, S) + bias[None, None, None, :]
    return out                                                           # (D_out, H, W, Cout)


def conv3d_im2col(x_dhwc, w, bias):
    """Conv3d(8->256, kernel (4,3,3), pad 1): tiny im2col (K=288) + Pallas matmul."""
    D, H, W, Cin = x_dhwc.shape
    Cout, _, KD, KH, KW = w.shape
    D_out = D + 2 - KD + 1
    xp = jnp.pad(x_dhwc.astype(jnp.bfloat16), ((1, 1), (1, 1), (1, 1), (0, 0)))
    cols = []
    for kd in range(KD):
        for kh in range(KH):
            for kw in range(KW):
                cols.append(xp[kd:kd + D_out, kh:kh + H, kw:kw + W, :])
    patches = jnp.concatenate(cols, axis=-1).reshape(
        D_out * H * W, KD * KH * KW * Cin)
    wmat = jnp.transpose(w, (2, 3, 4, 1, 0)).reshape(KD * KH * KW * Cin, Cout)
    out = pallas_matmul(patches, wmat) + bias[None, :]
    return out.reshape(D_out, H, W, Cout)


def conv2d_small_jax(x_bhwc, w_oihw, bias):
    """3x3 conv with tiny channel counts (FCN convs 2-4): plain XLA."""
    B, H, W, Cin = x_bhwc.shape
    xp = jnp.pad(x_bhwc, ((0, 0), (1, 1), (1, 1), (0, 0)))
    wt = jnp.transpose(w_oihw, (2, 3, 1, 0))            # (3,3,Cin,Cout)
    acc = 0.0
    for kh in range(3):
        for kw in range(3):
            acc = acc + jnp.einsum('bhwc,cf->bhwf',
                                   xp[:, kh:kh + H, kw:kw + W, :], wt[kh, kw])
    return acc + bias


def maxpool3d(x_dhwc, kd, kh, kw):
    D, H, W, C = x_dhwc.shape
    Do, Ho, Wo = D // kd, H // kh, W // kw
    x = x_dhwc[:Do * kd, :Ho * kh, :Wo * kw, :]
    x = x.reshape(Do, kd, Ho, kh, Wo, kw, C)
    return x.max(axis=(1, 3, 5))


# ----------------------------------------------------------------------------
# TabTransformer (lucidrains tab_transformer_pytorch semantics) -- tiny branch,
# plain JAX (4 tokens x dim 32; dropout identity at eval).
# ----------------------------------------------------------------------------
CATEGORIES = (3, 2, 2, 2)
NUM_CONT = 23
TAB_DIM = 32
TAB_DEPTH = 6
TAB_HEADS = 8
TAB_DIM_HEAD = 16
NUM_SPECIAL_TOKENS = 2


def _layernorm(x, g, b, eps=1e-5):
    m = x.mean(-1, keepdims=True)
    v = ((x - m) ** 2).mean(-1, keepdims=True)
    return (x - m) / jnp.sqrt(v + eps) * g + b


def init_tab_transformer(key, dim_out=256, mlp_hidden_mults=(4, 2)):
    keys = iter(jax.random.split(key, 64))

    def lin(fi, fo):
        return {'w': jax.random.normal(next(keys), (fi, fo), jnp.float32)
                     * (1.0 / math.sqrt(fi)),
                'b': jnp.zeros((fo,), jnp.float32)}

    total_tokens = sum(CATEGORIES) + NUM_SPECIAL_TOKENS
    inner = TAB_HEADS * TAB_DIM_HEAD
    p = {'embed': jax.random.normal(next(keys), (total_tokens, TAB_DIM)) * 0.02}
    layers = []
    for _ in range(TAB_DEPTH):
        layers.append({
            'ln1_g': jnp.ones((TAB_DIM,)), 'ln1_b': jnp.zeros((TAB_DIM,)),
            'qkv': lin(TAB_DIM, inner * 3)['w'],          # no bias
            'out': lin(inner, TAB_DIM),
            'ln2_g': jnp.ones((TAB_DIM,)), 'ln2_b': jnp.zeros((TAB_DIM,)),
            'ff1': lin(TAB_DIM, TAB_DIM * 4 * 2),          # GEGLU
            'ff2': lin(TAB_DIM * 4, TAB_DIM),
        })
    p['layers'] = layers
    p['cont_ln_g'] = jnp.ones((NUM_CONT,))
    p['cont_ln_b'] = jnp.zeros((NUM_CONT,))
    input_size = TAB_DIM * len(CATEGORIES) + NUM_CONT          # 151
    l = input_size // 8                                        # 18
    dims = [input_size, l * mlp_hidden_mults[0], l * mlp_hidden_mults[1], dim_out]
    p['mlp'] = [lin(a, b) for a, b in zip(dims[:-1], dims[1:])]
    offsets = [NUM_SPECIAL_TOKENS]
    for c in CATEGORIES[:-1]:
        offsets.append(offsets[-1] + c)
    p['cat_offset'] = jnp.array(offsets, jnp.int32)
    return p


def tab_transformer_fwd(p, x_categ, x_cont):
    tokens = x_categ + p['cat_offset'][None, :]
    x = p['embed'][tokens]                                     # (B, n_cat, dim)
    Bt, n, dim = x.shape
    scale = TAB_DIM_HEAD ** -0.5
    for lp in p['layers']:
        h = _layernorm(x, lp['ln1_g'], lp['ln1_b'])
        qkv = h @ lp['qkv']
        q, k, v = jnp.split(qkv, 3, axis=-1)

        def heads(t):
            return t.reshape(Bt, n, TAB_HEADS, TAB_DIM_HEAD).transpose(0, 2, 1, 3)

        q, k, v = heads(q), heads(k), heads(v)
        sim = jnp.einsum('bhid,bhjd->bhij', q, k) * scale
        attn = jax.nn.softmax(sim, axis=-1)
        o = jnp.einsum('bhij,bhjd->bhid', attn, v)
        o = o.transpose(0, 2, 1, 3).reshape(Bt, n, TAB_HEADS * TAB_DIM_HEAD)
        x = o @ lp['out']['w'] + lp['out']['b'] + x
        h = _layernorm(x, lp['ln2_g'], lp['ln2_b'])
        a = h @ lp['ff1']['w'] + lp['ff1']['b']
        a1, gates = jnp.split(a, 2, axis=-1)
        a = a1 * jax.nn.gelu(gates, approximate=False)
        x = a @ lp['ff2']['w'] + lp['ff2']['b'] + x
    flat = x.reshape(Bt, -1)
    cont = _layernorm(x_cont, p['cont_ln_g'], p['cont_ln_b'])
    h = jnp.concatenate([flat, cont], axis=-1)
    mlps = p['mlp']
    for i, lp in enumerate(mlps):
        h = h @ lp['w'] + lp['b']
        if i < len(mlps) - 1:
            h = jax.nn.relu(h)
    return h                                                   # (B, 256)


# ----------------------------------------------------------------------------
# union_model_concat parameters + forward (mode='test')
# ----------------------------------------------------------------------------
def init_model(key, d_model=256):
    ks = jax.random.split(key, 8)

    def conv_w(k, cout, cin, *ksz):
        fan_in = cin * math.prod(ksz)
        return {'w': jax.random.normal(k, (cout, cin, *ksz), jnp.float32)
                     / math.sqrt(fan_in),
                'b': jnp.zeros((cout,), jnp.float32)}

    return {
        'tab': init_tab_transformer(ks[0], dim_out=d_model),
        'fcn': [conv_w(ks[1], 32, 768, 3, 3),
                conv_w(ks[2], 16, 32, 3, 3),
                conv_w(ks[3], 8, 16, 3, 3),
                conv_w(ks[4], 1, 8, 3, 3)],
        'conv3_1': conv_w(ks[5], 8, 768, 4, 3, 3),
        'conv3_2': conv_w(ks[6], d_model, 8, 4, 3, 3),
        # classifier Linear(512, 2): kaiming_normal_(fan_out)
        'cls': {'w': jax.random.normal(ks[7], (2, d_model * 2), jnp.float32)
                     * math.sqrt(2.0 / 2),
                'b': jnp.zeros((2,), jnp.float32)},
    }


def union_model_forward(params, x_categ, x_numer, img_data,
                        inner_slice_mask, inter_slice_mask):
    # ---- tabular branch (tiny -> plain JAX)
    tabular_feat = tab_transformer_fwd(params['tab'], x_categ, x_numer)   # (1,256)

    # ---- image branch (channels-last everywhere)
    x = img_data[0]                                   # (B, 14, 14, 768)  NHWC
    fcn = params['fcn']
    h = conv2d_tapN(x, fcn[0]['w'], fcn[0]['b'])      # 768 -> 32 (Pallas)
    for cw in fcn[1:]:
        h = conv2d_small_jax(h, cw['w'], cw['b'])     # 32->16->8->1 (tiny, XLA)
    pred_mask = jax.nn.sigmoid(h[..., 0])             # (B, 14, 14)
    # NOTE: inner_slice_mask only builds gt_mask for dice_loss on the 'train' path;
    # inter_slice_mask is unused in forward.  mode='test' returns class_output only.
    # TODO(synk): dice_loss(pred_mask, gt_mask) is an external undefined fn (train only).

    masked = x * pred_mask[..., None]                 # (B, 14, 14, 768)

    # conv3d_1 over the depth-trilinear-upsampled volume, via linearity of the
    # interpolation (no 128-deep volume is ever materialized).
    f = conv3d_1_lerped(masked, params['conv3_1']['w'], params['conv3_1']['b'],
                        out_depth=128)                # (127, 14, 14, 8)
    f = maxpool3d(f, 4, 2, 2)                         # (31, 7, 7, 8)
    f = conv3d_im2col(f, params['conv3_2']['w'], params['conv3_2']['b'])   # (30,7,7,256)
    f = maxpool3d(f, 4, 2, 2)                         # (7, 3, 3, 256)
    final_feat = f.mean(axis=(0, 1, 2))[None, :]      # (1, 256)  (AdaptiveAvgPool3d)

    union_feat = jnp.concatenate([final_feat, tabular_feat], axis=-1)      # (1,512)
    # classifier: far below one MXU tile -> plain XLA (per review)
    logits = union_feat @ params['cls']['w'].T + params['cls']['b'][None, :]
    return logits                                     # (1, 2)


# ----------------------------------------------------------------------------
if __name__ == "__main__":
    key = jax.random.PRNGKey(0)
    k_param, k_cat, k_num, k_img, k_m1 = jax.random.split(key, 5)

    params = init_model(k_param)

    B = 2  # number of slices (768 ch / 14x14 / depth-128 are fixed by the module)
    cats = jnp.array(CATEGORIES, jnp.int32)
    x_categ = jax.random.randint(k_cat, (1, len(CATEGORIES)), 0, 1000) % cats[None, :]
    x_numer = jax.random.normal(k_num, (1, NUM_CONT), jnp.float32)
    img_data = jax.random.normal(k_img, (1, B, 14, 14, 768), jnp.float32)
    inner_slice_mask = (jax.random.uniform(k_m1, (1, B, 197)) > 0.5).astype(jnp.float32)
    inter_slice_mask = jnp.ones((1, B, B), jnp.float32)

    fwd = jax.jit(functools.partial(union_model_forward, params))
    logits = fwd(x_categ, x_numer, img_data, inner_slice_mask, inter_slice_mask)
    jax.block_until_ready(logits)

    assert logits.shape == (1, 2) and logits.dtype == jnp.float32
    assert bool(jnp.all(jnp.isfinite(logits)))
    print("KERNEL_OK")
</pallas_src>

<mosaic_0001>
module attributes {stable_mosaic.version = 11 : i64} {
  func.func @_mm_kernel(%arg0: i32, %arg1: memref<512x768xbf16, #tpu.memory_space<vmem>>, %arg2: memref<768x384xbf16, #tpu.memory_space<vmem>>, %arg3: memref<512x384xf32, #tpu.memory_space<vmem>>) attributes {dimension_semantics = [#tpu.dimension_semantics<parallel>], iteration_bounds = array<i64: 1>, scalar_prefetch = 0 : i64, scratch_operands = 0 : i64, tpu.core_type = #tpu.core_type<tc>, window_params = [{transform_indices = @transform_0, window_bounds = array<i64: 512, 768>}, {pipeline_mode = #tpu.pipeline_mode<synchronous>, transform_indices = @transform_1, window_bounds = array<i64: 768, 384>}, {transform_indices = @transform_2, window_bounds = array<i64: 512, 384>}]} {
    %c0 = arith.constant 0 : index
    %c0_0 = arith.constant 0 : index
    %0 = vector.load %arg1[%c0, %c0_0] : memref<512x768xbf16, #tpu.memory_space<vmem>>, vector<512x768xbf16>
    %c0_1 = arith.constant 0 : index
    %c0_2 = arith.constant 0 : index
    %1 = vector.load %arg2[%c0_1, %c0_2] : memref<768x384xbf16, #tpu.memory_space<vmem>>, vector<768x384xbf16>
    %cst = arith.constant dense<0.000000e+00> : vector<512x384xf32>
    %2 = tpu.matmul %0, %1, %cst {dimension_numbers = #tpu.dot_dimension_numbers<[1], [0], [0], [1], [0, 0, 1, 1], [], []>} : vector<512x768xbf16>, vector<768x384xbf16>, vector<512x384xf32> -> vector<512x384xf32>
    %c0_3 = arith.constant 0 : index
    %c0_4 = arith.constant 0 : index
    %3 = vector.load %arg3[%c0_3, %c0_4] : memref<512x384xf32, #tpu.memory_space<vmem>>, vector<512x384xf32>
    tpu.vector_store %arg3[%c0_3, %c0_4], %2 {strides = array<i32>} : memref<512x384xf32, #tpu.memory_space<vmem>>, vector<512x384xf32>,
    return
  }
  func.func @transform_0(%arg0: i32) -> (i32, i32) {
    %c0_i32 = arith.constant 0 : i32
    %c0_i32_0 = arith.constant 0 : i32
    return %arg0, %c0_i32 : i32, i32
  }
  func.func @transform_1(%arg0: i32) -> (i32, i32) {
    %c0_i32 = arith.constant 0 : i32
    %c0_i32_0 = arith.constant 0 : i32
    %c0_i32_1 = arith.constant 0 : i32
    return %c0_i32, %c0_i32_0 : i32, i32
  }
  func.func @transform_2(%arg0: i32) -> (i32, i32) {
    %c0_i32 = arith.constant 0 : i32
    %c0_i32_0 = arith.constant 0 : i32
    return %arg0, %c0_i32 : i32, i32
  }
}

module attributes {stable_mosaic.version = 11 : i64} {
  func.func @_mm_kernel(%arg0: i32, %arg1: memref<512x384xbf16, #tpu.memory_space<vmem>>, %arg2: memref<384x256xbf16, #tpu.memory_space<vmem>>, %arg3: memref<512x256xf32, #tpu.memory_space<vmem>>) attributes {dimension_semantics = [#tpu.dimension_semantics<parallel>], iteration_bounds = array<i64: 3>, scalar_prefetch = 0 : i64, scratch_operands = 0 : i64, tpu.core_type = #tpu.core_type<tc>, window_params = [{transform_indices = @transform_0, window_bounds = array<i64: 512, 384>}, {pipeline_mode = #tpu.pipeline_mode<synchronous>, transform_indices = @transform_1, window_bounds = array<i64: 384, 256>}, {transform_indices = @transform_2, window_bounds = array<i64: 512, 256>}]} {
    %c0 = arith.constant 0 : index
    %c0_0 = arith.constant 0 : index
    %0 = vector.load %arg1[%c0, %c0_0] : memref<512x384xbf16, #tpu.memory_space<vmem>>, vector<512x384xbf16>
    %c0_1 = arith.constant 0 : index
    %c0_2 = arith.constant 0 : index
    %1 = vector.load %arg2[%c0_1, %c0_2] : memref<384x256xbf16, #tpu.memory_space<vmem>>, vector<384x256xbf16>
    %cst = arith.constant dense<0.000000e+00> : vector<512x256xf32>
    %2 = tpu.matmul %0, %1, %cst {dimension_numbers = #tpu.dot_dimension_numbers<[1], [0], [0], [1], [0, 0, 1, 1], [], []>} : vector<512x384xbf16>, vector<384x256xbf16>, vector<512x256xf32> -> vector<512x256xf32>
    %c0_3 = arith.constant 0 : index
    %c0_4 = arith.constant 0 : index
    %3 = vector.load %arg3[%c0_3, %c0_4] : memref<512x256xf32, #tpu.memory_space<vmem>>, vector<512x256xf32>
    tpu.vector_store %arg3[%c0_3, %c0_4], %2 {strides = array<i32>} : memref<512x256xf32, #tpu.memory_space<vmem>>, vector<512x256xf32>,
    return
  }
  func.func @transform_0(%arg0: i32) -> (i32, i32) {
    %c0_i32 = arith.constant 0 : i32
    %c0_i32_0 = arith.constant 0 : i32
    return %arg0, %c0_i32 : i32, i32
  }
  func.func @transform_1(%arg0: i32) -> (i32, i32) {
    %c0_i32 = arith.constant 0 : i32
    %c0_i32_0 = arith.constant 0 : i32
    %c0_i32_1 = arith.constant 0 : i32
    return %c0_i32, %c0_i32_0 : i32, i32
  }
  func.func @transform_2(%arg0: i32) -> (i32, i32) {
    %c0_i32 = arith.constant 0 : i32
    %c0_i32_0 = arith.constant 0 : i32
    return %arg0, %c0_i32 : i32, i32
  }
}

</mosaic_0001>

<llo_original>
// kernel: union_model_forward.3
$region0: #{union_model_forward.3}
  #allocation0 [shape = 'u32[]', space=smem, size = 0x4, offset = 0x4, fixed_abs, tag = 'smem constant byte address 0x4 - core index']
  #allocation1 [shape = 'u32[144,128]{1,0:T(1,128)}', space=vmem, size = 0x12000, scoped, tag = 'internal scratch']
  %s0 = inlined_call_operand.vmem [shape: bf16[512,768], index: 0, kind: input, shape index: {}]
  %s1 = inlined_call_operand.vmem [shape: bf16[768,384], index: 1, kind: input, shape index: {}]
  %s2 = inlined_call_operand.vmem [shape: f32[512,384], index: 2, kind: output, shape index: {}]
  %s3 = sld [smem:[#allocation0]]
  $region18: #{union_model_forward.3} parent=0
    _
  %s5 = ssub.s32 1, %s3
  %s6 = scalar_select 0, %s5, %s3
  // Predicated region
  $region2: #{union_model_forward.3} parent=0 // pred_check
    _
  $region3: #{union_model_forward.3} parent=0 // pred_check_branch
    %8 = sbr.rel (0) target = $region5
  $region4: #{union_model_forward.3} parent=0 // pred_region
    _
  $region5: #{union_model_forward.3} parent=0 // pred_fallthru
    _
  // Predicated region
  $region6: #{union_model_forward.3} parent=0 // pred_check
    _
  $region7: #{union_model_forward.3} parent=0 // pred_check_branch
    %10 = sbr.rel (0) target = $region9
  $region8: #{union_model_forward.3} parent=0 // pred_region
    _
  $region9: #{union_model_forward.3} parent=0 // pred_fallthru
    _
  %v12 = vld [vmem:[%s0] sm:$0xff]
  %v13 = vld [vmem:[%s0 + $0x8] sm:$0xff]
  %v14 = vld [vmem:[%s0 + $0x10] sm:$0xff]
  %v15 = vld [vmem:[%s0 + $0x18] sm:$0xff]
  %v16 = vld [vmem:[%s0 + $0x20] sm:$0xff]
  %v17 = vld [vmem:[%s0 + $0x28] sm:$0xff]
  %v18 = vld [vmem:[%s0 + $0x30] sm:$0xff]
  %v19 = vld [vmem:[%s0 + $0x38] sm:$0xff]
  %v20 = vld [vmem:[%s0 + $0x40] sm:$0xff]
  %v21 = vld [vmem:[%s0 + $0x48] sm:$0xff]
  %v22 = vld [vmem:[%s0 + $0x50] sm:$0xff]
  %v23 = vld [vmem:[%s0 + $0x58] sm:$0xff]
  %v24 = vld [vmem:[%s0 + $0x60] sm:$0xff]
  %v25 = vld [vmem:[%s0 + $0x68] sm:$0xff]
  %v26 = vld [vmem:[%s0 + $0x70] sm:$0xff]
  %v27 = vld [vmem:[%s0 + $0x78] sm:$0xff]
  %v28 = vld [vmem:[%s0 + $0x80] sm:$0xff]
  %v29 = vld [vmem:[%s0 + $0x88] sm:$0xff]
  %v30 = vld [vmem:[%s0 + $0x90] sm:$0xff]
  %v31 = vld [vmem:[%s0 + $0x98] sm:$0xff]
  %v32 = vld [vmem:[%s0 + $0xa0] sm:$0xff]
  %v33 = vld [vmem:[%s0 + $0xa8] sm:$0xff]
  %v34 = vld [vmem:[%s0 + $0xb0] sm:$0xff]
  %v35 = vld [vmem:[%s0 + $0xb8] sm:$0xff]
  %v36 = vld [vmem:[%s0 + $0xc0] sm:$0xff]
  %v37 = vld [vmem:[%s0 + $0xc8] sm:$0xff]
  %v38 = vld [vmem:[%s0 + $0xd0] sm:$0xff]
  %v39 = vld [vmem:[%s0 + $0xd8] sm:$0xff]
  %v40 = vld [vmem:[%s0 + $0xe0] sm:$0xff]
  %v41 = vld [vmem:[%s0 + $0xe8] sm:$0xff]
  %v42 = vld [vmem:[%s0 + $0xf0] sm:$0xff]
  %v43 = vld [vmem:[%s0 + $0xf8] sm:$0xff]
  %v44 = vld [vmem:[%s0 + $0x100] sm:$0xff]
  %v45 = vld [vmem:[%s0 + $0x108] sm:$0xff]
  %v46 = vld [vmem:[%s0 + $0x110] sm:$0xff]
  %v47 = vld [vmem:[%s0 + $0x118] sm:$0xff]
  %v48 = vld [vmem:[%s0 + $0x120] sm:$0xff]
  %v49 = vld [vmem:[%s0 + $0x128] sm:$0xff]
  %v50 = vld [vmem:[%s0 + $0x130] sm:$0xff]
  %v51 = vld [vmem:[%s0 + $0x138] sm:$0xff]
  %v52 = vld [vmem:[%s0 + $0x140] sm:$0xff]
  %v53 = vld [vmem:[%s0 + $0x148] sm:$0xff]
  %v54 = vld [vmem:[%s0 + $0x150] sm:$0xff]
  %v55 = vld [vmem:[%s0 + $0x158] sm:$0xff]
  %v56 = vld [vmem:[%s0 + $0x160] sm:$0xff]
  %v57 = vld [vmem:[%s0 + $0x168] sm:$0xff]
  %v58 = vld [vmem:[%s0 + $0x170] sm:$0xff]
  %v59 = vld [vmem:[%s0 + $0x178] sm:$0xff]
  %v60 = vld [vmem:[%s0 + $0x180] sm:$0xff]
  %v61 = vld [vmem:[%s0 + $0x188] sm:$0xff]
  %v62 = vld [vmem:[%s0 + $0x190] sm:$0xff]
  %v63 = vld [vmem:[%s0 + $0x198] sm:$0xff]
  %v64 = vld [vmem:[%s0 + $0x1a0] sm:$0xff]
  %v65 = vld [vmem:[%s0 + $0x1a8] sm:$0xff]
  %v66 = vld [vmem:[%s0 + $0x1b0] sm:$0xff]
  %v67 = vld [vmem:[%s0 + $0x1b8] sm:$0xff]
  %v68 = vld [vmem:[%s0 + $0x1c0] sm:$0xff]
  %v69 = vld [vmem:[%s0 + $0x1c8] sm:$0xff]
  %v70 = vld [vmem:[%s0 + $0x1d0] sm:$0xff]
  %v71 = vld [vmem:[%s0 + $0x1d8] sm:$0xff]
  %v72 = vld [vmem:[%s0 + $0x1e0] sm:$0xff]
  %v73 = vld [vmem:[%s0 + $0x1e8] sm:$0xff]
  %v74 = vld [vmem:[%s0 + $0x1f0] sm:$0xff]
  %v75 = vld [vmem:[%s0 + $0x1f8] sm:$0xff]
  %v76 = vld [vmem:[%s0 + $0x200] sm:$0xff]
  %v77 = vld [vmem:[%s0 + $0x208] sm:$0xff]
  %v78 = vld [vmem:[%s0 + $0x210] sm:$0xff]
  %v79 = vld [vmem:[%s0 + $0x218] sm:$0xff]
  %v80 = vld [vmem:[%s0 + $0x220] sm:$0xff]
  %v81 = vld [vmem:[%s0 + $0x228] sm:$0xff]
  %v82 = vld [vmem:[%s0 + $0x230] sm:$0xff]
  %v83 = vld [vmem:[%s0 + $0x238] sm:$0xff]
  %v84 = vld [vmem:[%s0 + $0x240] sm:$0xff]
  %v85 = vld [vmem:[%s0 + $0x248] sm:$0xff]
  %v86 = vld [vmem:[%s0 + $0x250] sm:$0xff]
  %v87 = vld [vmem:[%s0 + $0x258] sm:$0xff]
  %v88 = vld [vmem:[%s0 + $0x260] sm:$0xff]
  %v89 = vld [vmem:[%s0 + $0x268] sm:$0xff]
  %v90 = vld [vmem:[%s0 + $0x270] sm:$0xff]
  %v91 = vld [vmem:[%s0 + $0x278] sm:$0xff]
  %v92 = vld [vmem:[%s0 + $0x280] sm:$0xff]
  %v93 = vld [vmem:[%s0 + $0x288] sm:$0xff]
  %v94 = vld [vmem:[%s0 + $0x290] sm:$0xff]
  %v95 = vld [vmem:[%s0 + $0x298] sm:$0xff]
  %v96 = vld [vmem:[%s0 + $0x2a0] sm:$0xff]
  %v97 = vld [vmem:[%s0 + $0x2a8] sm:$0xff]
  %v98 = vld [vmem:[%s0 + $0x2b0] sm:$0xff]
  %v99 = vld [vmem:[%s0 + $0x2b8] sm:$0xff]
  %v100 = vld [vmem:[%s0 + $0x2c0] sm:$0xff]
  %v101 = vld [vmem:[%s0 + $0x2c8] sm:$0xff]
  %v102 = vld [vmem:[%s0 + $0x2d0] sm:$0xff]
  %v103 = vld [vmem:[%s0 + $0x2d8] sm:$0xff]
  %v104 = vld [vmem:[%s0 + $0x2e0] sm:$0xff]
  %v105 = vld [vmem:[%s0 + $0x2e8] sm:$0xff]
  %v106 = vld [vmem:[%s0 + $0x2f0] sm:$0xff]
  %v107 = vld [vmem:[%s0 + $0x2f8] sm:$0xff]
  %v108 = vld [vmem:[%s0 + $0x300] sm:$0xff]
  %v109 = vld [vmem:[%s0 + $0x308] sm:$0xff]
  %v110 = vld [vmem:[%s0 + $0x310] sm:$0xff]
  %v111 = vld [vmem:[%s0 + $0x318] sm:$0xff]
  %v112 = vld [vmem:[%s0 + $0x320] sm:$0xff]
  %v113 = vld [vmem:[%s0 + $0x328] sm:$0xff]
  %v114 = vld [vmem:[%s0 + $0x330] sm:$0xff]
  %v115 = vld [vmem:[%s0 + $0x338] sm:$0xff]
  %v116 = vld [vmem:[%s0 + $0x340] sm:$0xff]
  %v117 = vld [vmem:[%s0 + $0x348] sm:$0xff]
  %v118 = vld [vmem:[%s0 + $0x350] sm:$0xff]
  %v119 = vld [vmem:[%s0 + $0x358] sm:$0xff]
  %v120 = vld [vmem:[%s0 + $0x360] sm:$0xff]
  %v121 = vld [vmem:[%s0 + $0x368] sm:$0xff]
  %v122 = vld [vmem:[%s0 + $0x370] sm:$0xff]
  %v123 = vld [vmem:[%s0 + $0x378] sm:$0xff]
  %v124 = vld [vmem:[%s0 + $0x380] sm:$0xff]
  %v125 = vld [vmem:[%s0 + $0x388] sm:$0xff]
  %v126 = vld [vmem:[%s0 + $0x390] sm:$0xff]
  %v127 = vld [vmem:[%s0 + $0x398] sm:$0xff]
  %v128 = vld [vmem:[%s0 + $0x3a0] sm:$0xff]
  %v129 = vld [vmem:[%s0 + $0x3a8] sm:$0xff]
  %v130 = vld [vmem:[%s0 + $0x3b0] sm:$0xff]
  %v131 = vld [vmem:[%s0 + $0x3b8] sm:$0xff]
  %v132 = vld [vmem:[%s0 + $0x3c0] sm:$0xff]
  %v133 = vld [vmem:[%s0 + $0x3c8] sm:$0xff]
  %v134 = vld [vmem:[%s0 + $0x3d0] sm:$0xff]
  %v135 = vld [vmem:[%s0 + $0x3d8] sm:$0xff]
  %v136 = vld [vmem:[%s0 + $0x3e0] sm:$0xff]
  %v137 = vld [vmem:[%s0 + $0x3e8] sm:$0xff]
  %v138 = vld [vmem:[%s0 + $0x3f0] sm:$0xff]
  %v139 = vld [vmem:[%s0 + $0x3f8] sm:$0xff]
  %v140 = vld [vmem:[%s0 + $0x400] sm:$0xff]
  %v141 = vld [vmem:[%s0 + $0x408] sm:$0xff]
  %v142 = vld [vmem:[%s0 + $0x410] sm:$0xff]
  %v143 = vld [vmem:[%s0 + $0x418] sm:$0xff]
  %v144 = vld [vmem:[%s0 + $0x420] sm:$0xff]
  %v145 = vld [vmem:[%s0 + $0x428] sm:$0xff]
  %v146 = vld [vmem:[%s0 + $0x430] sm:$0xff]
  %v147 = vld [vmem:[%s0 + $0x438] sm:$0xff]
  %v148 = vld [vmem:[%s0 + $0x440] sm:$0xff]
  %v149 = vld [vmem:[%s0 + $0x448] sm:$0xff]
  %v150 = vld [vmem:[%s0 + $0x450] sm:$0xff]
  %v151 = vld [vmem:[%s0 + $0x458] sm:$0xff]
  %v152 = vld [vmem:[%s0 + $0x460] sm:$0xff]
  %v153 = vld [vmem:[%s0 + $0x468] sm:$0xff]
  %v154 = vld [vmem:[%s0 + $0x470] sm:$0xff]
  %v155 = vld [vmem:[%s0 + $0x478] sm:$0xff]
  %v156 = vld [vmem:[%s0 + $0x480] sm:$0xff]
  %v157 = vld [vmem:[%s0 + $0x488] sm:$0xff]
  %v158 = vld [vmem:[%s0 + $0x490] sm:$0xff]
  %v159 = vld [vmem:[%s0 + $0x498] sm:$0xff]
  %v160 = vld [vmem:[%s0 + $0x4a0] sm:$0xff]
  %v161 = vld [vmem:[%s0 + $0x4a8] sm:$0xff]
  %v162 = vld [vmem:[%s0 + $0x4b0] sm:$0xff]
  %v163 = vld [vmem:[%s0 + $0x4b8] sm:$0xff]
  %v164 = vld [vmem:[%s0 + $0x4c0] sm:$0xff]
  %v165 = vld [vmem:[%s0 + $0x4c8] sm:$0xff]
  %v166 = vld [vmem:[%s0 + $0x4d0] sm:$0xff]
  %v167 = vld [vmem:[%s0 + $0x4d8] sm:$0xff]
  %v168 = vld [vmem:[%s0 + $0x4e0] sm:$0xff]
  %v169 = vld [vmem:[%s0 + $0x4e8] sm:$0xff]
  %v170 = vld [vmem:[%s0 + $0x4f0] sm:$0xff]
  %v171 = vld [vmem:[%s0 + $0x4f8] sm:$0xff]
  %v172 = vld [vmem:[%s0 + $0x500] sm:$0xff]
  %v173 = vld [vmem:[%s0 + $0x508] sm:$0xff]
  %v174 = vld [vmem:[%s0 + $0x510] sm:$0xff]
  %v175 = vld [vmem:[%s0 + $0x518] sm:$0xff]
  %v176 = vld [vmem:[%s0 + $0x520] sm:$0xff]
  %v177 = vld [vmem:[%s0 + $0x528] sm:$0xff]
  %v178 = vld [vmem:[%s0 + $0x530] sm:$0xff]
  %v179 = vld [vmem:[%s0 + $0x538] sm:$0xff]
  %v180 = vld [vmem:[%s0 + $0x540] sm:$0xff]
  %v181 = vld [vmem:[%s0 + $0x548] sm:$0xff]
  %v182 = vld [vmem:[%s0 + $0x550] sm:$0xff]
  %v183 = vld [vmem:[%s0 + $0x558] sm:$0xff]
  %v184 = vld [vmem:[%s0 + $0x560] sm:$0xff]
  %v185 = vld [vmem:[%s0 + $0x568] sm:$0xff]
  %v186 = vld [vmem:[%s0 + $0x570] sm:$0xff]
  %v187 = vld [vmem:[%s0 + $0x578] sm:$0xff]
  %v188 = vld [vmem:[%s0 + $0x580] sm:$0xff]
  %v189 = vld [vmem:[%s0 + $0x588] sm:$0xff]
  %v190 = vld [vmem:[%s0 + $0x590] sm:$0xff]
  %v191 = vld [vmem:[%s0 + $0x598] sm:$0xff]
  %v192 = vld [vmem:[%s0 + $0x5a0] sm:$0xff]
  %v193 = vld [vmem:[%s0 + $0x5a8] sm:$0xff]
  %v194 = vld [vmem:[%s0 + $0x5b0] sm:$0xff]
  %v195 = vld [vmem:[%s0 + $0x5b8] sm:$0xff]
  %v196 = vld [vmem:[%s0 + $0x5c0] sm:$0xff]
  %v197 = vld [vmem:[%s0 + $0x5c8] sm:$0xff]
  %v198 = vld [vmem:[%s0 + $0x5d0] sm:$0xff]
  %v199 = vld [vmem:[%s0 + $0x5d8] sm:$0xff]
  %v200 = vld [vmem:[%s0 + $0x5e0] sm:$0xff]
  %v201 = vld [vmem:[%s0 + $0x5e8] sm:$0xff]
  %v202 = vld [vmem:[%s0 + $0x5f0] sm:$0xff]
  %v203 = vld [vmem:[%s0 + $0x5f8] sm:$0xff]
  %v204 = vld [vmem:[%s1] sm:$0xff]
  %v205 = vld [vmem:[%s1 + $0x8] sm:$0xf]
  %v206 = vld [vmem:[%s1 + $0xc] sm:$0xff]
  %v207 = vld [vmem:[%s1 + $0x14] sm:$0xf]
  %v208 = vld [vmem:[%s1 + $0x18] sm:$0xff]
  %v209 = vld [vmem:[%s1 + $0x20] sm:$0xf]
  %v210 = vld [vmem:[%s1 + $0x24] sm:$0xff]
  %v211 = vld [vmem:[%s1 + $0x2c] sm:$0xf]
  %v212 = vld [vmem:[%s1 + $0x30] sm:$0xff]
  %v213 = vld [vmem:[%s1 + $0x38] sm:$0xf]
  %v214 = vld [vmem:[%s1 + $0x3c] sm:$0xff]
  %v215 = vld [vmem:[%s1 + $0x44] sm:$0xf]
  %v216 = vld [vmem:[%s1 + $0x48] sm:$0xff]
  %v217 = vld [vmem:[%s1 + $0x50] sm:$0xf]
  %v218 = vld [vmem:[%s1 + $0x54] sm:$0xff]
  %v219 = vld [vmem:[%s1 + $0x5c] sm:$0xf]
  %v220 = vld [vmem:[%s1 + $0x60] sm:$0xff]
  %v221 = vld [vmem:[%s1 + $0x68] sm:$0xf]
  %v222 = vld [vmem:[%s1 + $0x6c] sm:$0xff]
  %v223 = vld [vmem:[%s1 + $0x74] sm:$0xf]
  %v224 = vld [vmem:[%s1 + $0x78] sm:$0xff]
  %v225 = vld [vmem:[%s1 + $0x80] sm:$0xf]
  %v226 = vld [vmem:[%s1 + $0x84] sm:$0xff]
  %v227 = vld [vmem:[%s1 + $0x8c] sm:$0xf]
  %v228 = vld [vmem:[%s1 + $0x90] sm:$0xff]
  %v229 = vld [vmem:[%s1 + $0x98] sm:$0xf]
  %v230 = vld [vmem:[%s1 + $0x9c] sm:$0xff]
  %v231 = vld [vmem:[%s1 + $0xa4] sm:$0xf]
  %v232 = vld [vmem:[%s1 + $0xa8] sm:$0xff]
  %v233 = vld [vmem:[%s1 + $0xb0] sm:$0xf]
  %v234 = vld [vmem:[%s1 + $0xb4] sm:$0xff]
  %v235 = vld [vmem:[%s1 + $0xbc] sm:$0xf]
  %v236 = vld [vmem:[%s1 + $0xc0] sm:$0xff]
  %v237 = vld [vmem:[%s1 + $0xc8] sm:$0xf]
  %v238 = vld [vmem:[%s1 + $0xcc] sm:$0xff]
  %v239 = vld [vmem:[%s1 + $0xd4] sm:$0xf]
  %v240 = vld [vmem:[%s1 + $0xd8] sm:$0xff]
  %v241 = vld [vmem:[%s1 + $0xe0] sm:$0xf]
  %v242 = vld [vmem:[%s1 + $0xe4] sm:$0xff]
  %v243 = vld [vmem:[%s1 + $0xec] sm:$0xf]
  %v244 = vld [vmem:[%s1 + $0xf0] sm:$0xff]
  %v245 = vld [vmem:[%s1 + $0xf8] sm:$0xf]
  %v246 = vld [vmem:[%s1 + $0xfc] sm:$0xff]
  %v247 = vld [vmem:[%s1 + $0x104] sm:$0xf]
  %v248 = vld [vmem:[%s1 + $0x108] sm:$0xff]
  %v249 = vld [vmem:[%s1 + $0x110] sm:$0xf]
  %v250 = vld [vmem:[%s1 + $0x114] sm:$0xff]
  %v251 = vld [vmem:[%s1 + $0x11c] sm:$0xf]
  %v252 = vld [vmem:[%s1 + $0x120] sm:$0xff]
  %v253 = vld [vmem:[%s1 + $0x128] sm:$0xf]
  %v254 = vld [vmem:[%s1 + $0x12c] sm:$0xff]
  %v255 = vld [vmem:[%s1 + $0x134] sm:$0xf]
  %v256 = vld [vmem:[%s1 + $0x138] sm:$0xff]
  %v257 = vld [vmem:[%s1 + $0x140] sm:$0xf]
  %v258 = vld [vmem:[%s1 + $0x144] sm:$0xff]
  %v259 = vld [vmem:[%s1 + $0x14c] sm:$0xf]
  %v260 = vld [vmem:[%s1 + $0x150] sm:$0xff]
  %v261 = vld [vmem:[%s1 + $0x158] sm:$0xf]
  %v262 = vld [vmem:[%s1 + $0x15c] sm:$0xff]
  %v263 = vld [vmem:[%s1 + $0x164] sm:$0xf]
  %v264 = vld [vmem:[%s1 + $0x168] sm:$0xff]
  %v265 = vld [vmem:[%s1 + $0x170] sm:$0xf]
  %v266 = vld [vmem:[%s1 + $0x174] sm:$0xff]
  %v267 = vld [vmem:[%s1 + $0x17c] sm:$0xf]
  %v268 = vld [vmem:[%s1 + $0x180] sm:$0xff]
  %v269 = vld [vmem:[%s1 + $0x188] sm:$0xf]
  %v270 = vld [vmem:[%s1 + $0x18c] sm:$0xff]
  %v271 = vld [vmem:[%s1 + $0x194] sm:$0xf]
  %v272 = vld [vmem:[%s1 + $0x198] sm:$0xff]
  %v273 = vld [vmem:[%s1 + $0x1a0] sm:$0xf]
  %v274 = vld [vmem:[%s1 + $0x1a4] sm:$0xff]
  %v275 = vld [vmem:[%s1 + $0x1ac] sm:$0xf]
  %v276 = vld [vmem:[%s1 + $0x1b0] sm:$0xff]
  %v277 = vld [vmem:[%s1 + $0x1b8] sm:$0xf]
  %v278 = vld [vmem:[%s1 + $0x1bc] sm:$0xff]
  %v279 = vld [vmem:[%s1 + $0x1c4] sm:$0xf]
  %v280 = vld [vmem:[%s1 + $0x1c8] sm:$0xff]
  %v281 = vld [vmem:[%s1 + $0x1d0] sm:$0xf]
  %v282 = vld [vmem:[%s1 + $0x1d4] sm:$0xff]
  %v283 = vld [vmem:[%s1 + $0x1dc] sm:$0xf]
  %v284 = vld [vmem:[%s1 + $0x1e0] sm:$0xff]
  %v285 = vld [vmem:[%s1 + $0x1e8] sm:$0xf]
  %v286 = vld [vmem:[%s1 + $0x1ec] sm:$0xff]
  %v287 = vld [vmem:[%s1 + $0x1f4] sm:$0xf]
  %v288 = vld [vmem:[%s1 + $0x1f8] sm:$0xff]
  %v289 = vld [vmem:[%s1 + $0x200] sm:$0xf]
  %v290 = vld [vmem:[%s1 + $0x204] sm:$0xff]
  %v291 = vld [vmem:[%s1 + $0x20c] sm:$0xf]
  %v292 = vld [vmem:[%s1 + $0x210] sm:$0xff]
  %v293 = vld [vmem:[%s1 + $0x218] sm:$0xf]
  %v294 = vld [vmem:[%s1 + $0x21c] sm:$0xff]
  %v295 = vld [vmem:[%s1 + $0x224] sm:$0xf]
  %v296 = vld [vmem:[%s1 + $0x228] sm:$0xff]
  %v297 = vld [vmem:[%s1 + $0x230] sm:$0xf]
  %v298 = vld [vmem:[%s1 + $0x234] sm:$0xff]
  %v299 = vld [vmem:[%s1 + $0x23c] sm:$0xf]
  %v300 = vld [vmem:[%s1 + $0x240] sm:$0xff]
  %v301 = vld [vmem:[%s1 + $0x248] sm:$0xf]
  %v302 = vld [vmem:[%s1 + $0x24c] sm:$0xff]
  %v303 = vld [vmem:[%s1 + $0x254] sm:$0xf]
  %v304 = vld [vmem:[%s1 + $0x258] sm:$0xff]
  %v305 = vld [vmem:[%s1 + $0x260] sm:$0xf]
  %v306 = vld [vmem:[%s1 + $0x264] sm:$0xff]
  %v307 = vld [vmem:[%s1 + $0x26c] sm:$0xf]
  %v308 = vld [vmem:[%s1 + $0x270] sm:$0xff]
  %v309 = vld [vmem:[%s1 + $0x278] sm:$0xf]
  %v310 = vld [vmem:[%s1 + $0x27c] sm:$0xff]
  %v311 = vld [vmem:[%s1 + $0x284] sm:$0xf]
  %v312 = vld [vmem:[%s1 + $0x288] sm:$0xff]
  %v313 = vld [vmem:[%s1 + $0x290] sm:$0xf]
  %v314 = vld [vmem:[%s1 + $0x294] sm:$0xff]
  %v315 = vld [vmem:[%s1 + $0x29c] sm:$0xf]
  %v316 = vld [vmem:[%s1 + $0x2a0] sm:$0xff]
  %v317 = vld [vmem:[%s1 + $0x2a8] sm:$0xf]
  %v318 = vld [vmem:[%s1 + $0x2ac] sm:$0xff]
  %v319 = vld [vmem:[%s1 + $0x2b4] sm:$0xf]
  %v320 = vld [vmem:[%s1 + $0x2b8] sm:$0xff]
  %v321 = vld [vmem:[%s1 + $0x2c0] sm:$0xf]
  %v322 = vld [vmem:[%s1 + $0x2c4] sm:$0xff]
  %v323 = vld [vmem:[%s1 + $0x2cc] sm:$0xf]
  %v324 = vld [vmem:[%s1 + $0x2d0] sm:$0xff]
  %v325 = vld [vmem:[%s1 + $0x2d8] sm:$0xf]
  %v326 = vld [vmem:[%s1 + $0x2dc] sm:$0xff]
  %v327 = vld [vmem:[%s1 + $0x2e4] sm:$0xf]
  %v328 = vld [vmem:[%s1 + $0x2e8] sm:$0xff]
  %v329 = vld [vmem:[%s1 + $0x2f0] sm:$0xf]
  %v330 = vld [vmem:[%s1 + $0x2f4] sm:$0xff]
  %v331 = vld [vmem:[%s1 + $0x2fc] sm:$0xf]
  %v332 = vld [vmem:[%s1 + $0x300] sm:$0xff]
  %v333 = vld [vmem:[%s1 + $0x308] sm:$0xf]
  %v334 = vld [vmem:[%s1 + $0x30c] sm:$0xff]
  %v335 = vld [vmem:[%s1 + $0x314] sm:$0xf]
  %v336 = vld [vmem:[%s1 + $0x318] sm:$0xff]
  %v337 = vld [vmem:[%s1 + $0x320] sm:$0xf]
  %v338 = vld [vmem:[%s1 + $0x324] sm:$0xff]
  %v339 = vld [vmem:[%s1 + $0x32c] sm:$0xf]
  %v340 = vld [vmem:[%s1 + $0x330] sm:$0xff]
  %v341 = vld [vmem:[%s1 + $0x338] sm:$0xf]
  %v342 = vld [vmem:[%s1 + $0x33c] sm:$0xff]
  %v343 = vld [vmem:[%s1 + $0x344] sm:$0xf]
  %v344 = vld [vmem:[%s1 + $0x348] sm:$0xff]
  %v345 = vld [vmem:[%s1 + $0x350] sm:$0xf]
  %v346 = vld [vmem:[%s1 + $0x354] sm:$0xff]
  %v347 = vld [vmem:[%s1 + $0x35c] sm:$0xf]
  %v348 = vld [vmem:[%s1 + $0x360] sm:$0xff]
  %v349 = vld [vmem:[%s1 + $0x368] sm:$0xf]
  %v350 = vld [vmem:[%s1 + $0x36c] sm:$0xff]
  %v351 = vld [vmem:[%s1 + $0x374] sm:$0xf]
  %v352 = vld [vmem:[%s1 + $0x378] sm:$0xff]
  %v353 = vld [vmem:[%s1 + $0x380] sm:$0xf]
  %v354 = vld [vmem:[%s1 + $0x384] sm:$0xff]
  %v355 = vld [vmem:[%s1 + $0x38c] sm:$0xf]
  %v356 = vld [vmem:[%s1 + $0x390] sm:$0xff]
  %v357 = vld [vmem:[%s1 + $0x398] sm:$0xf]
  %v358 = vld [vmem:[%s1 + $0x39c] sm:$0xff]
  %v359 = vld [vmem:[%s1 + $0x3a4] sm:$0xf]
  %v360 = vld [vmem:[%s1 + $0x3a8] sm:$0xff]
  %v361 = vld [vmem:[%s1 + $0x3b0] sm:$0xf]
  %v362 = vld [vmem:[%s1 + $0x3b4] sm:$0xff]
  %v363 = vld [vmem:[%s1 + $0x3bc] sm:$0xf]
  %v364 = vld [vmem:[%s1 + $0x3c0] sm:$0xff]
  %v365 = vld [vmem:[%s1 + $0x3c8] sm:$0xf]
  %v366 = vld [vmem:[%s1 + $0x3cc] sm:$0xff]
  %v367 = vld [vmem:[%s1 + $0x3d4] sm:$0xf]
  %v368 = vld [vmem:[%s1 + $0x3d8] sm:$0xff]
  %v369 = vld [vmem:[%s1 + $0x3e0] sm:$0xf]
  %v370 = vld [vmem:[%s1 + $0x3e4] sm:$0xff]
  %v371 = vld [vmem:[%s1 + $0x3ec] sm:$0xf]
  %v372 = vld [vmem:[%s1 + $0x3f0] sm:$0xff]
  %v373 = vld [vmem:[%s1 + $0x3f8] sm:$0xf]
  %v374 = vld [vmem:[%s1 + $0x3fc] sm:$0xff]
  %v375 = vld [vmem:[%s1 + $0x404] sm:$0xf]
  %v376 = vld [vmem:[%s1 + $0x408] sm:$0xff]
  %v377 = vld [vmem:[%s1 + $0x410] sm:$0xf]
  %v378 = vld [vmem:[%s1 + $0x414] sm:$0xff]
  %v379 = vld [vmem:[%s1 + $0x41c] sm:$0xf]
  %v380 = vld [vmem:[%s1 + $0x420] sm:$0xff]
  %v381 = vld [vmem:[%s1 + $0x428] sm:$0xf]
  %v382 = vld [vmem:[%s1 + $0x42c] sm:$0xff]
  %v383 = vld [vmem:[%s1 + $0x434] sm:$0xf]
  %v384 = vld [vmem:[%s1 + $0x438] sm:$0xff]
  %v385 = vld [vmem:[%s1 + $0x440] sm:$0xf]
  %v386 = vld [vmem:[%s1 + $0x444] sm:$0xff]
  %v387 = vld [vmem:[%s1 + $0x44c] sm:$0xf]
  %v388 = vld [vmem:[%s1 + $0x450] sm:$0xff]
  %v389 = vld [vmem:[%s1 + $0x458] sm:$0xf]
  %v390 = vld [vmem:[%s1 + $0x45c] sm:$0xff]
  %v391 = vld [vmem:[%s1 + $0x464] sm:$0xf]
  %v392 = vld [vmem:[%s1 + $0x468] sm:$0xff]
  %v393 = vld [vmem:[%s1 + $0x470] sm:$0xf]
  %v394 = vld [vmem:[%s1 + $0x474] sm:$0xff]
  %v395 = vld [vmem:[%s1 + $0x47c] sm:$0xf]
  %v588 = vunpack.c.l.b16 %v12
  %v589 = vunpack.c.h.b16 %v12
  %v590 = vunpack.c.l.b16 %v13
  %v591 = vunpack.c.h.b16 %v13
  %v592 = vunpack.c.l.b16 %v14
  %v593 = vunpack.c.h.b16 %v14
  %v594 = vunpack.c.l.b16 %v15
  %v595 = vunpack.c.h.b16 %v15
  %v596 = vunpack.c.l.b16 %v16
  %v597 = vunpack.c.h.b16 %v16
  %v598 = vunpack.c.l.b16 %v17
  %v599 = vunpack.c.h.b16 %v17
  %v600 = vunpack.c.l.b16 %v18
  %v601 = vunpack.c.h.b16 %v18
  %v602 = vunpack.c.l.b16 %v19
  %v603 = vunpack.c.h.b16 %v19
  %v604 = vunpack.c.l.b16 %v20
  %v605 = vunpack.c.h.b16 %v20
  %v606 = vunpack.c.l.b16 %v21
  %v607 = vunpack.c.h.b16 %v21
  %v608 = vunpack.c.l.b16 %v22
  %v609 = vunpack.c.h.b16 %v22
  %v610 = vunpack.c.l.b16 %v23
  %v611 = vunpack.c.h.b16 %v23
  %v612 = vunpack.c.l.b16 %v24
  %v613 = vunpack.c.h.b16 %v24
  %v614 = vunpack.c.l.b16 %v25
  %v615 = vunpack.c.h.b16 %v25
  %v616 = vunpack.c.l.b16 %v26
  %v617 = vunpack.c.h.b16 %v26
  %v618 = vunpack.c.l.b16 %v27
  %v619 = vunpack.c.h.b16 %v27
  %v620 = vunpack.c.l.b16 %v28
  %v621 = vunpack.c.h.b16 %v28
  %v622 = vunpack.c.l.b16 %v29
  %v623 = vunpack.c.h.b16 %v29
  %v624 = vunpack.c.l.b16 %v30
  %v625 = vunpack.c.h.b16 %v30
  %v626 = vunpack.c.l.b16 %v31
  %v627 = vunpack.c.h.b16 %v31
  %v628 = vunpack.c.l.b16 %v32
  %v629 = vunpack.c.h.b16 %v32
  %v630 = vunpack.c.l.b16 %v33
  %v631 = vunpack.c.h.b16 %v33
  %v632 = vunpack.c.l.b16 %v34
  %v633 = vunpack.c.h.b16 %v34
  %v634 = vunpack.c.l.b16 %v35
  %v635 = vunpack.c.h.b16 %v35
  %v636 = vunpack.c.l.b16 %v36
  %v637 = vunpack.c.h.b16 %v36
  %v638 = vunpack.c.l.b16 %v37
  %v639 = vunpack.c.h.b16 %v37
  %v640 = vunpack.c.l.b16 %v38
  %v641 = vunpack.c.h.b16 %v38
  %v642 = vunpack.c.l.b16 %v39
  %v643 = vunpack.c.h.b16 %v39
  %v644 = vunpack.c.l.b16 %v40
  %v645 = vunpack.c.h.b16 %v40
  %v646 = vunpack.c.l.b16 %v41
  %v647 = vunpack.c.h.b16 %v41
  %v648 = vunpack.c.l.b16 %v42
  %v649 = vunpack.c.h.b16 %v42
  %v650 = vunpack.c.l.b16 %v43
  %v651 = vunpack.c.h.b16 %v43
  %v652 = vunpack.c.l.b16 %v44
  %v653 = vunpack.c.h.b16 %v44
  %v654 = vunpack.c.l.b16 %v45
  %v655 = vunpack.c.h.b16 %v45
  %v656 = vunpack.c.l.b16 %v46
  %v657 = vunpack.c.h.b16 %v46
  %v658 = vunpack.c.l.b16 %v47
  %v659 = vunpack.c.h.b16 %v47
  %v660 = vunpack.c.l.b16 %v48
  %v661 = vunpack.c.h.b16 %v48
  %v662 = vunpack.c.l.b16 %v49
  %v663 = vunpack.c.h.b16 %v49
  %v664 = vunpack.c.l.b16 %v50
  %v665 = vunpack.c.h.b16 %v50
  %v666 = vunpack.c.l.b16 %v51
  %v667 = vunpack.c.h.b16 %v51
  %v668 = vunpack.c.l.b16 %v52
  %v669 = vunpack.c.h.b16 %v52
  %v670 = vunpack.c.l.b16 %v53
  %v671 = vunpack.c.h.b16 %v53
  %v672 = vunpack.c.l.b16 %v54
  %v673 = vunpack.c.h.b16 %v54
  %v674 = vunpack.c.l.b16 %v55
  %v675 = vunpack.c.h.b16 %v55
  %v676 = vunpack.c.l.b16 %v56
  %v677 = vunpack.c.h.b16 %v56
  %v678 = vunpack.c.l.b16 %v57
  %v679 = vunpack.c.h.b16 %v57
  %v680 = vunpack.c.l.b16 %v58
  %v681 = vunpack.c.h.b16 %v58
  %v682 = vunpack.c.l.b16 %v59
  %v683 = vunpack.c.h.b16 %v59
  %v684 = vunpack.c.l.b16 %v60
  %v685 = vunpack.c.h.b16 %v60
  %v686 = vunpack.c.l.b16 %v61
  %v687 = vunpack.c.h.b16 %v61
  %v688 = vunpack.c.l.b16 %v62
  %v689 = vunpack.c.h.b16 %v62
  %v690 = vunpack.c.l.b16 %v63
  %v691 = vunpack.c.h.b16 %v63
  %v692 = vunpack.c.l.b16 %v64
  %v693 = vunpack.c.h.b16 %v64
  %v694 = vunpack.c.l.b16 %v65
  %v695 = vunpack.c.h.b16 %v65
  %v696 = vunpack.c.l.b16 %v66
  %v697 = vunpack.c.h.b16 %v66
  %v698 = vunpack.c.l.b16 %v67
  %v699 = vunpack.c.h.b16 %v67
  %v700 = vunpack.c.l.b16 %v68
  %v701 = vunpack.c.h.b16 %v68
  %v702 = vunpack.c.l.b16 %v69
  %v703 = vunpack.c.h.b16 %v69
  %v704 = vunpack.c.l.b16 %v70
  %v705 = vunpack.c.h.b16 %v70
  %v706 = vunpack.c.l.b16 %v71
  %v707 = vunpack.c.h.b16 %v71
  %v708 = vunpack.c.l.b16 %v72
  %v709 = vunpack.c.h.b16 %v72
  %v710 = vunpack.c.l.b16 %v73
  %v711 = vunpack.c.h.b16 %v73
  %v712 = vunpack.c.l.b16 %v74
  %v713 = vunpack.c.h.b16 %v74
  %v714 = vunpack.c.l.b16 %v75
  %v715 = vunpack.c.h.b16 %v75
  %v716 = vunpack.c.l.b16 %v76
  %v717 = vunpack.c.h.b16 %v76
  %v718 = vunpack.c.l.b16 %v77
  %v719 = vunpack.c.h.b16 %v77
  %v720 = vunpack.c.l.b16 %v78
  %v721 = vunpack.c.h.b16 %v78
  %v722 = vunpack.c.l.b16 %v79
  %v723 = vunpack.c.h.b16 %v79
  %v724 = vunpack.c.l.b16 %v80
  %v725 = vunpack.c.h.b16 %v80
  %v726 = vunpack.c.l.b16 %v81
  %v727 = vunpack.c.h.b16 %v81
  %v728 = vunpack.c.l.b16 %v82
  %v729 = vunpack.c.h.b16 %v82
  %v730 = vunpack.c.l.b16 %v83
  %v731 = vunpack.c.h.b16 %v83
  %v732 = vunpack.c.l.b16 %v84
  %v733 = vunpack.c.h.b16 %v84
  %v734 = vunpack.c.l.b16 %v85
  %v735 = vunpack.c.h.b16 %v85
  %v736 = vunpack.c.l.b16 %v86
  %v737 = vunpack.c.h.b16 %v86
  %v738 = vunpack.c.l.b16 %v87
  %v739 = vunpack.c.h.b16 %v87
  %v740 = vunpack.c.l.b16 %v88
  %v741 = vunpack.c.h.b16 %v88
  %v742 = vunpack.c.l.b16 %v89
  %v743 = vunpack.c.h.b16 %v89
  %v744 = vunpack.c.l.b16 %v90
  %v745 = vunpack.c.h.b16 %v90
  %v746 = vunpack.c.l.b16 %v91
  %v747 = vunpack.c.h.b16 %v91
  %v748 = vunpack.c.l.b16 %v92
  %v749 = vunpack.c.h.b16 %v92
  %v750 = vunpack.c.l.b16 %v93
  %v751 = vunpack.c.h.b16 %v93
  %v752 = vunpack.c.l.b16 %v94
  %v753 = vunpack.c.h.b16 %v94
  %v754 = vunpack.c.l.b16 %v95
  %v755 = vunpack.c.h.b16 %v95
  %v756 = vunpack.c.l.b16 %v96
  %v757 = vunpack.c.h.b16 %v96
  %v758 = vunpack.c.l.b16 %v97
  %v759 = vunpack.c.h.b16 %v97
  %v760 = vunpack.c.l.b16 %v98
  %v761 = vunpack.c.h.b16 %v98
  %v762 = vunpack.c.l.b16 %v99
  %v763 = vunpack.c.h.b16 %v99
  %v764 = vunpack.c.l.b16 %v100
  %v765 = vunpack.c.h.b16 %v100
  %v766 = vunpack.c.l.b16 %v101
  %v767 = vunpack.c.h.b16 %v101
  %v768 = vunpack.c.l.b16 %v102
  %v769 = vunpack.c.h.b16 %v102
  %v770 = vunpack.c.l.b16 %v103
  %v771 = vunpack.c.h.b16 %v103
  %v772 = vunpack.c.l.b16 %v104
  %v773 = vunpack.c.h.b16 %v104
  %v774 = vunpack.c.l.b16 %v105
  %v775 = vunpack.c.h.b16 %v105
  %v776 = vunpack.c.l.b16 %v106
  %v777 = vunpack.c.h.b16 %v106
  %v778 = vunpack.c.l.b16 %v107
  %v779 = vunpack.c.h.b16 %v107
  %v780 = vunpack.c.l.b16 %v108
  %v781 = vunpack.c.h.b16 %v108
  %v782 = vunpack.c.l.b16 %v109
  %v783 = vunpack.c.h.b16 %v109
  %v784 = vunpack.c.l.b16 %v110
  %v785 = vunpack.c.h.b16 %v110
  %v786 = vunpack.c.l.b16 %v111
  %v787 = vunpack.c.h.b16 %v111
  %v788 = vunpack.c.l.b16 %v112
  %v789 = vunpack.c.h.b16 %v112
  %v790 = vunpack.c.l.b16 %v113
  %v791 = vunpack.c.h.b16 %v113
  %v792 = vunpack.c.l.b16 %v114
  %v793 = vunpack.c.h.b16 %v114
  %v794 = vunpack.c.l.b16 %v115
  %v795 = vunpack.c.h.b16 %v115
  %v796 = vunpack.c.l.b16 %v116
  %v797 = vunpack.c.h.b16 %v116
  %v798 = vunpack.c.l.b16 %v117
  %v799 = vunpack.c.h.b16 %v117
  %v800 = vunpack.c.l.b16 %v118
  %v801 = vunpack.c.h.b16 %v118
  %v802 = vunpack.c.l.b16 %v119
  %v803 = vunpack.c.h.b16 %v119
  %v804 = vunpack.c.l.b16 %v120
  %v805 = vunpack.c.h.b16 %v120
  %v806 = vunpack.c.l.b16 %v121
  %v807 = vunpack.c.h.b16 %v121
  %v808 = vunpack.c.l.b16 %v122
  %v809 = vunpack.c.h.b16 %v122
  %v810 = vunpack.c.l.b16 %v123
  %v811 = vunpack.c.h.b16 %v123
  %v812 = vunpack.c.l.b16 %v124
  %v813 = vunpack.c.h.b16 %v124
  %v814 = vunpack.c.l.b16 %v125
  %v815 = vunpack.c.h.b16 %v125
  %v816 = vunpack.c.l.b16 %v126
  %v817 = vunpack.c.h.b16 %v126
  %v818 = vunpack.c.l.b16 %v127
  %v819 = vunpack.c.h.b16 %v127
  %v820 = vunpack.c.l.b16 %v128
  %v821 = vunpack.c.h.b16 %v128
  %v822 = vunpack.c.l.b16 %v129
  %v823 = vunpack.c.h.b16 %v129
  %v824 = vunpack.c.l.b16 %v130
  %v825 = vunpack.c.h.b16 %v130
  %v826 = vunpack.c.l.b16 %v131
  %v827 = vunpack.c.h.b16 %v131
  %v828 = vunpack.c.l.b16 %v132
  %v829 = vunpack.c.h.b16 %v132
  %v830 = vunpack.c.l.b16 %v133
  %v831 = vunpack.c.h.b16 %v133
  %v832 = vunpack.c.l.b16 %v134
  %v833 = vunpack.c.h.b16 %v134
  %v834 = vunpack.c.l.b16 %v135
  %v835 = vunpack.c.h.b16 %v135
  %v836 = vunpack.c.l.b16 %v136
  %v837 = vunpack.c.h.b16 %v136
  %v838 = vunpack.c.l.b16 %v137
  %v839 = vunpack.c.h.b16 %v137
  %v840 = vunpack.c.l.b16 %v138
  %v841 = vunpack.c.h.b16 %v138
  %v842 = vunpack.c.l.b16 %v139
  %v843 = vunpack.c.h.b16 %v139
  %v844 = vunpack.c.l.b16 %v140
  %v845 = vunpack.c.h.b16 %v140
  %v846 = vunpack.c.l.b16 %v141
  %v847 = vunpack.c.h.b16 %v141
  %v848 = vunpack.c.l.b16 %v142
  %v849 = vunpack.c.h.b16 %v142
  %v850 = vunpack.c.l.b16 %v143
  %v851 = vunpack.c.h.b16 %v143
  %v852 = vunpack.c.l.b16 %v144
  %v853 = vunpack.c.h.b16 %v144
  %v854 = vunpack.c.l.b16 %v145
  %v855 = vunpack.c.h.b16 %v145
  %v856 = vunpack.c.l.b16 %v146
  %v857 = vunpack.c.h.b16 %v146
  %v858 = vunpack.c.l.b16 %v147
  %v859 = vunpack.c.h.b16 %v147
  %v860 = vunpack.c.l.b16 %v148
  %v861 = vunpack.c.h.b16 %v148
  %v862 = vunpack.c.l.b16 %v149
  %v863 = vunpack.c.h.b16 %v149
  %v864 = vunpack.c.l.b16 %v150
  %v865 = vunpack.c.h.b16 %v150
  %v866 = vunpack.c.l.b16 %v151
  %v867 = vunpack.c.h.b16 %v151
  %v868 = vunpack.c.l.b16 %v152
  %v869 = vunpack.c.h.b16 %v152
  %v870 = vunpack.c.l.b16 %v153
  %v871 = vunpack.c.h.b16 %v153
  %v872 = vunpack.c.l.b16 %v154
  %v873 = vunpack.c.h.b16 %v154
  %v874 = vunpack.c.l.b16 %v155
  %v875 = vunpack.c.h.b16 %v155
  %v876 = vunpack.c.l.b16 %v156
  %v877 = vunpack.c.h.b16 %v156
  %v878 = vunpack.c.l.b16 %v157
  %v879 = vunpack.c.h.b16 %v157
  %v880 = vunpack.c.l.b16 %v158
  %v881 = vunpack.c.h.b16 %v158
  %v882 = vunpack.c.l.b16 %v159
  %v883 = vunpack.c.h.b16 %v159
  %v884 = vunpack.c.l.b16 %v160
  %v885 = vunpack.c.h.b16 %v160
  %v886 = vunpack.c.l.b16 %v161
  %v887 = vunpack.c.h.b16 %v161
  %v888 = vunpack.c.l.b16 %v162
  %v889 = vunpack.c.h.b16 %v162
  %v890 = vunpack.c.l.b16 %v163
  %v891 = vunpack.c.h.b16 %v163
  %v892 = vunpack.c.l.b16 %v164
  %v893 = vunpack.c.h.b16 %v164
  %v894 = vunpack.c.l.b16 %v165
  %v895 = vunpack.c.h.b16 %v165
  %v896 = vunpack.c.l.b16 %v166
  %v897 = vunpack.c.h.b16 %v166
  %v898 = vunpack.c.l.b16 %v167
  %v899 = vunpack.c.h.b16 %v167
  %v900 = vunpack.c.l.b16 %v168
  %v901 = vunpack.c.h.b16 %v168
  %v902 = vunpack.c.l.b16 %v169
  %v903 = vunpack.c.h.b16 %v169
  %v904 = vunpack.c.l.b16 %v170
  %v905 = vunpack.c.h.b16 %v170
  %v906 = vunpack.c.l.b16 %v171
  %v907 = vunpack.c.h.b16 %v171
  %v908 = vunpack.c.l.b16 %v172
  %v909 = vunpack.c.h.b16 %v172
  %v910 = vunpack.c.l.b16 %v173
  %v911 = vunpack.c.h.b16 %v173
  %v912 = vunpack.c.l.b16 %v174
  %v913 = vunpack.c.h.b16 %v174
  %v914 = vunpack.c.l.b16 %v175
  %v915 = vunpack.c.h.b16 %v175
  %v916 = vunpack.c.l.b16 %v176
  %v917 = vunpack.c.h.b16 %v176
  %v918 = vunpack.c.l.b16 %v177
  %v919 = vunpack.c.h.b16 %v177
  %v920 = vunpack.c.l.b16 %v178
  %v921 = vunpack.c.h.b16 %v178
  %v922 = vunpack.c.l.b16 %v179
  %v923 = vunpack.c.h.b16 %v179
  %v924 = vunpack.c.l.b16 %v180
  %v925 = vunpack.c.h.b16 %v180
  %v926 = vunpack.c.l.b16 %v181
  %v927 = vunpack.c.h.b16 %v181
  %v928 = vunpack.c.l.b16 %v182
  %v929 = vunpack.c.h.b16 %v182
  %v930 = vunpack.c.l.b16 %v183
  %v931 = vunpack.c.h.b16 %v183
  %v932 = vunpack.c.l.b16 %v184
  %v933 = vunpack.c.h.b16 %v184
  %v934 = vunpack.c.l.b16 %v185
  %v935 = vunpack.c.h.b16 %v185
  %v936 = vunpack.c.l.b16 %v186
  %v937 = vunpack.c.h.b16 %v186
  %v938 = vunpack.c.l.b16 %v187
  %v939 = vunpack.c.h.b16 %v187
  %v940 = vunpack.c.l.b16 %v188
  %v941 = vunpack.c.h.b16 %v188
  %v942 = vunpack.c.l.b16 %v189
  %v943 = vunpack.c.h.b16 %v189
  %v944 = vunpack.c.l.b16 %v190
  %v945 = vunpack.c.h.b16 %v190
  %v946 = vunpack.c.l.b16 %v191
  %v947 = vunpack.c.h.b16 %v191
  %v948 = vunpack.c.l.b16 %v192
  %v949 = vunpack.c.h.b16 %v192
  %v950 = vunpack.c.l.b16 %v193
  %v951 = vunpack.c.h.b16 %v193
  %v952 = vunpack.c.l.b16 %v194
  %v953 = vunpack.c.h.b16 %v194
  %v954 = vunpack.c.l.b16 %v195
  %v955 = vunpack.c.h.b16 %v195
  %v956 = vunpack.c.l.b16 %v196
  %v957 = vunpack.c.h.b16 %v196
  %v958 = vunpack.c.l.b16 %v197
  %v959 = vunpack.c.h.b16 %v197
  %v960 = vunpack.c.l.b16 %v198
  %v961 = vunpack.c.h.b16 %v198
  %v962 = vunpack.c.l.b16 %v199
  %v963 = vunpack.c.h.b16 %v199
  %v964 = vunpack.c.l.b16 %v200
  %v965 = vunpack.c.h.b16 %v200
  %v966 = vunpack.c.l.b16 %v201
  %v967 = vunpack.c.h.b16 %v201
  %v968 = vunpack.c.l.b16 %v202
  %v969 = vunpack.c.h.b16 %v202
  %v970 = vunpack.c.l.b16 %v203
  %v971 = vunpack.c.h.b16 %v203
  %v972 = vpack.c.b16 %v594, %v588
  %v973 = vpack.c.b16 %v595, %v589
  %v974 = vpack.c.b16 %v596, %v590
  %v975 = vpack.c.b16 %v597, %v591
  %v976 = vpack.c.b16 %v598, %v592
  %v977 = vpack.c.b16 %v599, %v593
  %v978 = vpack.c.b16 %v606, %v600
  %v979 = vpack.c.b16 %v607, %v601
  %v980 = vpack.c.b16 %v608, %v602
  %v981 = vpack.c.b16 %v609, %v603
  %v982 = vpack.c.b16 %v610, %v604
  %v983 = vpack.c.b16 %v611, %v605
  %v984 = vpack.c.b16 %v618, %v612
  %v985 = vpack.c.b16 %v619, %v613
  %v986 = vpack.c.b16 %v620, %v614
  %v987 = vpack.c.b16 %v621, %v615
  %v988 = vpack.c.b16 %v622, %v616
  %v989 = vpack.c.b16 %v623, %v617
  %v990 = vpack.c.b16 %v630, %v624
  %v991 = vpack.c.b16 %v631, %v625
  %v992 = vpack.c.b16 %v632, %v626
  %v993 = vpack.c.b16 %v633, %v627
  %v994 = vpack.c.b16 %v634, %v628
  %v995 = vpack.c.b16 %v635, %v629
  %v996 = vpack.c.b16 %v642, %v636
  %v997 = vpack.c.b16 %v643, %v637
  %v998 = vpack.c.b16 %v644, %v638
  %v999 = vpack.c.b16 %v645, %v639
  %v1000 = vpack.c.b16 %v646, %v640
  %v1001 = vpack.c.b16 %v647, %v641
  %v1002 = vpack.c.b16 %v654, %v648
  %v1003 = vpack.c.b16 %v655, %v649
  %v1004 = vpack.c.b16 %v656, %v650
  %v1005 = vpack.c.b16 %v657, %v651
  %v1006 = vpack.c.b16 %v658, %v652
  %v1007 = vpack.c.b16 %v659, %v653
  %v1008 = vpack.c.b16 %v666, %v660
  %v1009 = vpack.c.b16 %v667, %v661
  %v1010 = vpack.c.b16 %v668, %v662
  %v1011 = vpack.c.b16 %v669, %v663
  %v1012 = vpack.c.b16 %v670, %v664
  %v1013 = vpack.c.b16 %v671, %v665
  %v1014 = vpack.c.b16 %v678, %v672
  %v1015 = vpack.c.b16 %v679, %v673
  %v1016 = vpack.c.b16 %v680, %v674
  %v1017 = vpack.c.b16 %v681, %v675
  %v1018 = vpack.c.b16 %v682, %v676
  %v1019 = vpack.c.b16 %v683, %v677
  %v1020 = vpack.c.b16 %v690, %v684
  %v1021 = vpack.c.b16 %v691, %v685
  %v1022 = vpack.c.b16 %v692, %v686
  %v1023 = vpack.c.b16 %v693, %v687
  %v1024 = vpack.c.b16 %v694, %v688
  %v1025 = vpack.c.b16 %v695, %v689
  %v1026 = vpack.c.b16 %v702, %v696
  %v1027 = vpack.c.b16 %v703, %v697
  %v1028 = vpack.c.b16 %v704, %v698
  %v1029 = vpack.c.b16 %v705, %v699
  %v1030 = vpack.c.b16 %v706, %v700
  %v1031 = vpack.c.b16 %v707, %v701
  %v1032 = vpack.c.b16 %v714, %v708
  %v1033 = vpack.c.b16 %v715, %v709
  %v1034 = vpack.c.b16 %v716, %v710
  %v1035 = vpack.c.b16 %v717, %v711
  %v1036 = vpack.c.b16 %v718, %v712
  %v1037 = vpack.c.b16 %v719, %v713
  %v1038 = vpack.c.b16 %v726, %v720
  %v1039 = vpack.c.b16 %v727, %v721
  %v1040 = vpack.c.b16 %v728, %v722
  %v1041 = vpack.c.b16 %v729, %v723
  %v1042 = vpack.c.b16 %v730, %v724
  %v1043 = vpack.c.b16 %v731, %v725
  %v1044 = vpack.c.b16 %v738, %v732
  %v1045 = vpack.c.b16 %v739, %v733
  %v1046 = vpack.c.b16 %v740, %v734
  %v1047 = vpack.c.b16 %v741, %v735
  %v1048 = vpack.c.b16 %v742, %v736
  %v1049 = vpack.c.b16 %v743, %v737
  %v1050 = vpack.c.b16 %v750, %v744
  %v1051 = vpack.c.b16 %v751, %v745
  %v1052 = vpack.c.b16 %v752, %v746
  %v1053 = vpack.c.b16 %v753, %v747
  %v1054 = vpack.c.b16 %v754, %v748
  %v1055 = vpack.c.b16 %v755, %v749
  %v1056 = vpack.c.b16 %v762, %v756
  %v1057 = vpack.c.b16 %v763, %v757
  %v1058 = vpack.c.b16 %v764, %v758
  %v1059 = vpack.c.b16 %v765, %v759
  %v1060 = vpack.c.b16 %v766, %v760
  %v1061 = vpack.c.b16 %v767, %v761
  %v1062 = vpack.c.b16 %v774, %v768
  %v1063 = vpack.c.b16 %v775, %v769
  %v1064 = vpack.c.b16 %v776, %v770
  %v1065 = vpack.c.b16 %v777, %v771
  %v1066 = vpack.c.b16 %v778, %v772
  %v1067 = vpack.c.b16 %v779, %v773
  %v1068 = vpack.c.b16 %v786, %v780
  %v1069 = vpack.c.b16 %v787, %v781
  %v1070 = vpack.c.b16 %v788, %v782
  %v1071 = vpack.c.b16 %v789, %v783
  %v1072 = vpack.c.b16 %v790, %v784
  %v1073 = vpack.c.b16 %v791, %v785
  %v1074 = vpack.c.b16 %v798, %v792
  %v1075 = vpack.c.b16 %v799, %v793
  %v1076 = vpack.c.b16 %v800, %v794
  %v1077 = vpack.c.b16 %v801, %v795
  %v1078 = vpack.c.b16 %v802, %v796
  %v1079 = vpack.c.b16 %v803, %v797
  %v1080 = vpack.c.b16 %v810, %v804
  %v1081 = vpack.c.b16 %v811, %v805
  %v1082 = vpack.c.b16 %v812, %v806
  %v1083 = vpack.c.b16 %v813, %v807
  %v1084 = vpack.c.b16 %v814, %v808
  %v1085 = vpack.c.b16 %v815, %v809
  %v1086 = vpack.c.b16 %v822, %v816
  %v1087 = vpack.c.b16 %v823, %v817
  %v1088 = vpack.c.b16 %v824, %v818
  %v1089 = vpack.c.b16 %v825, %v819
  %v1090 = vpack.c.b16 %v826, %v820
  %v1091 = vpack.c.b16 %v827, %v821
  %v1092 = vpack.c.b16 %v834, %v828
  %v1093 = vpack.c.b16 %v835, %v829
  %v1094 = vpack.c.b16 %v836, %v830
  %v1095 = vpack.c.b16 %v837, %v831
  %v1096 = vpack.c.b16 %v838, %v832
  %v1097 = vpack.c.b16 %v839, %v833
  %v1098 = vpack.c.b16 %v846, %v840
  %v1099 = vpack.c.b16 %v847, %v841
  %v1100 = vpack.c.b16 %v848, %v842
  %v1101 = vpack.c.b16 %v849, %v843
  %v1102 = vpack.c.b16 %v850, %v844
  %v1103 = vpack.c.b16 %v851, %v845
  %v1104 = vpack.c.b16 %v858, %v852
  %v1105 = vpack.c.b16 %v859, %v853
  %v1106 = vpack.c.b16 %v860, %v854
  %v1107 = vpack.c.b16 %v861, %v855
  %v1108 = vpack.c.b16 %v862, %v856
  %v1109 = vpack.c.b16 %v863, %v857
  %v1110 = vpack.c.b16 %v870, %v864
  %v1111 = vpack.c.b16 %v871, %v865
  %v1112 = vpack.c.b16 %v872, %v866
  %v1113 = vpack.c.b16 %v873, %v867
  %v1114 = vpack.c.b16 %v874, %v868
  %v1115 = vpack.c.b16 %v875, %v869
  %v1116 = vpack.c.b16 %v882, %v876
  %v1117 = vpack.c.b16 %v883, %v877
  %v1118 = vpack.c.b16 %v884, %v878
  %v1119 = vpack.c.b16 %v885, %v879
  %v1120 = vpack.c.b16 %v886, %v880
  %v1121 = vpack.c.b16 %v887, %v881
  %v1122 = vpack.c.b16 %v894, %v888
  %v1123 = vpack.c.b16 %v895, %v889
  %v1124 = vpack.c.b16 %v896, %v890
  %v1125 = vpack.c.b16 %v897, %v891
  %v1126 = vpack.c.b16 %v898, %v892
  %v1127 = vpack.c.b16 %v899, %v893
  %v1128 = vpack.c.b16 %v906, %v900
  %v1129 = vpack.c.b16 %v907, %v901
  %v1130 = vpack.c.b16 %v908, %v902
  %v1131 = vpack.c.b16 %v909, %v903
  %v1132 = vpack.c.b16 %v910, %v904
  %v1133 = vpack.c.b16 %v911, %v905
  %v1134 = vpack.c.b16 %v918, %v912
  %v1135 = vpack.c.b16 %v919, %v913
  %v1136 = vpack.c.b16 %v920, %v914
  %v1137 = vpack.c.b16 %v921, %v915
  %v1138 = vpack.c.b16 %v922, %v916
  %v1139 = vpack.c.b16 %v923, %v917
  %v1140 = vpack.c.b16 %v930, %v924
  %v1141 = vpack.c.b16 %v931, %v925
  %v1142 = vpack.c.b16 %v932, %v926
  %v1143 = vpack.c.b16 %v933, %v927
  %v1144 = vpack.c.b16 %v934, %v928
  %v1145 = vpack.c.b16 %v935, %v929
  %v1146 = vpack.c.b16 %v942, %v936
  %v1147 = vpack.c.b16 %v943, %v937
  %v1148 = vpack.c.b16 %v944, %v938
  %v1149 = vpack.c.b16 %v945, %v939
  %v1150 = vpack.c.b16 %v946, %v940
  %v1151 = vpack.c.b16 %v947, %v941
  %v1152 = vpack.c.b16 %v954, %v948
  %v1153 = vpack.c.b16 %v955, %v949
  %v1154 = vpack.c.b16 %v956, %v950
  %v1155 = vpack.c.b16 %v957, %v951
  %v1156 = vpack.c.b16 %v958, %v952
  %v1157 = vpack.c.b16 %v959, %v953
  %v1158 = vpack.c.b16 %v966, %v960
  %v1159 = vpack.c.b16 %v967, %v961
  %v1160 = vpack.c.b16 %v968, %v962
  %v1161 = vpack.c.b16 %v969, %v963
  %v1162 = vpack.c.b16 %v970, %v964
  %v1163 = vpack.c.b16 %v971, %v965
  %v1548 = vunpack.c.l.b16 %v204
  %v1549 = vunpack.c.h.b16 %v204
  %v1550 = vunpack.c.l.b16 %v205
  %v1551 = vunpack.c.l.b16 %v206
  %v1552 = vunpack.c.h.b16 %v206
  %v1553 = vunpack.c.l.b16 %v207
  %v1554 = vunpack.c.l.b16 %v208
  %v1555 = vunpack.c.h.b16 %v208
  %v1556 = vunpack.c.l.b16 %v209
  %v1557 = vunpack.c.l.b16 %v210
  %v1558 = vunpack.c.h.b16 %v210
  %v1559 = vunpack.c.l.b16 %v211
  %v1560 = vunpack.c.l.b16 %v212
  %v1561 = vunpack.c.h.b16 %v212
  %v1562 = vunpack.c.l.b16 %v213
  %v1563 = vunpack.c.l.b16 %v214
  %v1564 = vunpack.c.h.b16 %v214
  %v1565 = vunpack.c.l.b16 %v215
  %v1566 = vunpack.c.l.b16 %v216
  %v1567 = vunpack.c.h.b16 %v216
  %v1568 = vunpack.c.l.b16 %v217
  %v1569 = vunpack.c.l.b16 %v218
  %v1570 = vunpack.c.h.b16 %v218
  %v1571 = vunpack.c.l.b16 %v219
  %v1572 = vunpack.c.l.b16 %v220
  %v1573 = vunpack.c.h.b16 %v220
  %v1574 = vunpack.c.l.b16 %v221
  %v1575 = vunpack.c.l.b16 %v222
  %v1576 = vunpack.c.h.b16 %v222
  %v1577 = vunpack.c.l.b16 %v223
  %v1578 = vunpack.c.l.b16 %v224
  %v1579 = vunpack.c.h.b16 %v224
  %v1580 = vunpack.c.l.b16 %v225
  %v1581 = vunpack.c.l.b16 %v226
  %v1582 = vunpack.c.h.b16 %v226
  %v1583 = vunpack.c.l.b16 %v227
  %v1584 = vunpack.c.l.b16 %v228
  %v1585 = vunpack.c.h.b16 %v228
  %v1586 = vunpack.c.l.b16 %v229
  %v1587 = vunpack.c.l.b16 %v230
  %v1588 = vunpack.c.h.b16 %v230
  %v1589 = vunpack.c.l.b16 %v231
  %v1590 = vunpack.c.l.b16 %v232
  %v1591 = vunpack.c.h.b16 %v232
  %v1592 = vunpack.c.l.b16 %v233
  %v1593 = vunpack.c.l.b16 %v234
  %v1594 = vunpack.c.h.b16 %v234
  %v1595 = vunpack.c.l.b16 %v235
  %v1596 = vunpack.c.l.b16 %v236
  %v1597 = vunpack.c.h.b16 %v236
  %v1598 = vunpack.c.l.b16 %v237
  %v1599 = vunpack.c.l.b16 %v238
  %v1600 = vunpack.c.h.b16 %v238
  %v1601 = vunpack.c.l.b16 %v239
  %v1602 = vunpack.c.l.b16 %v240
  %v1603 = vunpack.c.h.b16 %v240
  %v1604 = vunpack.c.l.b16 %v241
  %v1605 = vunpack.c.l.b16 %v242
  %v1606 = vunpack.c.h.b16 %v242
  %v1607 = vunpack.c.l.b16 %v243
  %v1608 = vunpack.c.l.b16 %v244
  %v1609 = vunpack.c.h.b16 %v244
  %v1610 = vunpack.c.l.b16 %v245
  %v1611 = vunpack.c.l.b16 %v246
  %v1612 = vunpack.c.h.b16 %v246
  %v1613 = vunpack.c.l.b16 %v247
  %v1614 = vunpack.c.l.b16 %v248
  %v1615 = vunpack.c.h.b16 %v248
  %v1616 = vunpack.c.l.b16 %v249
  %v1617 = vunpack.c.l.b16 %v250
  %v1618 = vunpack.c.h.b16 %v250
  %v1619 = vunpack.c.l.b16 %v251
  %v1620 = vunpack.c.l.b16 %v252
  %v1621 = vunpack.c.h.b16 %v252
  %v1622 = vunpack.c.l.b16 %v253
  %v1623 = vunpack.c.l.b16 %v254
  %v1624 = vunpack.c.h.b16 %v254
  %v1625 = vunpack.c.l.b16 %v255
  %v1626 = vunpack.c.l.b16 %v256
  %v1627 = vunpack.c.h.b16 %v256
  %v1628 = vunpack.c.l.b16 %v257
  %v1629 = vunpack.c.l.b16 %v258
  %v1630 = vunpack.c.h.b16 %v258
  %v1631 = vunpack.c.l.b16 %v259
  %v1632 = vunpack.c.l.b16 %v260
  %v1633 = vunpack.c.h.b16 %v260
  %v1634 = vunpack.c.l.b16 %v261
  %v1635 = vunpack.c.l.b16 %v262
  %v1636 = vunpack.c.h.b16 %v262
  %v1637 = vunpack.c.l.b16 %v263
  %v1638 = vunpack.c.l.b16 %v264
  %v1639 = vunpack.c.h.b16 %v264
  %v1640 = vunpack.c.l.b16 %v265
  %v1641 = vunpack.c.l.b16 %v266
  %v1642 = vunpack.c.h.b16 %v266
  %v1643 = vunpack.c.l.b16 %v267
  %v1644 = vunpack.c.l.b16 %v268
  %v1645 = vunpack.c.h.b16 %v268
  %v1646 = vunpack.c.l.b16 %v269
  %v1647 = vunpack.c.l.b16 %v270
  %v1648 = vunpack.c.h.b16 %v270
  %v1649 = vunpack.c.l.b16 %v271
  %v1650 = vunpack.c.l.b16 %v272
  %v1651 = vunpack.c.h.b16 %v272
  %v1652 = vunpack.c.l.b16 %v273
  %v1653 = vunpack.c.l.b16 %v274
  %v1654 = vunpack.c.h.b16 %v274
  %v1655 = vunpack.c.l.b16 %v275
  %v1656 = vunpack.c.l.b16 %v276
  %v1657 = vunpack.c.h.b16 %v276
  %v1658 = vunpack.c.l.b16 %v277
  %v1659 = vunpack.c.l.b16 %v278
  %v1660 = vunpack.c.h.b16 %v278
  %v1661 = vunpack.c.l.b16 %v279
  %v1662 = vunpack.c.l.b16 %v280
  %v1663 = vunpack.c.h.b16 %v280
  %v1664 = vunpack.c.l.b16 %v281
  %v1665 = vunpack.c.l.b16 %v282
  %v1666 = vunpack.c.h.b16 %v282
  %v1667 = vunpack.c.l.b16 %v283
  %v1668 = vunpack.c.l.b16 %v284
  %v1669 = vunpack.c.h.b16 %v284
  %v1670 = vunpack.c.l.b16 %v285
  %v1671 = vunpack.c.l.b16 %v286
  %v1672 = vunpack.c.h.b16 %v286
  %v1673 = vunpack.c.l.b16 %v287
  %v1674 = vunpack.c.l.b16 %v288
  %v1675 = vunpack.c.h.b16 %v288
  %v1676 = vunpack.c.l.b16 %v289
  %v1677 = vunpack.c.l.b16 %v290
  %v1678 = vunpack.c.h.b16 %v290
  %v1679 = vunpack.c.l.b16 %v291
  %v1680 = vunpack.c.l.b16 %v292
  %v1681 = vunpack.c.h.b16 %v292
  %v1682 = vunpack.c.l.b16 %v293
  %v1683 = vunpack.c.l.b16 %v294
  %v1684 = vunpack.c.h.b16 %v294
  %v1685 = vunpack.c.l.b16 %v295
  %v1686 = vunpack.c.l.b16 %v296
  %v1687 = vunpack.c.h.b16 %v296
  %v1688 = vunpack.c.l.b16 %v297
  %v1689 = vunpack.c.l.b16 %v298
  %v1690 = vunpack.c.h.b16 %v298
  %v1691 = vunpack.c.l.b16 %v299
  %v1692 = vunpack.c.l.b16 %v300
  %v1693 = vunpack.c.h.b16 %v300
  %v1694 = vunpack.c.l.b16 %v301
  %v1695 = vunpack.c.l.b16 %v302
  %v1696 = vunpack.c.h.b16 %v302
  %v1697 = vunpack.c.l.b16 %v303
  %v1698 = vunpack.c.l.b16 %v304
  %v1699 = vunpack.c.h.b16 %v304
  %v1700 = vunpack.c.l.b16 %v305
  %v1701 = vunpack.c.l.b16 %v306
  %v1702 = vunpack.c.h.b16 %v306
  %v1703 = vunpack.c.l.b16 %v307
  %v1704 = vunpack.c.l.b16 %v308
  %v1705 = vunpack.c.h.b16 %v308
  %v1706 = vunpack.c.l.b16 %v309
  %v1707 = vunpack.c.l.b16 %v310
  %v1708 = vunpack.c.h.b16 %v310
  %v1709 = vunpack.c.l.b16 %v311
  %v1710 = vunpack.c.l.b16 %v312
  %v1711 = vunpack.c.h.b16 %v312
  %v1712 = vunpack.c.l.b16 %v313
  %v1713 = vunpack.c.l.b16 %v314
  %v1714 = vunpack.c.h.b16 %v314
  %v1715 = vunpack.c.l.b16 %v315
  %v1716 = vunpack.c.l.b16 %v316
  %v1717 = vunpack.c.h.b16 %v316
  %v1718 = vunpack.c.l.b16 %v317
  %v1719 = vunpack.c.l.b16 %v318
  %v1720 = vunpack.c.h.b16 %v318
  %v1721 = vunpack.c.l.b16 %v319
  %v1722 = vunpack.c.l.b16 %v320
  %v1723 = vunpack.c.h.b16 %v320
  %v1724 = vunpack.c.l.b16 %v321
  %v1725 = vunpack.c.l.b16 %v322
  %v1726 = vunpack.c.h.b16 %v322
  %v1727 = vunpack.c.l.b16 %v323
  %v1728 = vunpack.c.l.b16 %v324
  %v1729 = vunpack.c.h.b16 %v324
  %v1730 = vunpack.c.l.b16 %v325
  %v1731 = vunpack.c.l.b16 %v326
  %v1732 = vunpack.c.h.b16 %v326
  %v1733 = vunpack.c.l.b16 %v327
  %v1734 = vunpack.c.l.b16 %v328
  %v1735 = vunpack.c.h.b16 %v328
  %v1736 = vunpack.c.l.b16 %v329
  %v1737 = vunpack.c.l.b16 %v330
  %v1738 = vunpack.c.h.b16 %v330
  %v1739 = vunpack.c.l.b16 %v331
  %v1740 = vunpack.c.l.b16 %v332
  %v1741 = vunpack.c.h.b16 %v332
  %v1742 = vunpack.c.l.b16 %v333
  %v1743 = vunpack.c.l.b16 %v334
  %v1744 = vunpack.c.h.b16 %v334
  %v1745 = vunpack.c.l.b16 %v335
  %v1746 = vunpack.c.l.b16 %v336
  %v1747 = vunpack.c.h.b16 %v336
  %v1748 = vunpack.c.l.b16 %v337
  %v1749 = vunpack.c.l.b16 %v338
  %v1750 = vunpack.c.h.b16 %v338
  %v1751 = vunpack.c.l.b16 %v339
  %v1752 = vunpack.c.l.b16 %v340
  %v1753 = vunpack.c.h.b16 %v340
  %v1754 = vunpack.c.l.b16 %v341
  %v1755 = vunpack.c.l.b16 %v342
  %v1756 = vunpack.c.h.b16 %v342
  %v1757 = vunpack.c.l.b16 %v343
  %v1758 = vunpack.c.l.b16 %v344
  %v1759 = vunpack.c.h.b16 %v344
  %v1760 = vunpack.c.l.b16 %v345
  %v1761 = vunpack.c.l.b16 %v346
  %v1762 = vunpack.c.h.b16 %v346
  %v1763 = vunpack.c.l.b16 %v347
  %v1764 = vunpack.c.l.b16 %v348
  %v1765 = vunpack.c.h.b16 %v348
  %v1766 = vunpack.c.l.b16 %v349
  %v1767 = vunpack.c.l.b16 %v350
  %v1768 = vunpack.c.h.b16 %v350
  %v1769 = vunpack.c.l.b16 %v351
  %v1770 = vunpack.c.l.b16 %v352
  %v1771 = vunpack.c.h.b16 %v352
  %v1772 = vunpack.c.l.b16 %v353
  %v1773 = vunpack.c.l.b16 %v354
  %v1774 = vunpack.c.h.b16 %v354
  %v1775 = vunpack.c.l.b16 %v355
  %v1776 = vunpack.c.l.b16 %v356
  %v1777 = vunpack.c.h.b16 %v356
  %v1778 = vunpack.c.l.b16 %v357
  %v1779 = vunpack.c.l.b16 %v358
  %v1780 = vunpack.c.h.b16 %v358
  %v1781 = vunpack.c.l.b16 %v359
  %v1782 = vunpack.c.l.b16 %v360
  %v1783 = vunpack.c.h.b16 %v360
  %v1784 = vunpack.c.l.b16 %v361
  %v1785 = vunpack.c.l.b16 %v362
  %v1786 = vunpack.c.h.b16 %v362
  %v1787 = vunpack.c.l.b16 %v363
  %v1788 = vunpack.c.l.b16 %v364
  %v1789 = vunpack.c.h.b16 %v364
  %v1790 = vunpack.c.l.b16 %v365
  %v1791 = vunpack.c.l.b16 %v366
  %v1792 = vunpack.c.h.b16 %v366
  %v1793 = vunpack.c.l.b16 %v367
  %v1794 = vunpack.c.l.b16 %v368
  %v1795 = vunpack.c.h.b16 %v368
  %v1796 = vunpack.c.l.b16 %v369
  %v1797 = vunpack.c.l.b16 %v370
  %v1798 = vunpack.c.h.b16 %v370
  %v1799 = vunpack.c.l.b16 %v371
  %v1800 = vunpack.c.l.b16 %v372
  %v1801 = vunpack.c.h.b16 %v372
  %v1802 = vunpack.c.l.b16 %v373
  %v1803 = vunpack.c.l.b16 %v374
  %v1804 = vunpack.c.h.b16 %v374
  %v1805 = vunpack.c.l.b16 %v375
  %v1806 = vunpack.c.l.b16 %v376
  %v1807 = vunpack.c.h.b16 %v376
  %v1808 = vunpack.c.l.b16 %v377
  %v1809 = vunpack.c.l.b16 %v378
  %v1810 = vunpack.c.h.b16 %v378
  %v1811 = vunpack.c.l.b16 %v379
  %v1812 = vunpack.c.l.b16 %v380
  %v1813 = vunpack.c.h.b16 %v380
  %v1814 = vunpack.c.l.b16 %v381
  %v1815 = vunpack.c.l.b16 %v382
  %v1816 = vunpack.c.h.b16 %v382
  %v1817 = vunpack.c.l.b16 %v383
  %v1818 = vunpack.c.l.b16 %v384
  %v1819 = vunpack.c.h.b16 %v384
  %v1820 = vunpack.c.l.b16 %v385
  %v1821 = vunpack.c.l.b16 %v386
  %v1822 = vunpack.c.h.b16 %v386
  %v1823 = vunpack.c.l.b16 %v387
  %v1824 = vunpack.c.l.b16 %v388
  %v1825 = vunpack.c.h.b16 %v388
  %v1826 = vunpack.c.l.b16 %v389
  %v1827 = vunpack.c.l.b16 %v390
  %v1828 = vunpack.c.h.b16 %v390
  %v1829 = vunpack.c.l.b16 %v391
  %v1830 = vunpack.c.l.b16 %v392
  %v1831 = vunpack.c.h.b16 %v392
  %v1832 = vunpack.c.l.b16 %v393
  %v1833 = vunpack.c.l.b16 %v394
  %v1834 = vunpack.c.h.b16 %v394
  %v1835 = vunpack.c.l.b16 %v395
  %v1836 = vpack.c.b16 %v1551, %v1548
  %v1837 = vpack.c.b16 %v1552, %v1549
  %v1838 = vpack.c.b16 %v1553, %v1550
  %v1839 = vpack.c.b16 %v1557, %v1554
  %v1840 = vpack.c.b16 %v1558, %v1555
  %v1841 = vpack.c.b16 %v1559, %v1556
  %v1842 = vpack.c.b16 %v1563, %v1560
  %v1843 = vpack.c.b16 %v1564, %v1561
  %v1844 = vpack.c.b16 %v1565, %v1562
  %v1845 = vpack.c.b16 %v1569, %v1566
  %v1846 = vpack.c.b16 %v1570, %v1567
  %v1847 = vpack.c.b16 %v1571, %v1568
  %v1848 = vpack.c.b16 %v1575, %v1572
  %v1849 = vpack.c.b16 %v1576, %v1573
  %v1850 = vpack.c.b16 %v1577, %v1574
  %v1851 = vpack.c.b16 %v1581, %v1578
  %v1852 = vpack.c.b16 %v1582, %v1579
  %v1853 = vpack.c.b16 %v1583, %v1580
  %v1854 = vpack.c.b16 %v1587, %v1584
  %v1855 = vpack.c.b16 %v1588, %v1585
  %v1856 = vpack.c.b16 %v1589, %v1586
  %v1857 = vpack.c.b16 %v1593, %v1590
  %v1858 = vpack.c.b16 %v1594, %v1591
  %v1859 = vpack.c.b16 %v1595, %v1592
  %v1860 = vpack.c.b16 %v1599, %v1596
  %v1861 = vpack.c.b16 %v1600, %v1597
  %v1862 = vpack.c.b16 %v1601, %v1598
  %v1863 = vpack.c.b16 %v1605, %v1602
  %v1864 = vpack.c.b16 %v1606, %v1603
  %v1865 = vpack.c.b16 %v1607, %v1604
  %v1866 = vpack.c.b16 %v1611, %v1608
  %v1867 = vpack.c.b16 %v1612, %v1609
  %v1868 = vpack.c.b16 %v1613, %v1610
  %v1869 = vpack.c.b16 %v1617, %v1614
  %v1870 = vpack.c.b16 %v1618, %v1615
  %v1871 = vpack.c.b16 %v1619, %v1616
  %v1872 = vpack.c.b16 %v1623, %v1620
  %v1873 = vpack.c.b16 %v1624, %v1621
  %v1874 = vpack.c.b16 %v1625, %v1622
  %v1875 = vpack.c.b16 %v1629, %v1626
  %v1876 = vpack.c.b16 %v1630, %v1627
  %v1877 = vpack.c.b16 %v1631, %v1628
  %v1878 = vpack.c.b16 %v1635, %v1632
  %v1879 = vpack.c.b16 %v1636, %v1633
  %v1880 = vpack.c.b16 %v1637, %v1634
  %v1881 = vpack.c.b16 %v1641, %v1638
  %v1882 = vpack.c.b16 %v1642, %v1639
  %v1883 = vpack.c.b16 %v1643, %v1640
  %v1884 = vpack.c.b16 %v1647, %v1644
  %v1885 = vpack.c.b16 %v1648, %v1645
  %v1886 = vpack.c.b16 %v1649, %v1646
  %v1887 = vpack.c.b16 %v1653, %v1650
  %v1888 = vpack.c.b16 %v1654, %v1651
  %v1889 = vpack.c.b16 %v1655, %v1652
  %v1890 = vpack.c.b16 %v1659, %v1656
  %v1891 = vpack.c.b16 %v1660, %v1657
  %v1892 = vpack.c.b16 %v1661, %v1658
  %v1893 = vpack.c.b16 %v1665, %v1662
  %v1894 = vpack.c.b16 %v1666, %v1663
  %v1895 = vpack.c.b16 %v1667, %v1664
  %v1896 = vpack.c.b16 %v1671, %v1668
  %v1897 = vpack.c.b16 %v1672, %v1669
  %v1898 = vpack.c.b16 %v1673, %v1670
  %v1899 = vpack.c.b16 %v1677, %v1674
  %v1900 = vpack.c.b16 %v1678, %v1675
  %v1901 = vpack.c.b16 %v1679, %v1676
  %v1902 = vpack.c.b16 %v1683, %v1680
  %v1903 = vpack.c.b16 %v1684, %v1681
  %v1904 = vpack.c.b16 %v1685, %v1682
  %v1905 = vpack.c.b16 %v1689, %v1686
  %v1906 = vpack.c.b16 %v1690, %v1687
  %v1907 = vpack.c.b16 %v1691, %v1688
  %v1908 = vpack.c.b16 %v1695, %v1692
  %v1909 = vpack.c.b16 %v1696, %v1693
  %v1910 = vpack.c.b16 %v1697, %v1694
  %v1911 = vpack.c.b16 %v1701, %v1698
  %v1912 = vpack.c.b16 %v1702, %v1699
  %v1913 = vpack.c.b16 %v1703, %v1700
  %v1914 = vpack.c.b16 %v1707, %v1704
  %v1915 = vpack.c.b16 %v1708, %v1705
  %v1916 = vpack.c.b16 %v1709, %v1706
  %v1917 = vpack.c.b16 %v1713, %v1710
  %v1918 = vpack.c.b16 %v1714, %v1711
  %v1919 = vpack.c.b16 %v1715, %v1712
  %v1920 = vpack.c.b16 %v1719, %v1716
  %v1921 = vpack.c.b16 %v1720, %v1717
  %v1922 = vpack.c.b16 %v1721, %v1718
  %v1923 = vpack.c.b16 %v1725, %v1722
  %v1924 = vpack.c.b16 %v1726, %v1723
  %v1925 = vpack.c.b16 %v1727, %v1724
  %v1926 = vpack.c.b16 %v1731, %v1728
  %v1927 = vpack.c.b16 %v1732, %v1729
  %v1928 = vpack.c.b16 %v1733, %v1730
  %v1929 = vpack.c.b16 %v1737, %v1734
  %v1930 = vpack.c.b16 %v1738, %v1735
  %v1931 = vpack.c.b16 %v1739, %v1736
  %v1932 = vpack.c.b16 %v1743, %v1740
  %v1933 = vpack.c.b16 %v1744, %v1741
  %v1934 = vpack.c.b16 %v1745, %v1742
  %v1935 = vpack.c.b16 %v1749, %v1746
  %v1936 = vpack.c.b16 %v1750, %v1747
  %v1937 = vpack.c.b16 %v1751, %v1748
  %v1938 = vpack.c.b16 %v1755, %v1752
  %v1939 = vpack.c.b16 %v1756, %v1753
  %v1940 = vpack.c.b16 %v1757, %v1754
  %v1941 = vpack.c.b16 %v1761, %v1758
  %v1942 = vpack.c.b16 %v1762, %v1759
  %v1943 = vpack.c.b16 %v1763, %v1760
  %v1944 = vpack.c.b16 %v1767, %v1764
  %v1945 = vpack.c.b16 %v1768, %v1765
  %v1946 = vpack.c.b16 %v1769, %v1766
  %v1947 = vpack.c.b16 %v1773, %v1770
  %v1948 = vpack.c.b16 %v1774, %v1771
  %v1949 = vpack.c.b16 %v1775, %v1772
  %v1950 = vpack.c.b16 %v1779, %v1776
  %v1951 = vpack.c.b16 %v1780, %v1777
  %v1952 = vpack.c.b16 %v1781, %v1778
  %v1953 = vpack.c.b16 %v1785, %v1782
  %v1954 = vpack.c.b16 %v1786, %v1783
  %v1955 = vpack.c.b16 %v1787, %v1784
  %v1956 = vpack.c.b16 %v1791, %v1788
  %v1957 = vpack.c.b16 %v1792, %v1789
  %v1958 = vpack.c.b16 %v1793, %v1790
  %v1959 = vpack.c.b16 %v1797, %v1794
  %v1960 = vpack.c.b16 %v1798, %v1795
  %v1961 = vpack.c.b16 %v1799, %v1796
  %v1962 = vpack.c.b16 %v1803, %v1800
  %v1963 = vpack.c.b16 %v1804, %v1801
  %v1964 = vpack.c.b16 %v1805, %v1802
  %v1965 = vpack.c.b16 %v1809, %v1806
  %v1966 = vpack.c.b16 %v1810, %v1807
  %v1967 = vpack.c.b16 %v1811, %v1808
  %v1968 = vpack.c.b16 %v1815, %v1812
  %v1969 = vpack.c.b16 %v1816, %v1813
  %v1970 = vpack.c.b16 %v1817, %v1814
  %v1971 = vpack.c.b16 %v1821, %v1818
  %v1972 = vpack.c.b16 %v1822, %v1819
  %v1973 = vpack.c.b16 %v1823, %v1820
  %v1974 = vpack.c.b16 %v1827, %v1824
  %v1975 = vpack.c.b16 %v1828, %v1825
  %v1976 = vpack.c.b16 %v1829, %v1826
  %v1977 = vpack.c.b16 %v1833, %v1830
  %v1978 = vpack.c.b16 %v1834, %v1831
  %v1979 = vpack.c.b16 %v1835, %v1832
  %2124 = vmatprep.subr.bf16.mxu0 %v1837
  %2125 = vmatpush1.bf16.msra.mxu0 %v1836
  %2126 = vmatprep.subr.bf16.mxu0 %v1840
  %2127 = vmatpush1.bf16.msra.mxu0 %v1839
  %2128 = vmatprep.subr.bf16.mxu0 %v1843
  %2129 = vmatpush1.bf16.msra.mxu0 %v1842
  %2130 = vmatprep.subr.bf16.mxu0 %v1846
  %2131 = vmatpush1.bf16.msra.mxu0 %v1845
  %2132 = vmatprep.subr.bf16.mxu0 %v1849
  %2133 = vmatpush1.bf16.msra.mxu0 %v1848
  %2134 = vmatprep.subr.bf16.mxu0 %v1852
  %2135 = vmatpush1.bf16.msra.mxu0 %v1851
  %2136 = vmatprep.subr.bf16.mxu0 %v1855
  %2137 = vmatpush1.bf16.msra.mxu0 %v1854
  %2138 = vmatprep.subr.bf16.mxu0 %v1858
  %2139 = vmatpush1.bf16.msra.mxu0 %v1857
  %2140 = vmatprep.subr.bf16.mxu0 %v1861
  %2141 = vmatpush1.bf16.msra.mxu0 %v1860
  %2142 = vmatprep.subr.bf16.mxu0 %v1864
  %2143 = vmatpush1.bf16.msra.mxu0 %v1863
  %2144 = vmatprep.subr.bf16.mxu0 %v1867
  %2145 = vmatpush1.bf16.msra.mxu0 %v1866
  %2146 = vmatprep.subr.bf16.mxu0 %v1870
  %2147 = vmatpush1.bf16.msra.mxu0 %v1869
  %2148 = vmatprep.subr.bf16.mxu0 %v1873
  %2149 = vmatpush1.bf16.msra.mxu0 %v1872
  %2150 = vmatprep.subr.bf16.mxu0 %v1876
  %2151 = vmatpush1.bf16.msra.mxu0 %v1875
  %2152 = vmatprep.subr.bf16.mxu0 %v1879
  %2153 = vmatpush1.bf16.msra.mxu0 %v1878
  %2154 = vmatprep.subr.bf16.mxu0 %v1882
  %2155 = vmatpush1.bf16.msra.mxu0 %v1881
  %2156 = vmatprep.mubr.bf16.mxu0 %v973
  %2157 = vmatmul.mubr.bf16.gmra.mrb[0].mxu0 %v972
  %v2158 = vpop.f32.mrb[0].mxu0
  %v2159 = vadd.f32 0.0, %v2158
  %v2160 = vpop.f32.mrb[0].mxu0
  %v2161 = vadd.f32 0.0, %v2160
  %v2162 = vpop.f32.mrb[0].mxu0
  %v2163 = vadd.f32 0.0, %v2162
  %v2164 = vpop.f32.mrb[0].mxu0
  %v2165 = vadd.f32 0.0, %v2164
  %2166 = vmatprep.mubr.bf16.mxu0 %v979
  %2167 = vmatmul.mubr.bf16.gmra.mrb[0].mxu0 %v978
  %v2168 = vpop.f32.mrb[0].mxu0
  %v2169 = vadd.f32 0.0, %v2168
  %v2170 = vpop.f32.mrb[0].mxu0
  %v2171 = vadd.f32 0.0, %v2170
  %v2172 = vpop.f32.mrb[0].mxu0
  %v2173 = vadd.f32 0.0, %v2172
  %v2174 = vpop.f32.mrb[0].mxu0
  %v2175 = vadd.f32 0.0, %v2174
  %2176 = vmatprep.mubr.bf16.mxu0 %v985
  %2177 = vmatmul.mubr.bf16.gmra.mrb[0].mxu0 %v984
  %v2178 = vpop.f32.mrb[0].mxu0
  %v2179 = vadd.f32 0.0, %v2178
  %v2180 = vpop.f32.mrb[0].mxu0
  %v2181 = vadd.f32 0.0, %v2180
  %v2182 = vpop.f32.mrb[0].mxu0
  %v2183 = vadd.f32 0.0, %v2182
  %v2184 = vpop.f32.mrb[0].mxu0
  %v2185 = vadd.f32 0.0, %v2184
  %2186 = vmatprep.mubr.bf16.mxu0 %v991
  %2187 = vmatmul.mubr.bf16.gmra.mrb[0].mxu0 %v990
  %v2188 = vpop.f32.mrb[0].mxu0
  %v2189 = vadd.f32 0.0, %v2188
  %v2190 = vpop.f32.mrb[0].mxu0
  %v2191 = vadd.f32 0.0, %v2190
  %v2192 = vpop.f32.mrb[0].mxu0
  %v2193 = vadd.f32 0.0, %v2192
  %v2194 = vpop.f32.mrb[0].mxu0
  %v2195 = vadd.f32 0.0, %v2194
  %2196 = vmatprep.mubr.bf16.mxu0 %v997
  %2197 = vmatmul.mubr.bf16.gmra.mrb[0].mxu0 %v996
  %v2198 = vpop.f32.mrb[0].mxu0
  %v2199 = vadd.f32 0.0, %v2198
  %v2200 = vpop.f32.mrb[0].mxu0
  %v2201 = vadd.f32 0.0, %v2200
  %v2202 = vpop.f32.mrb[0].mxu0
  %v2203 = vadd.f32 0.0, %v2202
  %v2204 = vpop.f32.mrb[0].mxu0
  %v2205 = vadd.f32 0.0, %v2204
  %2206 = vmatprep.mubr.bf16.mxu0 %v1003
  %2207 = vmatmul.mubr.bf16.gmra.mrb[0].mxu0 %v1002
  %v2208 = vpop.f32.mrb[0].mxu0
  %v2209 = vadd.f32 0.0, %v2208
  %v2210 = vpop.f32.mrb[0].mxu0
  %v2211 = vadd.f32 0.0, %v2210
  %v2212 = vpop.f32.mrb[0].mxu0
  %v2213 = vadd.f32 0.0, %v2212
  %v2214 = vpop.f32.mrb[0].mxu0
  %v2215 = vadd.f32 0.0, %v2214
  %2216 = vmatprep.mubr.bf16.mxu0 %v1009
  %2217 = vmatmul.mubr.bf16.gmra.mrb[0].mxu0 %v1008
  %v2218 = vpop.f32.mrb[0].mxu0
  %v2219 = vadd.f32 0.0, %v2218
  %v2220 = vpop.f32.mrb[0].mxu0
  %v2221 = vadd.f32 0.0, %v2220
  %v2222 = vpop.f32.mrb[0].mxu0
  %v2223 = vadd.f32 0.0, %v2222
  %v2224 = vpop.f32.mrb[0].mxu0
  %v2225 = vadd.f32 0.0, %v2224
  %2226 = vmatprep.mubr.bf16.mxu0 %v1015
  %2227 = vmatmul.mubr.bf16.gmra.mrb[0].mxu0 %v1014
  %v2228 = vpop.f32.mrb[0].mxu0
  %v2229 = vadd.f32 0.0, %v2228
  %v2230 = vpop.f32.mrb[0].mxu0
  %v2231 = vadd.f32 0.0, %v2230
  %v2232 = vpop.f32.mrb[0].mxu0
  %v2233 = vadd.f32 0.0, %v2232
  %v2234 = vpop.f32.mrb[0].mxu0
  %v2235 = vadd.f32 0.0, %v2234
  %2236 = vmatprep.mubr.bf16.mxu0 %v1021
  %2237 = vmatmul.mubr.bf16.gmra.mrb[0].mxu0 %v1020
  %v2238 = vpop.f32.mrb[0].mxu0
  %v2239 = vadd.f32 0.0, %v2238
  %v2240 = vpop.f32.mrb[0].mxu0
  %v2241 = vadd.f32 0.0, %v2240
  %v2242 = vpop.f32.mrb[0].mxu0
  %v2243 = vadd.f32 0.0, %v2242
  %v2244 = vpop.f32.mrb[0].mxu0
  %v2245 = vadd.f32 0.0, %v2244
  %2246 = vmatprep.mubr.bf16.mxu0 %v1027
  %2247 = vmatmul.mubr.bf16.gmra.mrb[0].mxu0 %v1026
  %v2248 = vpop.f32.mrb[0].mxu0
  %v2249 = vadd.f32 0.0, %v2248
  %v2250 = vpop.f32.mrb[0].mxu0
  %v2251 = vadd.f32 0.0, %v2250
  %v2252 = vpop.f32.mrb[0].mxu0
  %v2253 = vadd.f32 0.0, %v2252
  %v2254 = vpop.f32.mrb[0].mxu0
  %v2255 = vadd.f32 0.0, %v2254
  %2256 = vmatprep.mubr.bf16.mxu0 %v1033
  %2257 = vmatmul.mubr.bf16.gmra.mrb[0].mxu0 %v1032
  %v2258 = vpop.f32.mrb[0].mxu0
  %v2259 = vadd.f32 0.0, %v2258
  %v2260 = vpop.f32.mrb[0].mxu0
  %v2261 = vadd.f32 0.0, %v2260
  %v2262 = vpop.f32.mrb[0].mxu0
  %v2263 = vadd.f32 0.0, %v2262
  %v2264 = vpop.f32.mrb[0].mxu0
  %v2265 = vadd.f32 0.0, %v2264
  %2266 = vmatprep.mubr.bf16.mxu0 %v1039
  %2267 = vmatmul.mubr.bf16.gmra.mrb[0].mxu0 %v1038
  %v2268 = vpop.f32.mrb[0].mxu0
  %v2269 = vadd.f32 0.0, %v2268
  %v2270 = vpop.f32.mrb[0].mxu0
  %v2271 = vadd.f32 0.0, %v2270
  %v2272 = vpop.f32.mrb[0].mxu0
  %v2273 = vadd.f32 0.0, %v2272
  %v2274 = vpop.f32.mrb[0].mxu0
  %v2275 = vadd.f32 0.0, %v2274
  %2276 = vmatprep.mubr.bf16.mxu0 %v1045
  %2277 = vmatmul.mubr.bf16.gmra.mrb[0].mxu0 %v1044
  %v2278 = vpop.f32.mrb[0].mxu0
  %v2279 = vadd.f32 0.0, %v2278
  %v2280 = vpop.f32.mrb[0].mxu0
  %v2281 = vadd.f32 0.0, %v2280
  %v2282 = vpop.f32.mrb[0].mxu0
  %v2283 = vadd.f32 0.0, %v2282
  %v2284 = vpop.f32.mrb[0].mxu0
  %v2285 = vadd.f32 0.0, %v2284
  %2286 = vmatprep.mubr.bf16.mxu0 %v1051
  %2287 = vmatmul.mubr.bf16.gmra.mrb[0].mxu0 %v1050
  %v2288 = vpop.f32.mrb[0].mxu0
  %v2289 = vadd.f32 0.0, %v2288
  %v2290 = vpop.f32.mrb[0].mxu0
  %v2291 = vadd.f32 0.0, %v2290
  %v2292 = vpop.f32.mrb[0].mxu0
  %v2293 = vadd.f32 0.0, %v2292
  %v2294 = vpop.f32.mrb[0].mxu0
  %v2295 = vadd.f32 0.0, %v2294
  %2296 = vmatprep.mubr.bf16.mxu0 %v1057
  %2297 = vmatmul.mubr.bf16.gmra.mrb[0].mxu0 %v1056
  %v2298 = vpop.f32.mrb[0].mxu0
  %v2299 = vadd.f32 0.0, %v2298
  %v2300 = vpop.f32.mrb[0].mxu0
  %v2301 = vadd.f32 0.0, %v2300
  %v2302 = vpop.f32.mrb[0].mxu0
  %v2303 = vadd.f32 0.0, %v2302
  %v2304 = vpop.f32.mrb[0].mxu0
  %v2305 = vadd.f32 0.0, %v2304
  %2306 = vmatprep.mubr.bf16.mxu0 %v1063
  %2307 = vmatmul.mubr.bf16.gmra.mrb[0].mxu0 %v1062
  %v2308 = vpop.f32.mrb[0].mxu0
  %v2309 = vadd.f32 0.0, %v2308
  %v2310 = vpop.f32.mrb[0].mxu0
  %v2311 = vadd.f32 0.0, %v2310
  %v2312 = vpop.f32.mrb[0].mxu0
  %v2313 = vadd.f32 0.0, %v2312
  %v2314 = vpop.f32.mrb[0].mxu0
  %v2315 = vadd.f32 0.0, %v2314
  %2316 = vmatprep.mubr.bf16.mxu0 %v1069
  %2317 = vmatmul.mubr.bf16.gmra.mrb[0].mxu0 %v1068
  %v2318 = vpop.f32.mrb[0].mxu0
  %v2319 = vadd.f32 0.0, %v2318
  %v2320 = vpop.f32.mrb[0].mxu0
  %v2321 = vadd.f32 0.0, %v2320
  %v2322 = vpop.f32.mrb[0].mxu0
  %v2323 = vadd.f32 0.0, %v2322
  %v2324 = vpop.f32.mrb[0].mxu0
  %v2325 = vadd.f32 0.0, %v2324
  %2326 = vmatprep.mubr.bf16.mxu0 %v1075
  %2327 = vmatmul.mubr.bf16.gmra.mrb[0].mxu0 %v1074
  %v2328 = vpop.f32.mrb[0].mxu0
  %v2329 = vadd.f32 0.0, %v2328
  %v2330 = vpop.f32.mrb[0].mxu0
  %v2331 = vadd.f32 0.0, %v2330
  %v2332 = vpop.f32.mrb[0].mxu0
  %v2333 = vadd.f32 0.0, %v2332
  %v2334 = vpop.f32.mrb[0].mxu0
  %v2335 = vadd.f32 0.0, %v2334
  %2336 = vmatprep.mubr.bf16.mxu0 %v1081
  %2337 = vmatmul.mubr.bf16.gmra.mrb[0].mxu0 %v1080
  %v2338 = vpop.f32.mrb[0].mxu0
  %v2339 = vadd.f32 0.0, %v2338
  %v2340 = vpop.f32.mrb[0].mxu0
  %v2341 = vadd.f32 0.0, %v2340
  %v2342 = vpop.f32.mrb[0].mxu0
  %v2343 = vadd.f32 0.0, %v2342
  %v2344 = vpop.f32.mrb[0].mxu0
  %v2345 = vadd.f32 0.0, %v2344
  %2346 = vmatprep.mubr.bf16.mxu0 %v1087
  %2347 = vmatmul.mubr.bf16.gmra.mrb[0].mxu0 %v1086
  %v2348 = vpop.f32.mrb[0].mxu0
  %v2349 = vadd.f32 0.0, %v2348
  %v2350 = vpop.f32.mrb[0].mxu0
  %v2351 = vadd.f32 0.0, %v2350
  %v2352 = vpop.f32.mrb[0].mxu0
  %v2353 = vadd.f32 0.0, %v2352
  %v2354 = vpop.f32.mrb[0].mxu0
  %v2355 = vadd.f32 0.0, %v2354
  %2356 = vmatprep.mubr.bf16.mxu0 %v1093
  %2357 = vmatmul.mubr.bf16.gmra.mrb[0].mxu0 %v1092
  %v2358 = vpop.f32.mrb[0].mxu0
  %v2359 = vadd.f32 0.0, %v2358
  %v2360 = vpop.f32.mrb[0].mxu0
  %v2361 = vadd.f32 0.0, %v2360
  %v2362 = vpop.f32.mrb[0].mxu0
  %v2363 = vadd.f32 0.0, %v2362
  %v2364 = vpop.f32.mrb[0].mxu0
  %v2365 = vadd.f32 0.0, %v2364
  %2366 = vmatprep.mubr.bf16.mxu0 %v1099
  %2367 = vmatmul.mubr.bf16.gmra.mrb[0].mxu0 %v1098
  %v2368 = vpop.f32.mrb[0].mxu0
  %v2369 = vadd.f32 0.0, %v2368
  %v2370 = vpop.f32.mrb[0].mxu0
  %v2371 = vadd.f32 0.0, %v2370
  %v2372 = vpop.f32.mrb[0].mxu0
  %v2373 = vadd.f32 0.0, %v2372
  %v2374 = vpop.f32.mrb[0].mxu0
  %v2375 = vadd.f32 0.0, %v2374
  %2376 = vmatprep.mubr.bf16.mxu0 %v1105
  %2377 = vmatmul.mubr.bf16.gmra.mrb[0].mxu0 %v1104
  %v2378 = vpop.f32.mrb[0].mxu0
  %v2379 = vadd.f32 0.0, %v2378
  %v2380 = vpop.f32.mrb[0].mxu0
  %v2381 = vadd.f32 0.0, %v2380
  %v2382 = vpop.f32.mrb[0].mxu0
  %v2383 = vadd.f32 0.0, %v2382
  %v2384 = vpop.f32.mrb[0].mxu0
  %v2385 = vadd.f32 0.0, %v2384
  %2386 = vmatprep.mubr.bf16.mxu0 %v1111
  %2387 = vmatmul.mubr.bf16.gmra.mrb[0].mxu0 %v1110
  %v2388 = vpop.f32.mrb[0].mxu0
  %v2389 = vadd.f32 0.0, %v2388
  %v2390 = vpop.f32.mrb[0].mxu0
  %v2391 = vadd.f32 0.0, %v2390
  %v2392 = vpop.f32.mrb[0].mxu0
  %v2393 = vadd.f32 0.0, %v2392
  %v2394 = vpop.f32.mrb[0].mxu0
  %v2395 = vadd.f32 0.0, %v2394
  %2396 = vmatprep.mubr.bf16.mxu0 %v1117
  %2397 = vmatmul.mubr.bf16.gmra.mrb[0].mxu0 %v1116
  %v2398 = vpop.f32.mrb[0].mxu0
  %v2399 = vadd.f32 0.0, %v2398
  %v2400 = vpop.f32.mrb[0].mxu0
  %v2401 = vadd.f32 0.0, %v2400
  %v2402 = vpop.f32.mrb[0].mxu0
  %v2403 = vadd.f32 0.0, %v2402
  %v2404 = vpop.f32.mrb[0].mxu0
  %v2405 = vadd.f32 0.0, %v2404
  %2406 = vmatprep.mubr.bf16.mxu0 %v1123
  %2407 = vmatmul.mubr.bf16.gmra.mrb[0].mxu0 %v1122
  %v2408 = vpop.f32.mrb[0].mxu0
  %v2409 = vadd.f32 0.0, %v2408
  %v2410 = vpop.f32.mrb[0].mxu0
  %v2411 = vadd.f32 0.0, %v2410
  %v2412 = vpop.f32.mrb[0].mxu0
  %v2413 = vadd.f32 0.0, %v2412
  %v2414 = vpop.f32.mrb[0].mxu0
  %v2415 = vadd.f32 0.0, %v2414
  %2416 = vmatprep.mubr.bf16.mxu0 %v1129
  %2417 = vmatmul.mubr.bf16.gmra.mrb[0].mxu0 %v1128
  %v2418 = vpop.f32.mrb[0].mxu0
  %v2419 = vadd.f32 0.0, %v2418
  %v2420 = vpop.f32.mrb[0].mxu0
  %v2421 = vadd.f32 0.0, %v2420
  %v2422 = vpop.f32.mrb[0].mxu0
  %v2423 = vadd.f32 0.0, %v2422
  %v2424 = vpop.f32.mrb[0].mxu0
  %v2425 = vadd.f32 0.0, %v2424
  %2426 = vmatprep.mubr.bf16.mxu0 %v1135
  %2427 = vmatmul.mubr.bf16.gmra.mrb[0].mxu0 %v1134
  %v2428 = vpop.f32.mrb[0].mxu0
  %v2429 = vadd.f32 0.0, %v2428
  %v2430 = vpop.f32.mrb[0].mxu0
  %v2431 = vadd.f32 0.0, %v2430
  %v2432 = vpop.f32.mrb[0].mxu0
  %v2433 = vadd.f32 0.0, %v2432
  %v2434 = vpop.f32.mrb[0].mxu0
  %v2435 = vadd.f32 0.0, %v2434
  %2436 = vmatprep.mubr.bf16.mxu0 %v1141
  %2437 = vmatmul.mubr.bf16.gmra.mrb[0].mxu0 %v1140
  %v2438 = vpop.f32.mrb[0].mxu0
  %v2439 = vadd.f32 0.0, %v2438
  %v2440 = vpop.f32.mrb[0].mxu0
  %v2441 = vadd.f32 0.0, %v2440
  %v2442 = vpop.f32.mrb[0].mxu0
  %v2443 = vadd.f32 0.0, %v2442
  %v2444 = vpop.f32.mrb[0].mxu0
  %v2445 = vadd.f32 0.0, %v2444
  %2446 = vmatprep.mubr.bf16.mxu0 %v1147
  %2447 = vmatmul.mubr.bf16.gmra.mrb[0].mxu0 %v1146
  %v2448 = vpop.f32.mrb[0].mxu0
  %v2449 = vadd.f32 0.0, %v2448
  %v2450 = vpop.f32.mrb[0].mxu0
  %v2451 = vadd.f32 0.0, %v2450
  %v2452 = vpop.f32.mrb[0].mxu0
  %v2453 = vadd.f32 0.0, %v2452
  %v2454 = vpop.f32.mrb[0].mxu0
  %v2455 = vadd.f32 0.0, %v2454
  %2456 = vmatprep.mubr.bf16.mxu0 %v1153
  %2457 = vmatmul.mubr.bf16.gmra.mrb[0].mxu0 %v1152
  %v2458 = vpop.f32.mrb[0].mxu0
  %v2459 = vadd.f32 0.0, %v2458
  %v2460 = vpop.f32.mrb[0].mxu0
  %v2461 = vadd.f32 0.0, %v2460
  %v2462 = vpop.f32.mrb[0].mxu0
  %v2463 = vadd.f32 0.0, %v2462
  %v2464 = vpop.f32.mrb[0].mxu0
  %v2465 = vadd.f32 0.0, %v2464
  %2466 = vmatprep.mubr.bf16.mxu0 %v1159
  %2467 = vmatmul.mubr.bf16.gmra.mrb[0].mxu0 %v1158
  %v2468 = vpop.f32.mrb[0].mxu0
  %v2469 = vadd.f32 0.0, %v2468
  %v2470 = vpop.f32.mrb[0].mxu0
  %v2471 = vadd.f32 0.0, %v2470
  %v2472 = vpop.f32.mrb[0].mxu0
  %v2473 = vadd.f32 0.0, %v2472
  %v2474 = vpop.f32.mrb[0].mxu0
  %v2475 = vadd.f32 0.0, %v2474
  %2476 = vdwg.mxu0
  %2477 = vmatprep.subr.bf16.mxu0 %v1885
  %2478 = vmatpush1.bf16.msra.mxu0 %v1884
  %2479 = vmatprep.subr.bf16.mxu0 %v1888
  %2480 = vmatpush1.bf16.msra.mxu0 %v1887
  %2481 = vmatprep.subr.bf16.mxu0 %v1891
  %2482 = vmatpush1.bf16.msra.mxu0 %v1890
  %2483 = vmatprep.subr.bf16.mxu0 %v1894
  %2484 = vmatpush1.bf16.msra.mxu0 %v1893
  %2485 = vmatprep.subr.bf16.mxu0 %v1897
  %2486 = vmatpush1.bf16.msra.mxu0 %v1896
  %2487 = vmatprep.subr.bf16.mxu0 %v1900
  %2488 = vmatpush1.bf16.msra.mxu0 %v1899
  %2489 = vmatprep.subr.bf16.mxu0 %v1903
  %2490 = vmatpush1.bf16.msra.mxu0 %v1902
  %2491 = vmatprep.subr.bf16.mxu0 %v1906
  %2492 = vmatpush1.bf16.msra.mxu0 %v1905
  %2493 = vmatprep.subr.bf16.mxu0 %v1909
  %2494 = vmatpush1.bf16.msra.mxu0 %v1908
  %2495 = vmatprep.subr.bf16.mxu0 %v1912
  %2496 = vmatpush1.bf16.msra.mxu0 %v1911
  %2497 = vmatprep.subr.bf16.mxu0 %v1915
  %2498 = vmatpush1.bf16.msra.mxu0 %v1914
  %2499 = vmatprep.subr.bf16.mxu0 %v1918
  %2500 = vmatpush1.bf16.msra.mxu0 %v1917
  %2501 = vmatprep.subr.bf16.mxu0 %v1921
  %2502 = vmatpush1.bf16.msra.mxu0 %v1920
  %2503 = vmatprep.subr.bf16.mxu0 %v1924
  %2504 = vmatpush1.bf16.msra.mxu0 %v1923
  %2505 = vmatprep.subr.bf16.mxu0 %v1927
  %2506 = vmatpush1.bf16.msra.mxu0 %v1926
  %2507 = vmatprep.subr.bf16.mxu0 %v1930
  %2508 = vmatpush1.bf16.msra.mxu0 %v1929
  %2509 = vmatprep.mubr.bf16.mxu0 %v975
  %2510 = vmatmul.mubr.bf16.gmra.mrb[0].mxu0 %v974
  %v2511 = vpop.f32.mrb[0].mxu0
  %v2512 = vadd.f32 %v2159, %v2511
  %v2513 = vpop.f32.mrb[0].mxu0
  %v2514 = vadd.f32 %v2161, %v2513
  %v2515 = vpop.f32.mrb[0].mxu0
  %v2516 = vadd.f32 %v2163, %v2515
  %v2517 = vpop.f32.mrb[0].mxu0
  %v2518 = vadd.f32 %v2165, %v2517
  %2519 = vmatprep.mubr.bf16.mxu0 %v981
  %2520 = vmatmul.mubr.bf16.gmra.mrb[0].mxu0 %v980
  %v2521 = vpop.f32.mrb[0].mxu0
  %v2522 = vadd.f32 %v2169, %v2521
  %v2523 = vpop.f32.mrb[0].mxu0
  %v2524 = vadd.f32 %v2171, %v2523
  %v2525 = vpop.f32.mrb[0].mxu0
  %v2526 = vadd.f32 %v2173, %v2525
  %v2527 = vpop.f32.mrb[0].mxu0
  %v2528 = vadd.f32 %v2175, %v2527
  %2529 = vmatprep.mubr.bf16.mxu0 %v987
  %2530 = vmatmul.mubr.bf16.gmra.mrb[0].mxu0 %v986
  %v2531 = vpop.f32.mrb[0].mxu0
  %v2532 = vadd.f32 %v2179, %v2531
  %v2533 = vpop.f32.mrb[0].mxu0
  %v2534 = vadd.f32 %v2181, %v2533
  %v2535 = vpop.f32.mrb[0].mxu0
  %v2536 = vadd.f32 %v2183, %v2535
  %v2537 = vpop.f32.mrb[0].mxu0
  %v2538 = vadd.f32 %v2185, %v2537
  %2539 = vmatprep.mubr.bf16.mxu0 %v993
  %2540 = vmatmul.mubr.bf16.gmra.mrb[0].mxu0 %v992
  %v2541 = vpop.f32.mrb[0].mxu0
  %v2542 = vadd.f32 %v2189, %v2541
  %v2543 = vpop.f32.mrb[0].mxu0
  %v2544 = vadd.f32 %v2191, %v2543
  %v2545 = vpop.f32.mrb[0].mxu0
  %v2546 = vadd.f32 %v2193, %v2545
  %v2547 = vpop.f32.mrb[0].mxu0
  %v2548 = vadd.f32 %v2195, %v2547
  %2549 = vmatprep.mubr.bf16.mxu0 %v999
  %2550 = vmatmul.mubr.bf16.gmra.mrb[0].mxu0 %v998
  %v2551 = vpop.f32.mrb[0].mxu0
  %v2552 = vadd.f32 %v2199, %v2551
  %v2553 = vpop.f32.mrb[0].mxu0
  %v2554 = vadd.f32 %v2201, %v2553
  %v2555 = vpop.f32.mrb[0].mxu0
  %v2556 = vadd.f32 %v2203, %v2555
  %v2557 = vpop.f32.mrb[0].mxu0
  %v2558 = vadd.f32 %v2205, %v2557
  %2559 = vmatprep.mubr.bf16.mxu0 %v1005
  %2560 = vmatmul.mubr.bf16.gmra.mrb[0].mxu0 %v1004
  %v2561 = vpop.f32.mrb[0].mxu0
  %v2562 = vadd.f32 %v2209, %v2561
  %v2563 = vpop.f32.mrb[0].mxu0
  %v2564 = vadd.f32 %v2211, %v2563
  %v2565 = vpop.f32.mrb[0].mxu0
  %v2566 = vadd.f32 %v2213, %v2565
  %v2567 = vpop.f32.mrb[0].mxu0
  %v2568 = vadd.f32 %v2215, %v2567
  %2569 = vmatprep.mubr.bf16.mxu0 %v1011
  %2570 = vmatmul.mubr.bf16.gmra.mrb[0].mxu0 %v1010
  %v2571 = vpop.f32.mrb[0].mxu0
  %v2572 = vadd.f32 %v2219, %v2571
  %v2573 = vpop.f32.mrb[0].mxu0
  %v2574 = vadd.f32 %v2221, %v2573
  %v2575 = vpop.f32.mrb[0].mxu0
  %v2576 = vadd.f32 %v2223, %v2575
  %v2577 = vpop.f32.mrb[0].mxu0
  %v2578 = vadd.f32 %v2225, %v2577
  %2579 = vmatprep.mubr.bf16.mxu0 %v1017
  %2580 = vmatmul.mubr.bf16.gmra.mrb[0].mxu0 %v1016
  %v2581 = vpop.f32.mrb[0].mxu0
  %v2582 = vadd.f32 %v2229, %v2581
  %v2583 = vpop.f32.mrb[0].mxu0
  %v2584 = vadd.f32 %v2231, %v2583
  %v2585 = vpop.f32.mrb[0].mxu0
  %v2586 = vadd.f32 %v2233, %v2585
  %v2587 = vpop.f32.mrb[0].mxu0
  %v2588 = vadd.f32 %v2235, %v2587
  %2589 = vmatprep.mubr.bf16.mxu0 %v1023
  %2590 = vmatmul.mubr.bf16.gmra.mrb[0].mxu0 %v1022
  %v2591 = vpop.f32.mrb[0].mxu0
  %v2592 = vadd.f32 %v2239, %v2591
  %v2593 = vpop.f32.mrb[0].mxu0
  %v2594 = vadd.f32 %v2241, %v2593
  %v2595 = vpop.f32.mrb[0].mxu0
  %v2596 = vadd.f32 %v2243, %v2595
  %v2597 = vpop.f32.mrb[0].mxu0
  %v2598 = vadd.f32 %v2245, %v2597
  %2599 = vmatprep.mubr.bf16.mxu0 %v1029
  %2600 = vmatmul.mubr.bf16.gmra.mrb[0].mxu0 %v1028
  %v2601 = vpop.f32.mrb[0].mxu0
  %v2602 = vadd.f32 %v2249, %v2601
  %v2603 = vpop.f32.mrb[0].mxu0
  %v2604 = vadd.f32 %v2251, %v2603
  %v2605 = vpop.f32.mrb[0].mxu0
  %v2606 = vadd.f32 %v2253, %v2605
  %v2607 = vpop.f32.mrb[0].mxu0
  %v2608 = vadd.f32 %v2255, %v2607
  %2609 = vmatprep.mubr.bf16.mxu0 %v1035
  %2610 = vmatmul.mubr.bf16.gmra.mrb[0].mxu0 %v1034
  %v2611 = vpop.f32.mrb[0].mxu0
  %v2612 = vadd.f32 %v2259, %v2611
  %v2613 = vpop.f32.mrb[0].mxu0
  %v2614 = vadd.f32 %v2261, %v2613
  %v2615 = vpop.f32.mrb[0].mxu0
  %v2616 = vadd.f32 %v2263, %v2615
  %v2617 = vpop.f32.mrb[0].mxu0
  %v2618 = vadd.f32 %v2265, %v2617
  %2619 = vmatprep.mubr.bf16.mxu0 %v1041
  %2620 = vmatmul.mubr.bf16.gmra.mrb[0].mxu0 %v1040
  %v2621 = vpop.f32.mrb[0].mxu0
  %v2622 = vadd.f32 %v2269, %v2621
  %v2623 = vpop.f32.mrb[0].mxu0
  %v2624 = vadd.f32 %v2271, %v2623
  %v2625 = vpop.f32.mrb[0].mxu0
  %v2626 = vadd.f32 %v2273, %v2625
  %v2627 = vpop.f32.mrb[0].mxu0
  %v2628 = vadd.f32 %v2275, %v2627
  %2629 = vmatprep.mubr.bf16.mxu0 %v1047
  %2630 = vmatmul.mubr.bf16.gmra.mrb[0].mxu0 %v1046
  %v2631 = vpop.f32.mrb[0].mxu0
  %v2632 = vadd.f32 %v2279, %v2631
  %v2633 = vpop.f32.mrb[0].mxu0
  %v2634 = vadd.f32 %v2281, %v2633
  %v2635 = vpop.f32.mrb[0].mxu0
  %v2636 = vadd.f32 %v2283, %v2635
  %v2637 = vpop.f32.mrb[0].mxu0
  %v2638 = vadd.f32 %v2285, %v2637
  %2639 = vmatprep.mubr.bf16.mxu0 %v1053
  %2640 = vmatmul.mubr.bf16.gmra.mrb[0].mxu0 %v1052
  %v2641 = vpop.f32.mrb[0].mxu0
  %v2642 = vadd.f32 %v2289, %v2641
  %v2643 = vpop.f32.mrb[0].mxu0
  %v2644 = vadd.f32 %v2291, %v2643
  %v2645 = vpop.f32.mrb[0].mxu0
  %v2646 = vadd.f32 %v2293, %v2645
  %v2647 = vpop.f32.mrb[0].mxu0
  %v2648 = vadd.f32 %v2295, %v2647
  %2649 = vmatprep.mubr.bf16.mxu0 %v1059
  %2650 = vmatmul.mubr.bf16.gmra.mrb[0].mxu0 %v1058
  %v2651 = vpop.f32.mrb[0].mxu0
  %v2652 = vadd.f32 %v2299, %v2651
  %v2653 = vpop.f32.mrb[0].mxu0
  %v2654 = vadd.f32 %v2301, %v2653
  %v2655 = vpop.f32.mrb[0].mxu0
  %v2656 = vadd.f32 %v2303, %v2655
  %v2657 = vpop.f32.mrb[0].mxu0
  %v2658 = vadd.f32 %v2305, %v2657
  %2659 = vmatprep.mubr.bf16.mxu0 %v1065
  %2660 = vmatmul.mubr.bf16.gmra.mrb[0].mxu0 %v1064
  %v2661 = vpop.f32.mrb[0].mxu0
  %v2662 = vadd.f32 %v2309, %v2661
  %v2663 = vpop.f32.mrb[0].mxu0
  %v2664 = vadd.f32 %v2311, %v2663
  %v2665 = vpop.f32.mrb[0].mxu0
  %v2666 = vadd.f32 %v2313, %v2665
  %v2667 = vpop.f32.mrb[0].mxu0
  %v2668 = vadd.f32 %v2315, %v2667
  %2669 = vmatprep.mubr.bf16.mxu0 %v1071
  %2670 = vmatmul.mubr.bf16.gmra.mrb[0].mxu0 %v1070
  %v2671 = vpop.f32.mrb[0].mxu0
  %v2672 = vadd.f32 %v2319, %v2671
  %v2673 = vpop.f32.mrb[0].mxu0
  %v2674 = vadd.f32 %v2321, %v2673
  %v2675 = vpop.f32.mrb[0].mxu0
  %v2676 = vadd.f32 %v2323, %v2675
  %v2677 = vpop.f32.mrb[0].mxu0
  %v2678 = vadd.f32 %v2325, %v2677
  %2679 = vmatprep.mubr.bf16.mxu0 %v1077
  %2680 = vmatmul.mubr.bf16.gmra.mrb[0].mxu0 %v1076
  %v2681 = vpop.f32.mrb[0].mxu0
  %v2682 = vadd.f32 %v2329, %v2681
  %v2683 = vpop.f32.mrb[0].mxu0
  %v2684 = vadd.f32 %v2331, %v2683
  %v2685 = vpop.f32.mrb[0].mxu0
  %v2686 = vadd.f32 %v2333, %v2685
  %v2687 = vpop.f32.mrb[0].mxu0
  %v2688 = vadd.f32 %v2335, %v2687
  %2689 = vmatprep.mubr.bf16.mxu0 %v1083
  %2690 = vmatmul.mubr.bf16.gmra.mrb[0].mxu0 %v1082
  %v2691 = vpop.f32.mrb[0].mxu0
  %v2692 = vadd.f32 %v2339, %v2691
  %v2693 = vpop.f32.mrb[0].mxu0
  %v2694 = vadd.f32 %v2341, %v2693
  %v2695 = vpop.f32.mrb[0].mxu0
  %v2696 = vadd.f32 %v2343, %v2695
  %v2697 = vpop.f32.mrb[0].mxu0
  %v2698 = vadd.f32 %v2345, %v2697
  %2699 = vmatprep.mubr.bf16.mxu0 %v1089
  %2700 = vmatmul.mubr.bf16.gmra.mrb[0].mxu0 %v1088
  %v2701 = vpop.f32.mrb[0].mxu0
  %v2702 = vadd.f32 %v2349, %v2701
  %v2703 = vpop.f32.mrb[0].mxu0
  %v2704 = vadd.f32 %v2351, %v2703
  %v2705 = vpop.f32.mrb[0].mxu0
  %v2706 = vadd.f32 %v2353, %v2705
  %v2707 = vpop.f32.mrb[0].mxu0
  %v2708 = vadd.f32 %v2355, %v2707
  %2709 = vmatprep.mubr.bf16.mxu0 %v1095
  %2710 = vmatmul.mubr.bf16.gmra.mrb[0].mxu0 %v1094
  %v2711 = vpop.f32.mrb[0].mxu0
  %v2712 = vadd.f32 %v2359, %v2711
  %v2713 = vpop.f32.mrb[0].mxu0
  %v2714 = vadd.f32 %v2361, %v2713
  %v2715 = vpop.f32.mrb[0].mxu0
  %v2716 = vadd.f32 %v2363, %v2715
  %v2717 = vpop.f32.mrb[0].mxu0
  %v2718 = vadd.f32 %v2365, %v2717
  %2719 = vmatprep.mubr.bf16.mxu0 %v1101
  %2720 = vmatmul.mubr.bf16.gmra.mrb[0].mxu0 %v1100
  %v2721 = vpop.f32.mrb[0].mxu0
  %v2722 = vadd.f32 %v2369, %v2721
  %v2723 = vpop.f32.mrb[0].mxu0
  %v2724 = vadd.f32 %v2371, %v2723
  %v2725 = vpop.f32.mrb[0].mxu0
  %v2726 = vadd.f32 %v2373, %v2725
  %v2727 = vpop.f32.mrb[0].mxu0
  %v2728 = vadd.f32 %v2375, %v2727
  %2729 = vmatprep.mubr.bf16.mxu0 %v1107
  %2730 = vmatmul.mubr.bf16.gmra.mrb[0].mxu0 %v1106
  %v2731 = vpop.f32.mrb[0].mxu0
  %v2732 = vadd.f32 %v2379, %v2731
  %v2733 = vpop.f32.mrb[0].mxu0
  %v2734 = vadd.f32 %v2381, %v2733
  %v2735 = vpop.f32.mrb[0].mxu0
  %v2736 = vadd.f32 %v2383, %v2735
  %v2737 = vpop.f32.mrb[0].mxu0
  %v2738 = vadd.f32 %v2385, %v2737
  %2739 = vmatprep.mubr.bf16.mxu0 %v1113
  %2740 = vmatmul.mubr.bf16.gmra.mrb[0].mxu0 %v1112
  %v2741 = vpop.f32.mrb[0].mxu0
  %v2742 = vadd.f32 %v2389, %v2741
  %v2743 = vpop.f32.mrb[0].mxu0
  %v2744 = vadd.f32 %v2391, %v2743
  %v2745 = vpop.f32.mrb[0].mxu0
  %v2746 = vadd.f32 %v2393, %v2745
  %v2747 = vpop.f32.mrb[0].mxu0
  %v2748 = vadd.f32 %v2395, %v2747
  %2749 = vmatprep.mubr.bf16.mxu0 %v1119
  %2750 = vmatmul.mubr.bf16.gmra.mrb[0].mxu0 %v1118
  %v2751 = vpop.f32.mrb[0].mxu0
  %v2752 = vadd.f32 %v2399, %v2751
  %v2753 = vpop.f32.mrb[0].mxu0
  %v2754 = vadd.f32 %v2401, %v2753
  %v2755 = vpop.f32.mrb[0].mxu0
  %v2756 = vadd.f32 %v2403, %v2755
  %v2757 = vpop.f32.mrb[0].mxu0
  %v2758 = vadd.f32 %v2405, %v2757
  %2759 = vmatprep.mubr.bf16.mxu0 %v1125
  %2760 = vmatmul.mubr.bf16.gmra.mrb[0].mxu0 %v1124
  %v2761 = vpop.f32.mrb[0].mxu0
  %v2762 = vadd.f32 %v2409, %v2761
  %v2763 = vpop.f32.mrb[0].mxu0
  %v2764 = vadd.f32 %v2411, %v2763
  %v2765 = vpop.f32.mrb[0].mxu0
  %v2766 = vadd.f32 %v2413, %v2765
  %v2767 = vpop.f32.mrb[0].mxu0
  %v2768 = vadd.f32 %v2415, %v2767
  %2769 = vmatprep.mubr.bf16.mxu0 %v1131
  %2770 = vmatmul.mubr.bf16.gmra.mrb[0].mxu0 %v1130
  %v2771 = vpop.f32.mrb[0].mxu0
  %v2772 = vadd.f32 %v2419, %v2771
  %v2773 = vpop.f32.mrb[0].mxu0
  %v2774 = vadd.f32 %v2421, %v2773
  %v2775 = vpop.f32.mrb[0].mxu0
  %v2776 = vadd.f32 %v2423, %v2775
  %v2777 = vpop.f32.mrb[0].mxu0
  %v2778 = vadd.f32 %v2425, %v2777
  %2779 = vmatprep.mubr.bf16.mxu0 %v1137
  %2780 = vmatmul.mubr.bf16.gmra.mrb[0].mxu0 %v1136
  %v2781 = vpop.f32.mrb[0].mxu0
  %v2782 = vadd.f32 %v2429, %v2781
  %v2783 = vpop.f32.mrb[0].mxu0
  %v2784 = vadd.f32 %v2431, %v2783
  %v2785 = vpop.f32.mrb[0].mxu0
  %v2786 = vadd.f32 %v2433, %v2785
  %v2787 = vpop.f32.mrb[0].mxu0
  %v2788 = vadd.f32 %v2435, %v2787
  %2789 = vmatprep.mubr.bf16.mxu0 %v1143
  %2790 = vmatmul.mubr.bf16.gmra.mrb[0].mxu0 %v1142
  %v2791 = vpop.f32.mrb[0].mxu0
  %v2792 = vadd.f32 %v2439, %v2791
  %v2793 = vpop.f32.mrb[0].mxu0
  %v2794 = vadd.f32 %v2441, %v2793
  %v2795 = vpop.f32.mrb[0].mxu0
  %v2796 = vadd.f32 %v2443, %v2795
  %v2797 = vpop.f32.mrb[0].mxu0
  %v2798 = vadd.f32 %v2445, %v2797
  %2799 = vmatprep.mubr.bf16.mxu0 %v1149
  %2800 = vmatmul.mubr.bf16.gmra.mrb[0].mxu0 %v1148
  %v2801 = vpop.f32.mrb[0].mxu0
  %v2802 = vadd.f32 %v2449, %v2801
  %v2803 = vpop.f32.mrb[0].mxu0
  %v2804 = vadd.f32 %v2451, %v2803
  %v2805 = vpop.f32.mrb[0].mxu0
  %v2806 = vadd.f32 %v2453, %v2805
  %v2807 = vpop.f32.mrb[0].mxu0
  %v2808 = vadd.f32 %v2455, %v2807
  %2809 = vmatprep.mubr.bf16.mxu0 %v1155
  %2810 = vmatmul.mubr.bf16.gmra.mrb[0].mxu0 %v1154
  %v2811 = vpop.f32.mrb[0].mxu0
  %v2812 = vadd.f32 %v2459, %v2811
  %v2813 = vpop.f32.mrb[0].mxu0
  %v2814 = vadd.f32 %v2461, %v2813
  %v2815 = vpop.f32.mrb[0].mxu0
  %v2816 = vadd.f32 %v2463, %v2815
  %v2817 = vpop.f32.mrb[0].mxu0
  %v2818 = vadd.f32 %v2465, %v2817
  %2819 = vmatprep.mubr.bf16.mxu0 %v1161
  %2820 = vmatmul.mubr.bf16.gmra.mrb[0].mxu0 %v1160
  %v2821 = vpop.f32.mrb[0].mxu0
  %v2822 = vadd.f32 %v2469, %v2821
  %v2823 = vpop.f32.mrb[0].mxu0
  %v2824 = vadd.f32 %v2471, %v2823
  %v2825 = vpop.f32.mrb[0].mxu0
  %v2826 = vadd.f32 %v2473, %v2825
  %v2827 = vpop.f32.mrb[0].mxu0
  %v2828 = vadd.f32 %v2475, %v2827
  %2829 = vdwg.mxu0
  %2830 = vmatprep.subr.bf16.mxu0 %v1933
  %2831 = vmatpush1.bf16.msra.mxu0 %v1932
  %2832 = vmatprep.subr.bf16.mxu0 %v1936
  %2833 = vmatpush1.bf16.msra.mxu0 %v1935
  %2834 = vmatprep.subr.bf16.mxu0 %v1939
  %2835 = vmatpush1.bf16.msra.mxu0 %v1938
  %2836 = vmatprep.subr.bf16.mxu0 %v1942
  %2837 = vmatpush1.bf16.msra.mxu0 %v1941
  %2838 = vmatprep.subr.bf16.mxu0 %v1945
  %2839 = vmatpush1.bf16.msra.mxu0 %v1944
  %2840 = vmatprep.subr.bf16.mxu0 %v1948
  %2841 = vmatpush1.bf16.msra.mxu0 %v1947
  %2842 = vmatprep.subr.bf16.mxu0 %v1951
  %2843 = vmatpush1.bf16.msra.mxu0 %v1950
  %2844 = vmatprep.subr.bf16.mxu0 %v1954
  %2845 = vmatpush1.bf16.msra.mxu0 %v1953
  %2846 = vmatprep.subr.bf16.mxu0 %v1957
  %2847 = vmatpush1.bf16.msra.mxu0 %v1956
  %2848 = vmatprep.subr.bf16.mxu0 %v1960
  %2849 = vmatpush1.bf16.msra.mxu0 %v1959
  %2850 = vmatprep.subr.bf16.mxu0 %v1963
  %2851 = vmatpush1.bf16.msra.mxu0 %v1962
  %2852 = vmatprep.subr.bf16.mxu0 %v1966
  %2853 = vmatpush1.bf16.msra.mxu0 %v1965
  %2854 = vmatprep.subr.bf16.mxu0 %v1969
  %2855 = vmatpush1.bf16.msra.mxu0 %v1968
  %2856 = vmatprep.subr.bf16.mxu0 %v1972
  %2857 = vmatpush1.bf16.msra.mxu0 %v1971
  %2858 = vmatprep.subr.bf16.mxu0 %v1975
  %2859 = vmatpush1.bf16.msra.mxu0 %v1974
  %2860 = vmatprep.subr.bf16.mxu0 %v1978
  %2861 = vmatpush1.bf16.msra.mxu0 %v1977
  %2862 = vmatprep.mubr.bf16.mxu0 %v977
  %2863 = vmatmul.mubr.bf16.gmra.mrb[0].mxu0 %v976
  %v2864 = vpop.f32.mrb[0].mxu0
  %v2865 = vadd.f32 %v2512, %v2864
  %v2866 = vpop.f32.mrb[0].mxu0
  %v2867 = vadd.f32 %v2514, %v2866
  %v2868 = vpop.f32.mrb[0].mxu0
  %v2869 = vadd.f32 %v2516, %v2868
  %v2870 = vpop.f32.mrb[0].mxu0
  %v2871 = vadd.f32 %v2518, %v2870
  %2872 = vmatprep.mubr.bf16.mxu0 %v983
  %2873 = vmatmul.mubr.bf16.gmra.mrb[0].mxu0 %v982
  %v2874 = vpop.f32.mrb[0].mxu0
  %v2875 = vadd.f32 %v2522, %v2874
  %v2876 = vpop.f32.mrb[0].mxu0
  %v2877 = vadd.f32 %v2524, %v2876
  %v2878 = vpop.f32.mrb[0].mxu0
  %v2879 = vadd.f32 %v2526, %v2878
  %v2880 = vpop.f32.mrb[0].mxu0
  %v2881 = vadd.f32 %v2528, %v2880
  %2882 = vmatprep.mubr.bf16.mxu0 %v989
  %2883 = vmatmul.mubr.bf16.gmra.mrb[0].mxu0 %v988
  %v2884 = vpop.f32.mrb[0].mxu0
  %v2885 = vadd.f32 %v2532, %v2884
  %v2886 = vpop.f32.mrb[0].mxu0
  %v2887 = vadd.f32 %v2534, %v2886
  %v2888 = vpop.f32.mrb[0].mxu0
  %v2889 = vadd.f32 %v2536, %v2888
  %v2890 = vpop.f32.mrb[0].mxu0
  %v2891 = vadd.f32 %v2538, %v2890
  %2892 = vmatprep.mubr.bf16.mxu0 %v995
  %2893 = vmatmul.mubr.bf16.gmra.mrb[0].mxu0 %v994
  %v2894 = vpop.f32.mrb[0].mxu0
  %v2895 = vadd.f32 %v2542, %v2894
  %v2896 = vpop.f32.mrb[0].mxu0
  %v2897 = vadd.f32 %v2544, %v2896
  %v2898 = vpop.f32.mrb[0].mxu0
  %v2899 = vadd.f32 %v2546, %v2898
  %v2900 = vpop.f32.mrb[0].mxu0
  %v2901 = vadd.f32 %v2548, %v2900
  %2902 = vmatprep.mubr.bf16.mxu0 %v1001
  %2903 = vmatmul.mubr.bf16.gmra.mrb[0].mxu0 %v1000
  %v2904 = vpop.f32.mrb[0].mxu0
  %v2905 = vadd.f32 %v2552, %v2904
  %v2906 = vpop.f32.mrb[0].mxu0
  %v2907 = vadd.f32 %v2554, %v2906
  %v2908 = vpop.f32.mrb[0].mxu0
  %v2909 = vadd.f32 %v2556, %v2908
  %v2910 = vpop.f32.mrb[0].mxu0
  %v2911 = vadd.f32 %v2558, %v2910
  %2912 = vmatprep.mubr.bf16.mxu0 %v1007
  %2913 = vmatmul.mubr.bf16.gmra.mrb[0].mxu0 %v1006
  %v2914 = vpop.f32.mrb[0].mxu0
  %v2915 = vadd.f32 %v2562, %v2914
  %v2916 = vpop.f32.mrb[0].mxu0
  %v2917 = vadd.f32 %v2564, %v2916
  %v2918 = vpop.f32.mrb[0].mxu0
  %v2919 = vadd.f32 %v2566, %v2918
  %v2920 = vpop.f32.mrb[0].mxu0
  %v2921 = vadd.f32 %v2568, %v2920
  %2922 = vmatprep.mubr.bf16.mxu0 %v1013
  %2923 = vmatmul.mubr.bf16.gmra.mrb[0].mxu0 %v1012
  %v2924 = vpop.f32.mrb[0].mxu0
  %v2925 = vadd.f32 %v2572, %v2924
  %v2926 = vpop.f32.mrb[0].mxu0
  %v2927 = vadd.f32 %v2574, %v2926
  %v2928 = vpop.f32.mrb[0].mxu0
  %v2929 = vadd.f32 %v2576, %v2928
  %v2930 = vpop.f32.mrb[0].mxu0
  %v2931 = vadd.f32 %v2578, %v2930
  %2932 = vmatprep.mubr.bf16.mxu0 %v1019
  %2933 = vmatmul.mubr.bf16.gmra.mrb[0].mxu0 %v1018
  %v2934 = vpop.f32.mrb[0].mxu0
  %v2935 = vadd.f32 %v2582, %v2934
  %v2936 = vpop.f32.mrb[0].mxu0
  %v2937 = vadd.f32 %v2584, %v2936
  %v2938 = vpop.f32.mrb[0].mxu0
  %v2939 = vadd.f32 %v2586, %v2938
  %v2940 = vpop.f32.mrb[0].mxu0
  %v2941 = vadd.f32 %v2588, %v2940
  %2942 = vmatprep.mubr.bf16.mxu0 %v1025
  %2943 = vmatmul.mubr.bf16.gmra.mrb[0].mxu0 %v1024
  %v2944 = vpop.f32.mrb[0].mxu0
  %v2945 = vadd.f32 %v2592, %v2944
  %v2946 = vpop.f32.mrb[0].mxu0
  %v2947 = vadd.f32 %v2594, %v2946
  %v2948 = vpop.f32.mrb[0].mxu0
  %v2949 = vadd.f32 %v2596, %v2948
  %v2950 = vpop.f32.mrb[0].mxu0
  %v2951 = vadd.f32 %v2598, %v2950
  %2952 = vmatprep.mubr.bf16.mxu0 %v1031
  %2953 = vmatmul.mubr.bf16.gmra.mrb[0].mxu0 %v1030
  %v2954 = vpop.f32.mrb[0].mxu0
  %v2955 = vadd.f32 %v2602, %v2954
  %v2956 = vpop.f32.mrb[0].mxu0
  %v2957 = vadd.f32 %v2604, %v2956
  %v2958 = vpop.f32.mrb[0].mxu0
  %v2959 = vadd.f32 %v2606, %v2958
  %v2960 = vpop.f32.mrb[0].mxu0
  %v2961 = vadd.f32 %v2608, %v2960
  %2962 = vmatprep.mubr.bf16.mxu0 %v1037
  %2963 = vmatmul.mubr.bf16.gmra.mrb[0].mxu0 %v1036
  %v2964 = vpop.f32.mrb[0].mxu0
  %v2965 = vadd.f32 %v2612, %v2964
  %v2966 = vpop.f32.mrb[0].mxu0
  %v2967 = vadd.f32 %v2614, %v2966
  %v2968 = vpop.f32.mrb[0].mxu0
  %v2969 = vadd.f32 %v2616, %v2968
  %v2970 = vpop.f32.mrb[0].mxu0
  %v2971 = vadd.f32 %v2618, %v2970
  %2972 = vmatprep.mubr.bf16.mxu0 %v1043
  %2973 = vmatmul.mubr.bf16.gmra.mrb[0].mxu0 %v1042
  %v2974 = vpop.f32.mrb[0].mxu0
  %v2975 = vadd.f32 %v2622, %v2974
  %v2976 = vpop.f32.mrb[0].mxu0
  %v2977 = vadd.f32 %v2624, %v2976
  %v2978 = vpop.f32.mrb[0].mxu0
  %v2979 = vadd.f32 %v2626, %v2978
  %v2980 = vpop.f32.mrb[0].mxu0
  %v2981 = vadd.f32 %v2628, %v2980
  %2982 = vmatprep.mubr.bf16.mxu0 %v1049
  %2983 = vmatmul.mubr.bf16.gmra.mrb[0].mxu0 %v1048
  %v2984 = vpop.f32.mrb[0].mxu0
  %v2985 = vadd.f32 %v2632, %v2984
  %v2986 = vpop.f32.mrb[0].mxu0
  %v2987 = vadd.f32 %v2634, %v2986
  %v2988 = vpop.f32.mrb[0].mxu0
  %v2989 = vadd.f32 %v2636, %v2988
  %v2990 = vpop.f32.mrb[0].mxu0
  %v2991 = vadd.f32 %v2638, %v2990
  %2992 = vmatprep.mubr.bf16.mxu0 %v1055
  %2993 = vmatmul.mubr.bf16.gmra.mrb[0].mxu0 %v1054
  %v2994 = vpop.f32.mrb[0].mxu0
  %v2995 = vadd.f32 %v2642, %v2994
  %v2996 = vpop.f32.mrb[0].mxu0
  %v2997 = vadd.f32 %v2644, %v2996
  %v2998 = vpop.f32.mrb[0].mxu0
  %v2999 = vadd.f32 %v2646, %v2998
  %v3000 = vpop.f32.mrb[0].mxu0
  %v3001 = vadd.f32 %v2648, %v3000
  %3002 = vmatprep.mubr.bf16.mxu0 %v1061
  %3003 = vmatmul.mubr.bf16.gmra.mrb[0].mxu0 %v1060
  %v3004 = vpop.f32.mrb[0].mxu0
  %v3005 = vadd.f32 %v2652, %v3004
  %v3006 = vpop.f32.mrb[0].mxu0
  %v3007 = vadd.f32 %v2654, %v3006
  %v3008 = vpop.f32.mrb[0].mxu0
  %v3009 = vadd.f32 %v2656, %v3008
  %v3010 = vpop.f32.mrb[0].mxu0
  %v3011 = vadd.f32 %v2658, %v3010
  %3012 = vmatprep.mubr.bf16.mxu0 %v1067
  %3013 = vmatmul.mubr.bf16.gmra.mrb[0].mxu0 %v1066
  %v3014 = vpop.f32.mrb[0].mxu0
  %v3015 = vadd.f32 %v2662, %v3014
  %v3016 = vpop.f32.mrb[0].mxu0
  %v3017 = vadd.f32 %v2664, %v3016
  %v3018 = vpop.f32.mrb[0].mxu0
  %v3019 = vadd.f32 %v2666, %v3018
  %v3020 = vpop.f32.mrb[0].mxu0
  %v3021 = vadd.f32 %v2668, %v3020
  %3022 = vmatprep.mubr.bf16.mxu0 %v1073
  %3023 = vmatmul.mubr.bf16.gmra.mrb[0].mxu0 %v1072
  %v3024 = vpop.f32.mrb[0].mxu0
  %v3025 = vadd.f32 %v2672, %v3024
  %v3026 = vpop.f32.mrb[0].mxu0
  %v3027 = vadd.f32 %v2674, %v3026
  %v3028 = vpop.f32.mrb[0].mxu0
  %v3029 = vadd.f32 %v2676, %v3028
  %v3030 = vpop.f32.mrb[0].mxu0
  %v3031 = vadd.f32 %v2678, %v3030
  %3032 = vmatprep.mubr.bf16.mxu0 %v1079
  %3033 = vmatmul.mubr.bf16.gmra.mrb[0].mxu0 %v1078
  %v3034 = vpop.f32.mrb[0].mxu0
  %v3035 = vadd.f32 %v2682, %v3034
  %v3036 = vpop.f32.mrb[0].mxu0
  %v3037 = vadd.f32 %v2684, %v3036
  %v3038 = vpop.f32.mrb[0].mxu0
  %v3039 = vadd.f32 %v2686, %v3038
  %v3040 = vpop.f32.mrb[0].mxu0
  %v3041 = vadd.f32 %v2688, %v3040
  %3042 = vmatprep.mubr.bf16.mxu0 %v1085
  %3043 = vmatmul.mubr.bf16.gmra.mrb[0].mxu0 %v1084
  %v3044 = vpop.f32.mrb[0].mxu0
  %v3045 = vadd.f32 %v2692, %v3044
  %v3046 = vpop.f32.mrb[0].mxu0
  %v3047 = vadd.f32 %v2694, %v3046
  %v3048 = vpop.f32.mrb[0].mxu0
  %v3049 = vadd.f32 %v2696, %v3048
  %v3050 = vpop.f32.mrb[0].mxu0
  %v3051 = vadd.f32 %v2698, %v3050
  %3052 = vmatprep.mubr.bf16.mxu0 %v1091
  %3053 = vmatmul.mubr.bf16.gmra.mrb[0].mxu0 %v1090
  %v3054 = vpop.f32.mrb[0].mxu0
  %v3055 = vadd.f32 %v2702, %v3054
  %v3056 = vpop.f32.mrb[0].mxu0
  %v3057 = vadd.f32 %v2704, %v3056
  %v3058 = vpop.f32.mrb[0].mxu0
  %v3059 = vadd.f32 %v2706, %v3058
  %v3060 = vpop.f32.mrb[0].mxu0
  %v3061 = vadd.f32 %v2708, %v3060
  %3062 = vmatprep.mubr.bf16.mxu0 %v1097
  %3063 = vmatmul.mubr.bf16.gmra.mrb[0].mxu0 %v1096
  %v3064 = vpop.f32.mrb[0].mxu0
  %v3065 = vadd.f32 %v2712, %v3064
  %v3066 = vpop.f32.mrb[0].mxu0
  %v3067 = vadd.f32 %v2714, %v3066
  %v3068 = vpop.f32.mrb[0].mxu0
  %v3069 = vadd.f32 %v2716, %v3068
  %v3070 = vpop.f32.mrb[0].mxu0
  %v3071 = vadd.f32 %v2718, %v3070
  %3072 = vmatprep.mubr.bf16.mxu0 %v1103
  %3073 = vmatmul.mubr.bf16.gmra.mrb[0].mxu0 %v1102
  %v3074 = vpop.f32.mrb[0].mxu0
  %v3075 = vadd.f32 %v2722, %v3074
  %v3076 = vpop.f32.mrb[0].mxu0
  %v3077 = vadd.f32 %v2724, %v3076
  %v3078 = vpop.f32.mrb[0].mxu0
  %v3079 = vadd.f32 %v2726, %v3078
  %v3080 = vpop.f32.mrb[0].mxu0
  %v3081 = vadd.f32 %v2728, %v3080
  %3082 = vmatprep.mubr.bf16.mxu0 %v1109
  %3083 = vmatmul.mubr.bf16.gmra.mrb[0].mxu0 %v1108
  %v3084 = vpop.f32.mrb[0].mxu0
  %v3085 = vadd.f32 %v2732, %v3084
  %v3086 = vpop.f32.mrb[0].mxu0
  %v3087 = vadd.f32 %v2734, %v3086
  %v3088 = vpop.f32.mrb[0].mxu0
  %v3089 = vadd.f32 %v2736, %v3088
  %v3090 = vpop.f32.mrb[0].mxu0
  %v3091 = vadd.f32 %v2738, %v3090
  %3092 = vmatprep.mubr.bf16.mxu0 %v1115
  %3093 = vmatmul.mubr.bf16.gmra.mrb[0].mxu0 %v1114
  %v3094 = vpop.f32.mrb[0].mxu0
  %v3095 = vadd.f32 %v2742, %v3094
  %v3096 = vpop.f32.mrb[0].mxu0
  %v3097 = vadd.f32 %v2744, %v3096
  %v3098 = vpop.f32.mrb[0].mxu0
  %v3099 = vadd.f32 %v2746, %v3098
  %v3100 = vpop.f32.mrb[0].mxu0
  %v3101 = vadd.f32 %v2748, %v3100
  %3102 = vmatprep.mubr.bf16.mxu0 %v1121
  %3103 = vmatmul.mubr.bf16.gmra.mrb[0].mxu0 %v1120
  %v3104 = vpop.f32.mrb[0].mxu0
  %v3105 = vadd.f32 %v2752, %v3104
  %v3106 = vpop.f32.mrb[0].mxu0
  %v3107 = vadd.f32 %v2754, %v3106
  %v3108 = vpop.f32.mrb[0].mxu0
  %v3109 = vadd.f32 %v2756, %v3108
  %v3110 = vpop.f32.mrb[0].mxu0
  %v3111 = vadd.f32 %v2758, %v3110
  %3112 = vmatprep.mubr.bf16.mxu0 %v1127
  %3113 = vmatmul.mubr.bf16.gmra.mrb[0].mxu0 %v1126
  %v3114 = vpop.f32.mrb[0].mxu0
  %v3115 = vadd.f32 %v2762, %v3114
  %v3116 = vpop.f32.mrb[0].mxu0
  %v3117 = vadd.f32 %v2764, %v3116
  %v3118 = vpop.f32.mrb[0].mxu0
  %v3119 = vadd.f32 %v2766, %v3118
  %v3120 = vpop.f32.mrb[0].mxu0
  %v3121 = vadd.f32 %v2768, %v3120
  %3122 = vmatprep.mubr.bf16.mxu0 %v1133
  %3123 = vmatmul.mubr.bf16.gmra.mrb[0].mxu0 %v1132
  %v3124 = vpop.f32.mrb[0].mxu0
  %v3125 = vadd.f32 %v2772, %v3124
  %v3126 = vpop.f32.mrb[0].mxu0
  %v3127 = vadd.f32 %v2774, %v3126
  %v3128 = vpop.f32.mrb[0].mxu0
  %v3129 = vadd.f32 %v2776, %v3128
  %v3130 = vpop.f32.mrb[0].mxu0
  %v3131 = vadd.f32 %v2778, %v3130
  %3132 = vmatprep.mubr.bf16.mxu0 %v1139
  %3133 = vmatmul.mubr.bf16.gmra.mrb[0].mxu0 %v1138
  %v3134 = vpop.f32.mrb[0].mxu0
  %v3135 = vadd.f32 %v2782, %v3134
  %v3136 = vpop.f32.mrb[0].mxu0
  %v3137 = vadd.f32 %v2784, %v3136
  %v3138 = vpop.f32.mrb[0].mxu0
  %v3139 = vadd.f32 %v2786, %v3138
  %v3140 = vpop.f32.mrb[0].mxu0
  %v3141 = vadd.f32 %v2788, %v3140
  %3142 = vmatprep.mubr.bf16.mxu0 %v1145
  %3143 = vmatmul.mubr.bf16.gmra.mrb[0].mxu0 %v1144
  %v3144 = vpop.f32.mrb[0].mxu0
  %v3145 = vadd.f32 %v2792, %v3144
  %v3146 = vpop.f32.mrb[0].mxu0
  %v3147 = vadd.f32 %v2794, %v3146
  %v3148 = vpop.f32.mrb[0].mxu0
  %v3149 = vadd.f32 %v2796, %v3148
  %v3150 = vpop.f32.mrb[0].mxu0
  %v3151 = vadd.f32 %v2798, %v3150
  %3152 = vmatprep.mubr.bf16.mxu0 %v1151
  %3153 = vmatmul.mubr.bf16.gmra.mrb[0].mxu0 %v1150
  %v3154 = vpop.f32.mrb[0].mxu0
  %v3155 = vadd.f32 %v2802, %v3154
  %v3156 = vpop.f32.mrb[0].mxu0
  %v3157 = vadd.f32 %v2804, %v3156
  %v3158 = vpop.f32.mrb[0].mxu0
  %v3159 = vadd.f32 %v2806, %v3158
  %v3160 = vpop.f32.mrb[0].mxu0
  %v3161 = vadd.f32 %v2808, %v3160
  %3162 = vmatprep.mubr.bf16.mxu0 %v1157
  %3163 = vmatmul.mubr.bf16.gmra.mrb[0].mxu0 %v1156
  %v3164 = vpop.f32.mrb[0].mxu0
  %v3165 = vadd.f32 %v2812, %v3164
  %v3166 = vpop.f32.mrb[0].mxu0
  %v3167 = vadd.f32 %v2814, %v3166
  %v3168 = vpop.f32.mrb[0].mxu0
  %v3169 = vadd.f32 %v2816, %v3168
  %v3170 = vpop.f32.mrb[0].mxu0
  %v3171 = vadd.f32 %v2818, %v3170
  %3172 = vmatprep.mubr.bf16.mxu0 %v1163
  %3173 = vmatmul.mubr.bf16.gmra.mrb[0].mxu0 %v1162
  %v3174 = vpop.f32.mrb[0].mxu0
  %v3175 = vadd.f32 %v2822, %v3174
  %v3176 = vpop.f32.mrb[0].mxu0
  %v3177 = vadd.f32 %v2824, %v3176
  %v3178 = vpop.f32.mrb[0].mxu0
  %v3179 = vadd.f32 %v2826, %v3178
  %v3180 = vpop.f32.mrb[0].mxu0
  %v3181 = vadd.f32 %v2828, %v3180
  %3182 = vdwg.mxu0
  %3183 = vmatprep.subr.bf16.mxu0 0
  %3184 = vmatpush1.bf16.msra.mxu0 %v1838
  %3185 = vmatprep.subr.bf16.mxu0 0
  %3186 = vmatpush1.bf16.msra.mxu0 %v1841
  %3187 = vmatprep.subr.bf16.mxu0 0
  %3188 = vmatpush1.bf16.msra.mxu0 %v1844
  %3189 = vmatprep.subr.bf16.mxu0 0
  %3190 = vmatpush1.bf16.msra.mxu0 %v1847
  %3191 = vmatprep.subr.bf16.mxu0 0
  %3192 = vmatpush1.bf16.msra.mxu0 %v1850
  %3193 = vmatprep.subr.bf16.mxu0 0
  %3194 = vmatpush1.bf16.msra.mxu0 %v1853
  %3195 = vmatprep.subr.bf16.mxu0 0
  %3196 = vmatpush1.bf16.msra.mxu0 %v1856
  %3197 = vmatprep.subr.bf16.mxu0 0
  %3198 = vmatpush1.bf16.msra.mxu0 %v1859
  %3199 = vmatprep.subr.bf16.mxu0 0
  %3200 = vmatpush1.bf16.msra.mxu0 %v1862
  %3201 = vmatprep.subr.bf16.mxu0 0
  %3202 = vmatpush1.bf16.msra.mxu0 %v1865
  %3203 = vmatprep.subr.bf16.mxu0 0
  %3204 = vmatpush1.bf16.msra.mxu0 %v1868
  %3205 = vmatprep.subr.bf16.mxu0 0
  %3206 = vmatpush1.bf16.msra.mxu0 %v1871
  %3207 = vmatprep.subr.bf16.mxu0 0
  %3208 = vmatpush1.bf16.msra.mxu0 %v1874
  %3209 = vmatprep.subr.bf16.mxu0 0
  %3210 = vmatpush1.bf16.msra.mxu0 %v1877
  %3211 = vmatprep.subr.bf16.mxu0 0
  %3212 = vmatpush1.bf16.msra.mxu0 %v1880
  %3213 = vmatprep.subr.bf16.mxu0 0
  %3214 = vmatpush1.bf16.msra.mxu0 %v1883
  %3215 = vmatprep.mubr.bf16.mxu0 %v973
  %3216 = vmatmul.mubr.bf16.gmra.mrb[0].mxu0 %v972
  %v3217 = vpop.f32.mrb[0].mxu0
  %v3218 = vadd.f32 0.0, %v3217
  %v3219 = vpop.f32.mrb[0].mxu0
  %v3220 = vpop.f32.mrb[0].mxu0
  %v3221 = vadd.f32 0.0, %v3220
  %v3222 = vpop.f32.mrb[0].mxu0
  %3223 = vmatprep.mubr.bf16.mxu0 %v979
  %3224 = vmatmul.mubr.bf16.gmra.mrb[0].mxu0 %v978
  %v3225 = vpop.f32.mrb[0].mxu0
  %v3226 = vadd.f32 0.0, %v3225
  %v3227 = vpop.f32.mrb[0].mxu0
  %v3228 = vpop.f32.mrb[0].mxu0
  %v3229 = vadd.f32 0.0, %v3228
  %v3230 = vpop.f32.mrb[0].mxu0
  %3231 = vmatprep.mubr.bf16.mxu0 %v985
  %3232 = vmatmul.mubr.bf16.gmra.mrb[0].mxu0 %v984
  %v3233 = vpop.f32.mrb[0].mxu0
  %v3234 = vadd.f32 0.0, %v3233
  %v3235 = vpop.f32.mrb[0].mxu0
  %v3236 = vpop.f32.mrb[0].mxu0
  %v3237 = vadd.f32 0.0, %v3236
  %v3238 = vpop.f32.mrb[0].mxu0
  %3239 = vmatprep.mubr.bf16.mxu0 %v991
  %3240 = vmatmul.mubr.bf16.gmra.mrb[0].mxu0 %v990
  %v3241 = vpop.f32.mrb[0].mxu0
  %v3242 = vadd.f32 0.0, %v3241
  %v3243 = vpop.f32.mrb[0].mxu0
  %v3244 = vpop.f32.mrb[0].mxu0
  %v3245 = vadd.f32 0.0, %v3244
  %v3246 = vpop.f32.mrb[0].mxu0
  %3247 = vmatprep.mubr.bf16.mxu0 %v997
  %3248 = vmatmul.mubr.bf16.gmra.mrb[0].mxu0 %v996
  %v3249 = vpop.f32.mrb[0].mxu0
  %v3250 = vadd.f32 0.0, %v3249
  %v3251 = vpop.f32.mrb[0].mxu0
  %v3252 = vpop.f32.mrb[0].mxu0
  %v3253 = vadd.f32 0.0, %v3252
  %v3254 = vpop.f32.mrb[0].mxu0
  %3255 = vmatprep.mubr.bf16.mxu0 %v1003
  %3256 = vmatmul.mubr.bf16.gmra.mrb[0].mxu0 %v1002
  %v3257 = vpop.f32.mrb[0].mxu0
  %v3258 = vadd.f32 0.0, %v3257
  %v3259 = vpop.f32.mrb[0].mxu0
  %v3260 = vpop.f32.mrb[0].mxu0
  %v3261 = vadd.f32 0.0, %v3260
  %v3262 = vpop.f32.mrb[0].mxu0
  %3263 = vmatprep.mubr.bf16.mxu0 %v1009
  %3264 = vmatmul.mubr.bf16.gmra.mrb[0].mxu0 %v1008
  %v3265 = vpop.f32.mrb[0].mxu0
  %v3266 = vadd.f32 0.0, %v3265
  %v3267 = vpop.f32.mrb[0].mxu0
  %v3268 = vpop.f32.mrb[0].mxu0
  %v3269 = vadd.f32 0.0, %v3268
  %v3270 = vpop.f32.mrb[0].mxu0
  %3271 = vmatprep.mubr.bf16.mxu0 %v1015
  %3272 = vmatmul.mubr.bf16.gmra.mrb[0].mxu0 %v1014
  %v3273 = vpop.f32.mrb[0].mxu0
  %v3274 = vadd.f32 0.0, %v3273
  %v3275 = vpop.f32.mrb[0].mxu0
  %v3276 = vpop.f32.mrb[0].mxu0
  %v3277 = vadd.f32 0.0, %v3276
  %v3278 = vpop.f32.mrb[0].mxu0
  %3279 = vmatprep.mubr.bf16.mxu0 %v1021
  %3280 = vmatmul.mubr.bf16.gmra.mrb[0].mxu0 %v1020
  %v3281 = vpop.f32.mrb[0].mxu0
  %v3282 = vadd.f32 0.0, %v3281
  %v3283 = vpop.f32.mrb[0].mxu0
  %v3284 = vpop.f32.mrb[0].mxu0
  %v3285 = vadd.f32 0.0, %v3284
  %v3286 = vpop.f32.mrb[0].mxu0
  %3287 = vmatprep.mubr.bf16.mxu0 %v1027
  %3288 = vmatmul.mubr.bf16.gmra.mrb[0].mxu0 %v1026
  %v3289 = vpop.f32.mrb[0].mxu0
  %v3290 = vadd.f32 0.0, %v3289
  %v3291 = vpop.f32.mrb[0].mxu0
  %v3292 = vpop.f32.mrb[0].mxu0
  %v3293 = vadd.f32 0.0, %v3292
  %v3294 = vpop.f32.mrb[0].mxu0
  %3295 = vmatprep.mubr.bf16.mxu0 %v1033
  %3296 = vmatmul.mubr.bf16.gmra.mrb[0].mxu0 %v1032
  %v3297 = vpop.f32.mrb[0].mxu0
  %v3298 = vadd.f32 0.0, %v3297
  %v3299 = vpop.f32.mrb[0].mxu0
  %v3300 = vpop.f32.mrb[0].mxu0
  %v3301 = vadd.f32 0.0, %v3300
  %v3302 = vpop.f32.mrb[0].mxu0
  %3303 = vmatprep.mubr.bf16.mxu0 %v1039
  %3304 = vmatmul.mubr.bf16.gmra.mrb[0].mxu0 %v1038
  %v3305 = vpop.f32.mrb[0].mxu0
  %v3306 = vadd.f32 0.0, %v3305
  %v3307 = vpop.f32.mrb[0].mxu0
  %v3308 = vpop.f32.mrb[0].mxu0
  %v3309 = vadd.f32 0.0, %v3308
  %v3310 = vpop.f32.mrb[0].mxu0
  %3311 = vmatprep.mubr.bf16.mxu0 %v1045
  %3312 = vmatmul.mubr.bf16.gmra.mrb[0].mxu0 %v1044
  %v3313 = vpop.f32.mrb[0].mxu0
  %v3314 = vadd.f32 0.0, %v3313
  %v3315 = vpop.f32.mrb[0].mxu0
  %v3316 = vpop.f32.mrb[0].mxu0
  %v3317 = vadd.f32 0.0, %v3316
  %v3318 = vpop.f32.mrb[0].mxu0
  %3319 = vmatprep.mubr.bf16.mxu0 %v1051
  %3320 = vmatmul.mubr.bf16.gmra.mrb[0].mxu0 %v1050
  %v3321 = vpop.f32.mrb[0].mxu0
  %v3322 = vadd.f32 0.0, %v3321
  %v3323 = vpop.f32.mrb[0].mxu0
  %v3324 = vpop.f32.mrb[0].mxu0
  %v3325 = vadd.f32 0.0, %v3324
  %v3326 = vpop.f32.mrb[0].mxu0
  %3327 = vmatprep.mubr.bf16.mxu0 %v1057
  %3328 = vmatmul.mubr.bf16.gmra.mrb[0].mxu0 %v1056
  %v3329 = vpop.f32.mrb[0].mxu0
  %v3330 = vadd.f32 0.0, %v3329
  %v3331 = vpop.f32.mrb[0].mxu0
  %v3332 = vpop.f32.mrb[0].mxu0
  %v3333 = vadd.f32 0.0, %v3332
  %v3334 = vpop.f32.mrb[0].mxu0
  %3335 = vmatprep.mubr.bf16.mxu0 %v1063
  %3336 = vmatmul.mubr.bf16.gmra.mrb[0].mxu0 %v1062
  %v3337 = vpop.f32.mrb[0].mxu0
  %v3338 = vadd.f32 0.0, %v3337
  %v3339 = vpop.f32.mrb[0].mxu0
  %v3340 = vpop.f32.mrb[0].mxu0
  %v3341 = vadd.f32 0.0, %v3340
  %v3342 = vpop.f32.mrb[0].mxu0
  %3343 = vmatprep.mubr.bf16.mxu0 %v1069
  %3344 = vmatmul.mubr.bf16.gmra.mrb[0].mxu0 %v1068
  %v3345 = vpop.f32.mrb[0].mxu0
  %v3346 = vadd.f32 0.0, %v3345
  %v3347 = vpop.f32.mrb[0].mxu0
  %v3348 = vpop.f32.mrb[0].mxu0
  %v3349 = vadd.f32 0.0, %v3348
  %v3350 = vpop.f32.mrb[0].mxu0
  %3351 = vmatprep.mubr.bf16.mxu0 %v1075
  %3352 = vmatmul.mubr.bf16.gmra.mrb[0].mxu0 %v1074
  %v3353 = vpop.f32.mrb[0].mxu0
  %v3354 = vadd.f32 0.0, %v3353
  %v3355 = vpop.f32.mrb[0].mxu0
  %v3356 = vpop.f32.mrb[0].mxu0
  %v3357 = vadd.f32 0.0, %v3356
  %v3358 = vpop.f32.mrb[0].mxu0
  %3359 = vmatprep.mubr.bf16.mxu0 %v1081
  %3360 = vmatmul.mubr.bf16.gmra.mrb[0].mxu0 %v1080
  %v3361 = vpop.f32.mrb[0].mxu0
  %v3362 = vadd.f32 0.0, %v3361
  %v3363 = vpop.f32.mrb[0].mxu0
  %v3364 = vpop.f32.mrb[0].mxu0
  %v3365 = vadd.f32 0.0, %v3364
  %v3366 = vpop.f32.mrb[0].mxu0
  %3367 = vmatprep.mubr.bf16.mxu0 %v1087
  %3368 = vmatmul.mubr.bf16.gmra.mrb[0].mxu0 %v1086
  %v3369 = vpop.f32.mrb[0].mxu0
  %v3370 = vadd.f32 0.0, %v3369
  %v3371 = vpop.f32.mrb[0].mxu0
  %v3372 = vpop.f32.mrb[0].mxu0
  %v3373 = vadd.f32 0.0, %v3372
  %v3374 = vpop.f32.mrb[0].mxu0
  %3375 = vmatprep.mubr.bf16.mxu0 %v1093
  %3376 = vmatmul.mubr.bf16.gmra.mrb[0].mxu0 %v1092
  %v3377 = vpop.f32.mrb[0].mxu0
  %v3378 = vadd.f32 0.0, %v3377
  %v3379 = vpop.f32.mrb[0].mxu0
  %v3380 = vpop.f32.mrb[0].mxu0
  %v3381 = vadd.f32 0.0, %v3380
  %v3382 = vpop.f32.mrb[0].mxu0
  %3383 = vmatprep.mubr.bf16.mxu0 %v1099
  %3384 = vmatmul.mubr.bf16.gmra.mrb[0].mxu0 %v1098
  %v3385 = vpop.f32.mrb[0].mxu0
  %v3386 = vadd.f32 0.0, %v3385
  %v3387 = vpop.f32.mrb[0].mxu0
  %v3388 = vpop.f32.mrb[0].mxu0
  %v3389 = vadd.f32 0.0, %v3388
  %v3390 = vpop.f32.mrb[0].mxu0
  %3391 = vmatprep.mubr.bf16.mxu0 %v1105
  %3392 = vmatmul.mubr.bf16.gmra.mrb[0].mxu0 %v1104
  %v3393 = vpop.f32.mrb[0].mxu0
  %v3394 = vadd.f32 0.0, %v3393
  %v3395 = vpop.f32.mrb[0].mxu0
  %v3396 = vpop.f32.mrb[0].mxu0
  %v3397 = vadd.f32 0.0, %v3396
  %v3398 = vpop.f32.mrb[0].mxu0
  %3399 = vmatprep.mubr.bf16.mxu0 %v1111
  %3400 = vmatmul.mubr.bf16.gmra.mrb[0].mxu0 %v1110
  %v3401 = vpop.f32.mrb[0].mxu0
  %v3402 = vadd.f32 0.0, %v3401
  %v3403 = vpop.f32.mrb[0].mxu0
  %v3404 = vpop.f32.mrb[0].mxu0
  %v3405 = vadd.f32 0.0, %v3404
  %v3406 = vpop.f32.mrb[0].mxu0
  %3407 = vmatprep.mubr.bf16.mxu0 %v1117
  %3408 = vmatmul.mubr.bf16.gmra.mrb[0].mxu0 %v1116
  %v3409 = vpop.f32.mrb[0].mxu0
  %v3410 = vadd.f32 0.0, %v3409
  %v3411 = vpop.f32.mrb[0].mxu0
  %v3412 = vpop.f32.mrb[0].mxu0
  %v3413 = vadd.f32 0.0, %v3412
  %v3414 = vpop.f32.mrb[0].mxu0
  %3415 = vmatprep.mubr.bf16.mxu0 %v1123
  %3416 = vmatmul.mubr.bf16.gmra.mrb[0].mxu0 %v1122
  %v3417 = vpop.f32.mrb[0].mxu0
  %v3418 = vadd.f32 0.0, %v3417
  %v3419 = vpop.f32.mrb[0].mxu0
  %v3420 = vpop.f32.mrb[0].mxu0
  %v3421 = vadd.f32 0.0, %v3420
  %v3422 = vpop.f32.mrb[0].mxu0
  %3423 = vmatprep.mubr.bf16.mxu0 %v1129
  %3424 = vmatmul.mubr.bf16.gmra.mrb[0].mxu0 %v1128
  %v3425 = vpop.f32.mrb[0].mxu0
  %v3426 = vadd.f32 0.0, %v3425
  %v3427 = vpop.f32.mrb[0].mxu0
  %v3428 = vpop.f32.mrb[0].mxu0
  %v3429 = vadd.f32 0.0, %v3428
  %v3430 = vpop.f32.mrb[0].mxu0
  %3431 = vmatprep.mubr.bf16.mxu0 %v1135
  %3432 = vmatmul.mubr.bf16.gmra.mrb[0].mxu0 %v1134
  %v3433 = vpop.f32.mrb[0].mxu0
  %v3434 = vadd.f32 0.0, %v3433
  %v3435 = vpop.f32.mrb[0].mxu0
  %v3436 = vpop.f32.mrb[0].mxu0
  %v3437 = vadd.f32 0.0, %v3436
  %v3438 = vpop.f32.mrb[0].mxu0
  %3439 = vmatprep.mubr.bf16.mxu0 %v1141
  %3440 = vmatmul.mubr.bf16.gmra.mrb[0].mxu0 %v1140
  %v3441 = vpop.f32.mrb[0].mxu0
  %v3442 = vadd.f32 0.0, %v3441
  %v3443 = vpop.f32.mrb[0].mxu0
  %v3444 = vpop.f32.mrb[0].mxu0
  %v3445 = vadd.f32 0.0, %v3444
  %v3446 = vpop.f32.mrb[0].mxu0
  %3447 = vmatprep.mubr.bf16.mxu0 %v1147
  %3448 = vmatmul.mubr.bf16.gmra.mrb[0].mxu0 %v1146
  %v3449 = vpop.f32.mrb[0].mxu0
  %v3450 = vadd.f32 0.0, %v3449
  %v3451 = vpop.f32.mrb[0].mxu0
  %v3452 = vpop.f32.mrb[0].mxu0
  %v3453 = vadd.f32 0.0, %v3452
  %v3454 = vpop.f32.mrb[0].mxu0
  %3455 = vmatprep.mubr.bf16.mxu0 %v1153
  %3456 = vmatmul.mubr.bf16.gmra.mrb[0].mxu0 %v1152
  %v3457 = vpop.f32.mrb[0].mxu0
  %v3458 = vadd.f32 0.0, %v3457
  %v3459 = vpop.f32.mrb[0].mxu0
  %v3460 = vpop.f32.mrb[0].mxu0
  %v3461 = vadd.f32 0.0, %v3460
  %v3462 = vpop.f32.mrb[0].mxu0
  %3463 = vmatprep.mubr.bf16.mxu0 %v1159
  %3464 = vmatmul.mubr.bf16.gmra.mrb[0].mxu0 %v1158
  %v3465 = vpop.f32.mrb[0].mxu0
  %v3466 = vadd.f32 0.0, %v3465
  %v3467 = vpop.f32.mrb[0].mxu0
  %v3468 = vpop.f32.mrb[0].mxu0
  %v3469 = vadd.f32 0.0, %v3468
  %v3470 = vpop.f32.mrb[0].mxu0
  %3471 = vdwg.mxu0
  %3472 = vmatprep.subr.bf16.mxu0 0
  %3473 = vmatpush1.bf16.msra.mxu0 %v1886
  %3474 = vmatprep.subr.bf16.mxu0 0
  %3475 = vmatpush1.bf16.msra.mxu0 %v1889
  %3476 = vmatprep.subr.bf16.mxu0 0
  %3477 = vmatpush1.bf16.msra.mxu0 %v1892
  %3478 = vmatprep.subr.bf16.mxu0 0
  %3479 = vmatpush1.bf16.msra.mxu0 %v1895
  %3480 = vmatprep.subr.bf16.mxu0 0
  %3481 = vmatpush1.bf16.msra.mxu0 %v1898
  %3482 = vmatprep.subr.bf16.mxu0 0
  %3483 = vmatpush1.bf16.msra.mxu0 %v1901
  %3484 = vmatprep.subr.bf16.mxu0 0
  %3485 = vmatpush1.bf16.msra.mxu0 %v1904
  %3486 = vmatprep.subr.bf16.mxu0 0
  %3487 = vmatpush1.bf16.msra.mxu0 %v1907
  %3488 = vmatprep.subr.bf16.mxu0 0
  %3489 = vmatpush1.bf16.msra.mxu0 %v1910
  %3490 = vmatprep.subr.bf16.mxu0 0
  %3491 = vmatpush1.bf16.msra.mxu0 %v1913
  %3492 = vmatprep.subr.bf16.mxu0 0
  %3493 = vmatpush1.bf16.msra.mxu0 %v1916
  %3494 = vmatprep.subr.bf16.mxu0 0
  %3495 = vmatpush1.bf16.msra.mxu0 %v1919
  %3496 = vmatprep.subr.bf16.mxu0 0
  %3497 = vmatpush1.bf16.msra.mxu0 %v1922
  %3498 = vmatprep.subr.bf16.mxu0 0
  %3499 = vmatpush1.bf16.msra.mxu0 %v1925
  %3500 = vmatprep.subr.bf16.mxu0 0
  %3501 = vmatpush1.bf16.msra.mxu0 %v1928
  %3502 = vmatprep.subr.bf16.mxu0 0
  %3503 = vmatpush1.bf16.msra.mxu0 %v1931
  %3504 = vmatprep.mubr.bf16.mxu0 %v975
  %3505 = vmatmul.mubr.bf16.gmra.mrb[0].mxu0 %v974
  %v3506 = vpop.f32.mrb[0].mxu0
  %v3507 = vadd.f32 %v3218, %v3506
  %v3508 = vpop.f32.mrb[0].mxu0
  %v3509 = vpop.f32.mrb[0].mxu0
  %v3510 = vadd.f32 %v3221, %v3509
  %v3511 = vpop.f32.mrb[0].mxu0
  %3512 = vmatprep.mubr.bf16.mxu0 %v981
  %3513 = vmatmul.mubr.bf16.gmra.mrb[0].mxu0 %v980
  %v3514 = vpop.f32.mrb[0].mxu0
  %v3515 = vadd.f32 %v3226, %v3514
  %v3516 = vpop.f32.mrb[0].mxu0
  %v3517 = vpop.f32.mrb[0].mxu0
  %v3518 = vadd.f32 %v3229, %v3517
  %v3519 = vpop.f32.mrb[0].mxu0
  %3520 = vmatprep.mubr.bf16.mxu0 %v987
  %3521 = vmatmul.mubr.bf16.gmra.mrb[0].mxu0 %v986
  %v3522 = vpop.f32.mrb[0].mxu0
  %v3523 = vadd.f32 %v3234, %v3522
  %v3524 = vpop.f32.mrb[0].mxu0
  %v3525 = vpop.f32.mrb[0].mxu0
  %v3526 = vadd.f32 %v3237, %v3525
  %v3527 = vpop.f32.mrb[0].mxu0
  %3528 = vmatprep.mubr.bf16.mxu0 %v993
  %3529 = vmatmul.mubr.bf16.gmra.mrb[0].mxu0 %v992
  %v3530 = vpop.f32.mrb[0].mxu0
  %v3531 = vadd.f32 %v3242, %v3530
  %v3532 = vpop.f32.mrb[0].mxu0
  %v3533 = vpop.f32.mrb[0].mxu0
  %v3534 = vadd.f32 %v3245, %v3533
  %v3535 = vpop.f32.mrb[0].mxu0
  %3536 = vmatprep.mubr.bf16.mxu0 %v999
  %3537 = vmatmul.mubr.bf16.gmra.mrb[0].mxu0 %v998
  %v3538 = vpop.f32.mrb[0].mxu0
  %v3539 = vadd.f32 %v3250, %v3538
  %v3540 = vpop.f32.mrb[0].mxu0
  %v3541 = vpop.f32.mrb[0].mxu0
  %v3542 = vadd.f32 %v3253, %v3541
  %v3543 = vpop.f32.mrb[0].mxu0
  %3544 = vmatprep.mubr.bf16.mxu0 %v1005
  %3545 = vmatmul.mubr.bf16.gmra.mrb[0].mxu0 %v1004
  %v3546 = vpop.f32.mrb[0].mxu0
  %v3547 = vadd.f32 %v3258, %v3546
  %v3548 = vpop.f32.mrb[0].mxu0
  %v3549 = vpop.f32.mrb[0].mxu0
  %v3550 = vadd.f32 %v3261, %v3549
  %v3551 = vpop.f32.mrb[0].mxu0
  %3552 = vmatprep.mubr.bf16.mxu0 %v1011
  %3553 = vmatmul.mubr.bf16.gmra.mrb[0].mxu0 %v1010
  %v3554 = vpop.f32.mrb[0].mxu0
  %v3555 = vadd.f32 %v3266, %v3554
  %v3556 = vpop.f32.mrb[0].mxu0
  %v3557 = vpop.f32.mrb[0].mxu0
  %v3558 = vadd.f32 %v3269, %v3557
  %v3559 = vpop.f32.mrb[0].mxu0
  %3560 = vmatprep.mubr.bf16.mxu0 %v1017
  %3561 = vmatmul.mubr.bf16.gmra.mrb[0].mxu0 %v1016
  %v3562 = vpop.f32.mrb[0].mxu0
  %v3563 = vadd.f32 %v3274, %v3562
  %v3564 = vpop.f32.mrb[0].mxu0
  %v3565 = vpop.f32.mrb[0].mxu0
  %v3566 = vadd.f32 %v3277, %v3565
  %v3567 = vpop.f32.mrb[0].mxu0
  %3568 = vmatprep.mubr.bf16.mxu0 %v1023
  %3569 = vmatmul.mubr.bf16.gmra.mrb[0].mxu0 %v1022
  %v3570 = vpop.f32.mrb[0].mxu0
  %v3571 = vadd.f32 %v3282, %v3570
  %v3572 = vpop.f32.mrb[0].mxu0
  %v3573 = vpop.f32.mrb[0].mxu0
  %v3574 = vadd.f32 %v3285, %v3573
  %v3575 = vpop.f32.mrb[0].mxu0
  %3576 = vmatprep.mubr.bf16.mxu0 %v1029
  %3577 = vmatmul.mubr.bf16.gmra.mrb[0].mxu0 %v1028
  %v3578 = vpop.f32.mrb[0].mxu0
  %v3579 = vadd.f32 %v3290, %v3578
  %v3580 = vpop.f32.mrb[0].mxu0
  %v3581 = vpop.f32.mrb[0].mxu0
  %v3582 = vadd.f32 %v3293, %v3581
  %v3583 = vpop.f32.mrb[0].mxu0
  %3584 = vmatprep.mubr.bf16.mxu0 %v1035
  %3585 = vmatmul.mubr.bf16.gmra.mrb[0].mxu0 %v1034
  %v3586 = vpop.f32.mrb[0].mxu0
  %v3587 = vadd.f32 %v3298, %v3586
  %v3588 = vpop.f32.mrb[0].mxu0
  %v3589 = vpop.f32.mrb[0].mxu0
  %v3590 = vadd.f32 %v3301, %v3589
  %v3591 = vpop.f32.mrb[0].mxu0
  %3592 = vmatprep.mubr.bf16.mxu0 %v1041
  %3593 = vmatmul.mubr.bf16.gmra.mrb[0].mxu0 %v1040
  %v3594 = vpop.f32.mrb[0].mxu0
  %v3595 = vadd.f32 %v3306, %v3594
  %v3596 = vpop.f32.mrb[0].mxu0
  %v3597 = vpop.f32.mrb[0].mxu0
  %v3598 = vadd.f32 %v3309, %v3597
  %v3599 = vpop.f32.mrb[0].mxu0
  %3600 = vmatprep.mubr.bf16.mxu0 %v1047
  %3601 = vmatmul.mubr.bf16.gmra.mrb[0].mxu0 %v1046
  %v3602 = vpop.f32.mrb[0].mxu0
  %v3603 = vadd.f32 %v3314, %v3602
  %v3604 = vpop.f32.mrb[0].mxu0
  %v3605 = vpop.f32.mrb[0].mxu0
  %v3606 = vadd.f32 %v3317, %v3605
  %v3607 = vpop.f32.mrb[0].mxu0
  %3608 = vmatprep.mubr.bf16.mxu0 %v1053
  %3609 = vmatmul.mubr.bf16.gmra.mrb[0].mxu0 %v1052
  %v3610 = vpop.f32.mrb[0].mxu0
  %v3611 = vadd.f32 %v3322, %v3610
  %v3612 = vpop.f32.mrb[0].mxu0
  %v3613 = vpop.f32.mrb[0].mxu0
  %v3614 = vadd.f32 %v3325, %v3613
  %v3615 = vpop.f32.mrb[0].mxu0
  %3616 = vmatprep.mubr.bf16.mxu0 %v1059
  %3617 = vmatmul.mubr.bf16.gmra.mrb[0].mxu0 %v1058
  %v3618 = vpop.f32.mrb[0].mxu0
  %v3619 = vadd.f32 %v3330, %v3618
  %v3620 = vpop.f32.mrb[0].mxu0
  %v3621 = vpop.f32.mrb[0].mxu0
  %v3622 = vadd.f32 %v3333, %v3621
  %v3623 = vpop.f32.mrb[0].mxu0
  %3624 = vmatprep.mubr.bf16.mxu0 %v1065
  %3625 = vmatmul.mubr.bf16.gmra.mrb[0].mxu0 %v1064
  %v3626 = vpop.f32.mrb[0].mxu0
  %v3627 = vadd.f32 %v3338, %v3626
  %v3628 = vpop.f32.mrb[0].mxu0
  %v3629 = vpop.f32.mrb[0].mxu0
  %v3630 = vadd.f32 %v3341, %v3629
  %v3631 = vpop.f32.mrb[0].mxu0
  %3632 = vmatprep.mubr.bf16.mxu0 %v1071
  %3633 = vmatmul.mubr.bf16.gmra.mrb[0].mxu0 %v1070
  %v3634 = vpop.f32.mrb[0].mxu0
  %v3635 = vadd.f32 %v3346, %v3634
  %v3636 = vpop.f32.mrb[0].mxu0
  %v3637 = vpop.f32.mrb[0].mxu0
  %v3638 = vadd.f32 %v3349, %v3637
  %v3639 = vpop.f32.mrb[0].mxu0
  %3640 = vmatprep.mubr.bf16.mxu0 %v1077
  %3641 = vmatmul.mubr.bf16.gmra.mrb[0].mxu0 %v1076
  %v3642 = vpop.f32.mrb[0].mxu0
  %v3643 = vadd.f32 %v3354, %v3642
  %v3644 = vpop.f32.mrb[0].mxu0
  %v3645 = vpop.f32.mrb[0].mxu0
  %v3646 = vadd.f32 %v3357, %v3645
  %v3647 = vpop.f32.mrb[0].mxu0
  %3648 = vmatprep.mubr.bf16.mxu0 %v1083
  %3649 = vmatmul.mubr.bf16.gmra.mrb[0].mxu0 %v1082
  %v3650 = vpop.f32.mrb[0].mxu0
  %v3651 = vadd.f32 %v3362, %v3650
  %v3652 = vpop.f32.mrb[0].mxu0
  %v3653 = vpop.f32.mrb[0].mxu0
  %v3654 = vadd.f32 %v3365, %v3653
  %v3655 = vpop.f32.mrb[0].mxu0
  %3656 = vmatprep.mubr.bf16.mxu0 %v1089
  %3657 = vmatmul.mubr.bf16.gmra.mrb[0].mxu0 %v1088
  %v3658 = vpop.f32.mrb[0].mxu0
  %v3659 = vadd.f32 %v3370, %v3658
  %v3660 = vpop.f32.mrb[0].mxu0
  %v3661 = vpop.f32.mrb[0].mxu0
  %v3662 = vadd.f32 %v3373, %v3661
  %v3663 = vpop.f32.mrb[0].mxu0
  %3664 = vmatprep.mubr.bf16.mxu0 %v1095
  %3665 = vmatmul.mubr.bf16.gmra.mrb[0].mxu0 %v1094
  %v3666 = vpop.f32.mrb[0].mxu0
  %v3667 = vadd.f32 %v3378, %v3666
  %v3668 = vpop.f32.mrb[0].mxu0
  %v3669 = vpop.f32.mrb[0].mxu0
  %v3670 = vadd.f32 %v3381, %v3669
  %v3671 = vpop.f32.mrb[0].mxu0
  %3672 = vmatprep.mubr.bf16.mxu0 %v1101
  %3673 = vmatmul.mubr.bf16.gmra.mrb[0].mxu0 %v1100
  %v3674 = vpop.f32.mrb[0].mxu0
  %v3675 = vadd.f32 %v3386, %v3674
  %v3676 = vpop.f32.mrb[0].mxu0
  %v3677 = vpop.f32.mrb[0].mxu0
  %v3678 = vadd.f32 %v3389, %v3677
  %v3679 = vpop.f32.mrb[0].mxu0
  %3680 = vmatprep.mubr.bf16.mxu0 %v1107
  %3681 = vmatmul.mubr.bf16.gmra.mrb[0].mxu0 %v1106
  %v3682 = vpop.f32.mrb[0].mxu0
  %v3683 = vadd.f32 %v3394, %v3682
  %v3684 = vpop.f32.mrb[0].mxu0
  %v3685 = vpop.f32.mrb[0].mxu0
  %v3686 = vadd.f32 %v3397, %v3685
  %v3687 = vpop.f32.mrb[0].mxu0
  %3688 = vmatprep.mubr.bf16.mxu0 %v1113
  %3689 = vmatmul.mubr.bf16.gmra.mrb[0].mxu0 %v1112
  %v3690 = vpop.f32.mrb[0].mxu0
  %v3691 = vadd.f32 %v3402, %v3690
  %v3692 = vpop.f32.mrb[0].mxu0
  %v3693 = vpop.f32.mrb[0].mxu0
  %v3694 = vadd.f32 %v3405, %v3693
  %v3695 = vpop.f32.mrb[0].mxu0
  %3696 = vmatprep.mubr.bf16.mxu0 %v1119
  %3697 = vmatmul.mubr.bf16.gmra.mrb[0].mxu0 %v1118
  %v3698 = vpop.f32.mrb[0].mxu0
  %v3699 = vadd.f32 %v3410, %v3698
  %v3700 = vpop.f32.mrb[0].mxu0
  %v3701 = vpop.f32.mrb[0].mxu0
  %v3702 = vadd.f32 %v3413, %v3701
  %v3703 = vpop.f32.mrb[0].mxu0
  %3704 = vmatprep.mubr.bf16.mxu0 %v1125
  %3705 = vmatmul.mubr.bf16.gmra.mrb[0].mxu0 %v1124
  %v3706 = vpop.f32.mrb[0].mxu0
  %v3707 = vadd.f32 %v3418, %v3706
  %v3708 = vpop.f32.mrb[0].mxu0
  %v3709 = vpop.f32.mrb[0].mxu0
  %v3710 = vadd.f32 %v3421, %v3709
  %v3711 = vpop.f32.mrb[0].mxu0
  %3712 = vmatprep.mubr.bf16.mxu0 %v1131
  %3713 = vmatmul.mubr.bf16.gmra.mrb[0].mxu0 %v1130
  %v3714 = vpop.f32.mrb[0].mxu0
  %v3715 = vadd.f32 %v3426, %v3714
  %v3716 = vpop.f32.mrb[0].mxu0
  %v3717 = vpop.f32.mrb[0].mxu0
  %v3718 = vadd.f32 %v3429, %v3717
  %v3719 = vpop.f32.mrb[0].mxu0
  %3720 = vmatprep.mubr.bf16.mxu0 %v1137
  %3721 = vmatmul.mubr.bf16.gmra.mrb[0].mxu0 %v1136
  %v3722 = vpop.f32.mrb[0].mxu0
  %v3723 = vadd.f32 %v3434, %v3722
  %v3724 = vpop.f32.mrb[0].mxu0
  %v3725 = vpop.f32.mrb[0].mxu0
  %v3726 = vadd.f32 %v3437, %v3725
  %v3727 = vpop.f32.mrb[0].mxu0
  %3728 = vmatprep.mubr.bf16.mxu0 %v1143
  %3729 = vmatmul.mubr.bf16.gmra.mrb[0].mxu0 %v1142
  %v3730 = vpop.f32.mrb[0].mxu0
  %v3731 = vadd.f32 %v3442, %v3730
  %v3732 = vpop.f32.mrb[0].mxu0
  %v3733 = vpop.f32.mrb[0].mxu0
  %v3734 = vadd.f32 %v3445, %v3733
  %v3735 = vpop.f32.mrb[0].mxu0
  %3736 = vmatprep.mubr.bf16.mxu0 %v1149
  %3737 = vmatmul.mubr.bf16.gmra.mrb[0].mxu0 %v1148
  %v3738 = vpop.f32.mrb[0].mxu0
  %v3739 = vadd.f32 %v3450, %v3738
  %v3740 = vpop.f32.mrb[0].mxu0
  %v3741 = vpop.f32.mrb[0].mxu0
  %v3742 = vadd.f32 %v3453, %v3741
  %v3743 = vpop.f32.mrb[0].mxu0
  %3744 = vmatprep.mubr.bf16.mxu0 %v1155
  %3745 = vmatmul.mubr.bf16.gmra.mrb[0].mxu0 %v1154
  %v3746 = vpop.f32.mrb[0].mxu0
  %v3747 = vadd.f32 %v3458, %v3746
  %v3748 = vpop.f32.mrb[0].mxu0
  %v3749 = vpop.f32.mrb[0].mxu0
  %v3750 = vadd.f32 %v3461, %v3749
  %v3751 = vpop.f32.mrb[0].mxu0
  %3752 = vmatprep.mubr.bf16.mxu0 %v1161
  %3753 = vmatmul.mubr.bf16.gmra.mrb[0].mxu0 %v1160
  %v3754 = vpop.f32.mrb[0].mxu0
  %v3755 = vadd.f32 %v3466, %v3754
  %v3756 = vpop.f32.mrb[0].mxu0
  %v3757 = vpop.f32.mrb[0].mxu0
  %v3758 = vadd.f32 %v3469, %v3757
  %v3759 = vpop.f32.mrb[0].mxu0
  %3760 = vdwg.mxu0
  %3761 = vmatprep.subr.bf16.mxu0 0
  %3762 = vmatpush1.bf16.msra.mxu0 %v1934
  %3763 = vmatprep.subr.bf16.mxu0 0
  %3764 = vmatpush1.bf16.msra.mxu0 %v1937
  %3765 = vmatprep.subr.bf16.mxu0 0
  %3766 = vmatpush1.bf16.msra.mxu0 %v1940
  %3767 = vmatprep.subr.bf16.mxu0 0
  %3768 = vmatpush1.bf16.msra.mxu0 %v1943
  %3769 = vmatprep.subr.bf16.mxu0 0
  %3770 = vmatpush1.bf16.msra.mxu0 %v1946
  %3771 = vmatprep.subr.bf16.mxu0 0
  %3772 = vmatpush1.bf16.msra.mxu0 %v1949
  %3773 = vmatprep.subr.bf16.mxu0 0
  %3774 = vmatpush1.bf16.msra.mxu0 %v1952
  %3775 = vmatprep.subr.bf16.mxu0 0
  %3776 = vmatpush1.bf16.msra.mxu0 %v1955
  %3777 = vmatprep.subr.bf16.mxu0 0
  %3778 = vmatpush1.bf16.msra.mxu0 %v1958
  %3779 = vmatprep.subr.bf16.mxu0 0
  %3780 = vmatpush1.bf16.msra.mxu0 %v1961
  %3781 = vmatprep.subr.bf16.mxu0 0
  %3782 = vmatpush1.bf16.msra.mxu0 %v1964
  %3783 = vmatprep.subr.bf16.mxu0 0
  %3784 = vmatpush1.bf16.msra.mxu0 %v1967
  %3785 = vmatprep.subr.bf16.mxu0 0
  %3786 = vmatpush1.bf16.msra.mxu0 %v1970
  %3787 = vmatprep.subr.bf16.mxu0 0
  %3788 = vmatpush1.bf16.msra.mxu0 %v1973
  %3789 = vmatprep.subr.bf16.mxu0 0
  %3790 = vmatpush1.bf16.msra.mxu0 %v1976
  %3791 = vmatprep.subr.bf16.mxu0 0
  %3792 = vmatpush1.bf16.msra.mxu0 %v1979
  %3793 = vmatprep.mubr.bf16.mxu0 %v977
  %3794 = vmatmul.mubr.bf16.gmra.mrb[0].mxu0 %v976
  %v3795 = vpop.f32.mrb[0].mxu0
  %v3796 = vadd.f32 %v3507, %v3795
  %v3797 = vpop.f32.mrb[0].mxu0
  %v3798 = vpop.f32.mrb[0].mxu0
  %v3799 = vadd.f32 %v3510, %v3798
  %v3800 = vpop.f32.mrb[0].mxu0
  %3801 = vmatprep.mubr.bf16.mxu0 %v983
  %3802 = vmatmul.mubr.bf16.gmra.mrb[0].mxu0 %v982
  %v3803 = vpop.f32.mrb[0].mxu0
  %v3804 = vadd.f32 %v3515, %v3803
  %v3805 = vpop.f32.mrb[0].mxu0
  %v3806 = vpop.f32.mrb[0].mxu0
  %v3807 = vadd.f32 %v3518, %v3806
  %v3808 = vpop.f32.mrb[0].mxu0
  %3809 = vmatprep.mubr.bf16.mxu0 %v989
  %3810 = vmatmul.mubr.bf16.gmra.mrb[0].mxu0 %v988
  %v3811 = vpop.f32.mrb[0].mxu0
  %v3812 = vadd.f32 %v3523, %v3811
  %v3813 = vpop.f32.mrb[0].mxu0
  %v3814 = vpop.f32.mrb[0].mxu0
  %v3815 = vadd.f32 %v3526, %v3814
  %v3816 = vpop.f32.mrb[0].mxu0
  %3817 = vmatprep.mubr.bf16.mxu0 %v995
  %3818 = vmatmul.mubr.bf16.gmra.mrb[0].mxu0 %v994
  %v3819 = vpop.f32.mrb[0].mxu0
  %v3820 = vadd.f32 %v3531, %v3819
  %v3821 = vpop.f32.mrb[0].mxu0
  %v3822 = vpop.f32.mrb[0].mxu0
  %v3823 = vadd.f32 %v3534, %v3822
  %v3824 = vpop.f32.mrb[0].mxu0
  %3825 = vmatprep.mubr.bf16.mxu0 %v1001
  %3826 = vmatmul.mubr.bf16.gmra.mrb[0].mxu0 %v1000
  %v3827 = vpop.f32.mrb[0].mxu0
  %v3828 = vadd.f32 %v3539, %v3827
  %v3829 = vpop.f32.mrb[0].mxu0
  %v3830 = vpop.f32.mrb[0].mxu0
  %v3831 = vadd.f32 %v3542, %v3830
  %v3832 = vpop.f32.mrb[0].mxu0
  %3833 = vmatprep.mubr.bf16.mxu0 %v1007
  %3834 = vmatmul.mubr.bf16.gmra.mrb[0].mxu0 %v1006
  %v3835 = vpop.f32.mrb[0].mxu0
  %v3836 = vadd.f32 %v3547, %v3835
  %v3837 = vpop.f32.mrb[0].mxu0
  %v3838 = vpop.f32.mrb[0].mxu0
  %v3839 = vadd.f32 %v3550, %v3838
  %v3840 = vpop.f32.mrb[0].mxu0
  %3841 = vmatprep.mubr.bf16.mxu0 %v1013
  %3842 = vmatmul.mubr.bf16.gmra.mrb[0].mxu0 %v1012
  %v3843 = vpop.f32.mrb[0].mxu0
  %v3844 = vadd.f32 %v3555, %v3843
  %v3845 = vpop.f32.mrb[0].mxu0
  %v3846 = vpop.f32.mrb[0].mxu0
  %v3847 = vadd.f32 %v3558, %v3846
  %v3848 = vpop.f32.mrb[0].mxu0
  %3849 = vmatprep.mubr.bf16.mxu0 %v1019
  %3850 = vmatmul.mubr.bf16.gmra.mrb[0].mxu0 %v1018
  %v3851 = vpop.f32.mrb[0].mxu0
  %v3852 = vadd.f32 %v3563, %v3851
  %v3853 = vpop.f32.mrb[0].mxu0
  %v3854 = vpop.f32.mrb[0].mxu0
  %v3855 = vadd.f32 %v3566, %v3854
  %v3856 = vpop.f32.mrb[0].mxu0
  %3857 = vmatprep.mubr.bf16.mxu0 %v1025
  %3858 = vmatmul.mubr.bf16.gmra.mrb[0].mxu0 %v1024
  %v3859 = vpop.f32.mrb[0].mxu0
  %v3860 = vadd.f32 %v3571, %v3859
  %v3861 = vpop.f32.mrb[0].mxu0
  %v3862 = vpop.f32.mrb[0].mxu0
  %v3863 = vadd.f32 %v3574, %v3862
  %v3864 = vpop.f32.mrb[0].mxu0
  %3865 = vmatprep.mubr.bf16.mxu0 %v1031
  %3866 = vmatmul.mubr.bf16.gmra.mrb[0].mxu0 %v1030
  %v3867 = vpop.f32.mrb[0].mxu0
  %v3868 = vadd.f32 %v3579, %v3867
  %v3869 = vpop.f32.mrb[0].mxu0
  %v3870 = vpop.f32.mrb[0].mxu0
  %v3871 = vadd.f32 %v3582, %v3870
  %v3872 = vpop.f32.mrb[0].mxu0
  %3873 = vmatprep.mubr.bf16.mxu0 %v1037
  %3874 = vmatmul.mubr.bf16.gmra.mrb[0].mxu0 %v1036
  %v3875 = vpop.f32.mrb[0].mxu0
  %v3876 = vadd.f32 %v3587, %v3875
  %v3877 = vpop.f32.mrb[0].mxu0
  %v3878 = vpop.f32.mrb[0].mxu0
  %v3879 = vadd.f32 %v3590, %v3878
  %v3880 = vpop.f32.mrb[0].mxu0
  %3881 = vmatprep.mubr.bf16.mxu0 %v1043
  %3882 = vmatmul.mubr.bf16.gmra.mrb[0].mxu0 %v1042
  %v3883 = vpop.f32.mrb[0].mxu0
  %v3884 = vadd.f32 %v3595, %v3883
  %v3885 = vpop.f32.mrb[0].mxu0
  %v3886 = vpop.f32.mrb[0].mxu0
  %v3887 = vadd.f32 %v3598, %v3886
  %v3888 = vpop.f32.mrb[0].mxu0
  %3889 = vmatprep.mubr.bf16.mxu0 %v1049
  %3890 = vmatmul.mubr.bf16.gmra.mrb[0].mxu0 %v1048
  %v3891 = vpop.f32.mrb[0].mxu0
  %v3892 = vadd.f32 %v3603, %v3891
  %v3893 = vpop.f32.mrb[0].mxu0
  %v3894 = vpop.f32.mrb[0].mxu0
  %v3895 = vadd.f32 %v3606, %v3894
  %v3896 = vpop.f32.mrb[0].mxu0
  %3897 = vmatprep.mubr.bf16.mxu0 %v1055
  %3898 = vmatmul.mubr.bf16.gmra.mrb[0].mxu0 %v1054
  %v3899 = vpop.f32.mrb[0].mxu0
  %v3900 = vadd.f32 %v3611, %v3899
  %v3901 = vpop.f32.mrb[0].mxu0
  %v3902 = vpop.f32.mrb[0].mxu0
  %v3903 = vadd.f32 %v3614, %v3902
  %v3904 = vpop.f32.mrb[0].mxu0
  %3905 = vmatprep.mubr.bf16.mxu0 %v1061
  %3906 = vmatmul.mubr.bf16.gmra.mrb[0].mxu0 %v1060
  %v3907 = vpop.f32.mrb[0].mxu0
  %v3908 = vadd.f32 %v3619, %v3907
  %v3909 = vpop.f32.mrb[0].mxu0
  %v3910 = vpop.f32.mrb[0].mxu0
  %v3911 = vadd.f32 %v3622, %v3910
  %v3912 = vpop.f32.mrb[0].mxu0
  %3913 = vmatprep.mubr.bf16.mxu0 %v1067
  %3914 = vmatmul.mubr.bf16.gmra.mrb[0].mxu0 %v1066
  %v3915 = vpop.f32.mrb[0].mxu0
  %v3916 = vadd.f32 %v3627, %v3915
  %v3917 = vpop.f32.mrb[0].mxu0
  %v3918 = vpop.f32.mrb[0].mxu0
  %v3919 = vadd.f32 %v3630, %v3918
  %v3920 = vpop.f32.mrb[0].mxu0
  %3921 = vmatprep.mubr.bf16.mxu0 %v1073
  %3922 = vmatmul.mubr.bf16.gmra.mrb[0].mxu0 %v1072
  %v3923 = vpop.f32.mrb[0].mxu0
  %v3924 = vadd.f32 %v3635, %v3923
  %v3925 = vpop.f32.mrb[0].mxu0
  %v3926 = vpop.f32.mrb[0].mxu0
  %v3927 = vadd.f32 %v3638, %v3926
  %v3928 = vpop.f32.mrb[0].mxu0
  %3929 = vmatprep.mubr.bf16.mxu0 %v1079
  %3930 = vmatmul.mubr.bf16.gmra.mrb[0].mxu0 %v1078
  %v3931 = vpop.f32.mrb[0].mxu0
  %v3932 = vadd.f32 %v3643, %v3931
  %v3933 = vpop.f32.mrb[0].mxu0
  %v3934 = vpop.f32.mrb[0].mxu0
  %v3935 = vadd.f32 %v3646, %v3934
  %v3936 = vpop.f32.mrb[0].mxu0
  %3937 = vmatprep.mubr.bf16.mxu0 %v1085
  %3938 = vmatmul.mubr.bf16.gmra.mrb[0].mxu0 %v1084
  %v3939 = vpop.f32.mrb[0].mxu0
  %v3940 = vadd.f32 %v3651, %v3939
  %v3941 = vpop.f32.mrb[0].mxu0
  %v3942 = vpop.f32.mrb[0].mxu0
  %v3943 = vadd.f32 %v3654, %v3942
  %v3944 = vpop.f32.mrb[0].mxu0
  %3945 = vmatprep.mubr.bf16.mxu0 %v1091
  %3946 = vmatmul.mubr.bf16.gmra.mrb[0].mxu0 %v1090
  %v3947 = vpop.f32.mrb[0].mxu0
  %v3948 = vadd.f32 %v3659, %v3947
  %v3949 = vpop.f32.mrb[0].mxu0
  %v3950 = vpop.f32.mrb[0].mxu0
  %v3951 = vadd.f32 %v3662, %v3950
  %v3952 = vpop.f32.mrb[0].mxu0
  %3953 = vmatprep.mubr.bf16.mxu0 %v1097
  %3954 = vmatmul.mubr.bf16.gmra.mrb[0].mxu0 %v1096
  %v3955 = vpop.f32.mrb[0].mxu0
  %v3956 = vadd.f32 %v3667, %v3955
  %v3957 = vpop.f32.mrb[0].mxu0
  %v3958 = vpop.f32.mrb[0].mxu0
  %v3959 = vadd.f32 %v3670, %v3958
  %v3960 = vpop.f32.mrb[0].mxu0
  %3961 = vmatprep.mubr.bf16.mxu0 %v1103
  %3962 = vmatmul.mubr.bf16.gmra.mrb[0].mxu0 %v1102
  %v3963 = vpop.f32.mrb[0].mxu0
  %v3964 = vadd.f32 %v3675, %v3963
  %v3965 = vpop.f32.mrb[0].mxu0
  %v3966 = vpop.f32.mrb[0].mxu0
  %v3967 = vadd.f32 %v3678, %v3966
  %v3968 = vpop.f32.mrb[0].mxu0
  %3969 = vmatprep.mubr.bf16.mxu0 %v1109
  %3970 = vmatmul.mubr.bf16.gmra.mrb[0].mxu0 %v1108
  %v3971 = vpop.f32.mrb[0].mxu0
  %v3972 = vadd.f32 %v3683, %v3971
  %v3973 = vpop.f32.mrb[0].mxu0
  %v3974 = vpop.f32.mrb[0].mxu0
  %v3975 = vadd.f32 %v3686, %v3974
  %v3976 = vpop.f32.mrb[0].mxu0
  %3977 = vmatprep.mubr.bf16.mxu0 %v1115
  %3978 = vmatmul.mubr.bf16.gmra.mrb[0].mxu0 %v1114
  %v3979 = vpop.f32.mrb[0].mxu0
  %v3980 = vadd.f32 %v3691, %v3979
  %v3981 = vpop.f32.mrb[0].mxu0
  %v3982 = vpop.f32.mrb[0].mxu0
  %v3983 = vadd.f32 %v3694, %v3982
  %v3984 = vpop.f32.mrb[0].mxu0
  %3985 = vmatprep.mubr.bf16.mxu0 %v1121
  %3986 = vmatmul.mubr.bf16.gmra.mrb[0].mxu0 %v1120
  %v3987 = vpop.f32.mrb[0].mxu0
  %v3988 = vadd.f32 %v3699, %v3987
  %v3989 = vpop.f32.mrb[0].mxu0
  %v3990 = vpop.f32.mrb[0].mxu0
  %v3991 = vadd.f32 %v3702, %v3990
  %v3992 = vpop.f32.mrb[0].mxu0
  %3993 = vmatprep.mubr.bf16.mxu0 %v1127
  %3994 = vmatmul.mubr.bf16.gmra.mrb[0].mxu0 %v1126
  %v3995 = vpop.f32.mrb[0].mxu0
  %v3996 = vadd.f32 %v3707, %v3995
  %v3997 = vpop.f32.mrb[0].mxu0
  %v3998 = vpop.f32.mrb[0].mxu0
  %v3999 = vadd.f32 %v3710, %v3998
  %v4000 = vpop.f32.mrb[0].mxu0
  %4001 = vmatprep.mubr.bf16.mxu0 %v1133
  %4002 = vmatmul.mubr.bf16.gmra.mrb[0].mxu0 %v1132
  %v4003 = vpop.f32.mrb[0].mxu0
  %v4004 = vadd.f32 %v3715, %v4003
  %v4005 = vpop.f32.mrb[0].mxu0
  %v4006 = vpop.f32.mrb[0].mxu0
  %v4007 = vadd.f32 %v3718, %v4006
  %v4008 = vpop.f32.mrb[0].mxu0
  %4009 = vmatprep.mubr.bf16.mxu0 %v1139
  %4010 = vmatmul.mubr.bf16.gmra.mrb[0].mxu0 %v1138
  %v4011 = vpop.f32.mrb[0].mxu0
  %v4012 = vadd.f32 %v3723, %v4011
  %v4013 = vpop.f32.mrb[0].mxu0
  %v4014 = vpop.f32.mrb[0].mxu0
  %v4015 = vadd.f32 %v3726, %v4014
  %v4016 = vpop.f32.mrb[0].mxu0
  %4017 = vmatprep.mubr.bf16.mxu0 %v1145
  %4018 = vmatmul.mubr.bf16.gmra.mrb[0].mxu0 %v1144
  %v4019 = vpop.f32.mrb[0].mxu0
  %v4020 = vadd.f32 %v3731, %v4019
  %v4021 = vpop.f32.mrb[0].mxu0
  %v4022 = vpop.f32.mrb[0].mxu0
  %v4023 = vadd.f32 %v3734, %v4022
  %v4024 = vpop.f32.mrb[0].mxu0
  %4025 = vmatprep.mubr.bf16.mxu0 %v1151
  %4026 = vmatmul.mubr.bf16.gmra.mrb[0].mxu0 %v1150
  %v4027 = vpop.f32.mrb[0].mxu0
  %v4028 = vadd.f32 %v3739, %v4027
  %v4029 = vpop.f32.mrb[0].mxu0
  %v4030 = vpop.f32.mrb[0].mxu0
  %v4031 = vadd.f32 %v3742, %v4030
  %v4032 = vpop.f32.mrb[0].mxu0
  %4033 = vmatprep.mubr.bf16.mxu0 %v1157
  %4034 = vmatmul.mubr.bf16.gmra.mrb[0].mxu0 %v1156
  %v4035 = vpop.f32.mrb[0].mxu0
  %v4036 = vadd.f32 %v3747, %v4035
  %v4037 = vpop.f32.mrb[0].mxu0
  %v4038 = vpop.f32.mrb[0].mxu0
  %v4039 = vadd.f32 %v3750, %v4038
  %v4040 = vpop.f32.mrb[0].mxu0
  %4041 = vmatprep.mubr.bf16.mxu0 %v1163
  %4042 = vmatmul.mubr.bf16.gmra.mrb[0].mxu0 %v1162
  %v4043 = vpop.f32.mrb[0].mxu0
  %v4044 = vadd.f32 %v3755, %v4043
  %v4045 = vpop.f32.mrb[0].mxu0
  %v4046 = vpop.f32.mrb[0].mxu0
  %v4047 = vadd.f32 %v3758, %v4046
  %v4048 = vpop.f32.mrb[0].mxu0
  %4049 = vdwg.mxu0
  %4050 = vst [vmem:[%s2] sm:$0xff] %v2865
  %4051 = vst [vmem:[%s2 + $0x8] sm:$0xff] %v2867
  %4052 = vst [vmem:[%s2 + $0x10] sm:$0xff] %v3796
  %4053 = vst [vmem:[%s2 + $0x18] sm:$0xff] %v2869
  %4054 = vst [vmem:[%s2 + $0x20] sm:$0xff] %v2871
  %4055 = vst [vmem:[%s2 + $0x28] sm:$0xff] %v3799
  %4056 = vst [vmem:[%s2 + $0x30] sm:$0xff] %v2875
  %4057 = vst [vmem:[%s2 + $0x38] sm:$0xff] %v2877
  %4058 = vst [vmem:[%s2 + $0x40] sm:$0xff] %v3804
  %4059 = vst [vmem:[%s2 + $0x48] sm:$0xff] %v2879
  %4060 = vst [vmem:[%s2 + $0x50] sm:$0xff] %v2881
  %4061 = vst [vmem:[%s2 + $0x58] sm:$0xff] %v3807
  %4062 = vst [vmem:[%s2 + $0x60] sm:$0xff] %v2885
  %4063 = vst [vmem:[%s2 + $0x68] sm:$0xff] %v2887
  %4064 = vst [vmem:[%s2 + $0x70] sm:$0xff] %v3812
  %4065 = vst [vmem:[%s2 + $0x78] sm:$0xff] %v2889
  %4066 = vst [vmem:[%s2 + $0x80] sm:$0xff] %v2891
  %4067 = vst [vmem:[%s2 + $0x88] sm:$0xff] %v3815
  %4068 = vst [vmem:[%s2 + $0x90] sm:$0xff] %v2895
  %4069 = vst [vmem:[%s2 + $0x98] sm:$0xff] %v2897
  %4070 = vst [vmem:[%s2 + $0xa0] sm:$0xff] %v3820
  %4071 = vst [vmem:[%s2 + $0xa8] sm:$0xff] %v2899
  %4072 = vst [vmem:[%s2 + $0xb0] sm:$0xff] %v2901
  %4073 = vst [vmem:[%s2 + $0xb8] sm:$0xff] %v3823
  %4074 = vst [vmem:[%s2 + $0xc0] sm:$0xff] %v2905
  %4075 = vst [vmem:[%s2 + $0xc8] sm:$0xff] %v2907
  %4076 = vst [vmem:[%s2 + $0xd0] sm:$0xff] %v3828
  %4077 = vst [vmem:[%s2 + $0xd8] sm:$0xff] %v2909
  %4078 = vst [vmem:[%s2 + $0xe0] sm:$0xff] %v2911
  %4079 = vst [vmem:[%s2 + $0xe8] sm:$0xff] %v3831
  %4080 = vst [vmem:[%s2 + $0xf0] sm:$0xff] %v2915
  %4081 = vst [vmem:[%s2 + $0xf8] sm:$0xff] %v2917
  %4082 = vst [vmem:[%s2 + $0x100] sm:$0xff] %v3836
  %4083 = vst [vmem:[%s2 + $0x108] sm:$0xff] %v2919
  %4084 = vst [vmem:[%s2 + $0x110] sm:$0xff] %v2921
  %4085 = vst [vmem:[%s2 + $0x118] sm:$0xff] %v3839
  %4086 = vst [vmem:[%s2 + $0x120] sm:$0xff] %v2925
  %4087 = vst [vmem:[%s2 + $0x128] sm:$0xff] %v2927
  %4088 = vst [vmem:[%s2 + $0x130] sm:$0xff] %v3844
  %4089 = vst [vmem:[%s2 + $0x138] sm:$0xff] %v2929
  %4090 = vst [vmem:[%s2 + $0x140] sm:$0xff] %v2931
  %4091 = vst [vmem:[%s2 + $0x148] sm:$0xff] %v3847
  %4092 = vst [vmem:[%s2 + $0x150] sm:$0xff] %v2935
  %4093 = vst [vmem:[%s2 + $0x158] sm:$0xff] %v2937
  %4094 = vst [vmem:[%s2 + $0x160] sm:$0xff] %v3852
  %4095 = vst [vmem:[%s2 + $0x168] sm:$0xff] %v2939
  %4096 = vst [vmem:[%s2 + $0x170] sm:$0xff] %v2941
  %4097 = vst [vmem:[%s2 + $0x178] sm:$0xff] %v3855
  %4098 = vst [vmem:[%s2 + $0x180] sm:$0xff] %v2945
  %4099 = vst [vmem:[%s2 + $0x188] sm:$0xff] %v2947
  %4100 = vst [vmem:[%s2 + $0x190] sm:$0xff] %v3860
  %4101 = vst [vmem:[%s2 + $0x198] sm:$0xff] %v2949
  %4102 = vst [vmem:[%s2 + $0x1a0] sm:$0xff] %v2951
  %4103 = vst [vmem:[%s2 + $0x1a8] sm:$0xff] %v3863
  %4104 = vst [vmem:[%s2 + $0x1b0] sm:$0xff] %v2955
  %4105 = vst [vmem:[%s2 + $0x1b8] sm:$0xff] %v2957
  %4106 = vst [vmem:[%s2 + $0x1c0] sm:$0xff] %v3868
  %4107 = vst [vmem:[%s2 + $0x1c8] sm:$0xff] %v2959
  %4108 = vst [vmem:[%s2 + $0x1d0] sm:$0xff] %v2961
  %4109 = vst [vmem:[%s2 + $0x1d8] sm:$0xff] %v3871
  %4110 = vst [vmem:[%s2 + $0x1e0] sm:$0xff] %v2965
  %4111 = vst [vmem:[%s2 + $0x1e8] sm:$0xff] %v2967
  %4112 = vst [vmem:[%s2 + $0x1f0] sm:$0xff] %v3876
  %4113 = vst [vmem:[%s2 + $0x1f8] sm:$0xff] %v2969
  %4114 = vst [vmem:[%s2 + $0x200] sm:$0xff] %v2971
  %4115 = vst [vmem:[%s2 + $0x208] sm:$0xff] %v3879
  %4116 = vst [vmem:[%s2 + $0x210] sm:$0xff] %v2975
  %4117 = vst [vmem:[%s2 + $0x218] sm:$0xff] %v2977
  %4118 = vst [vmem:[%s2 + $0x220] sm:$0xff] %v3884
  %4119 = vst [vmem:[%s2 + $0x228] sm:$0xff] %v2979
  %4120 = vst [vmem:[%s2 + $0x230] sm:$0xff] %v2981
  %4121 = vst [vmem:[%s2 + $0x238] sm:$0xff] %v3887
  %4122 = vst [vmem:[%s2 + $0x240] sm:$0xff] %v2985
  %4123 = vst [vmem:[%s2 + $0x248] sm:$0xff] %v2987
  %4124 = vst [vmem:[%s2 + $0x250] sm:$0xff] %v3892
  %4125 = vst [vmem:[%s2 + $0x258] sm:$0xff] %v2989
  %4126 = vst [vmem:[%s2 + $0x260] sm:$0xff] %v2991
  %4127 = vst [vmem:[%s2 + $0x268] sm:$0xff] %v3895
  %4128 = vst [vmem:[%s2 + $0x270] sm:$0xff] %v2995
  %4129 = vst [vmem:[%s2 + $0x278] sm:$0xff] %v2997
  %4130 = vst [vmem:[%s2 + $0x280] sm:$0xff] %v3900
  %4131 = vst [vmem:[%s2 + $0x288] sm:$0xff] %v2999
  %4132 = vst [vmem:[%s2 + $0x290] sm:$0xff] %v3001
  %4133 = vst [vmem:[%s2 + $0x298] sm:$0xff] %v3903
  %4134 = vst [vmem:[%s2 + $0x2a0] sm:$0xff] %v3005
  %4135 = vst [vmem:[%s2 + $0x2a8] sm:$0xff] %v3007
  %4136 = vst [vmem:[%s2 + $0x2b0] sm:$0xff] %v3908
  %4137 = vst [vmem:[%s2 + $0x2b8] sm:$0xff] %v3009
  %4138 = vst [vmem:[%s2 + $0x2c0] sm:$0xff] %v3011
  %4139 = vst [vmem:[%s2 + $0x2c8] sm:$0xff] %v3911
  %4140 = vst [vmem:[%s2 + $0x2d0] sm:$0xff] %v3015
  %4141 = vst [vmem:[%s2 + $0x2d8] sm:$0xff] %v3017
  %4142 = vst [vmem:[%s2 + $0x2e0] sm:$0xff] %v3916
  %4143 = vst [vmem:[%s2 + $0x2e8] sm:$0xff] %v3019
  %4144 = vst [vmem:[%s2 + $0x2f0] sm:$0xff] %v3021
  %4145 = vst [vmem:[%s2 + $0x2f8] sm:$0xff] %v3919
  %4146 = vst [vmem:[%s2 + $0x300] sm:$0xff] %v3025
  %4147 = vst [vmem:[%s2 + $0x308] sm:$0xff] %v3027
  %4148 = vst [vmem:[%s2 + $0x310] sm:$0xff] %v3924
  %4149 = vst [vmem:[%s2 + $0x318] sm:$0xff] %v3029
  %4150 = vst [vmem:[%s2 + $0x320] sm:$0xff] %v3031
  %4151 = vst [vmem:[%s2 + $0x328] sm:$0xff] %v3927
  %4152 = vst [vmem:[%s2 + $0x330] sm:$0xff] %v3035
  %4153 = vst [vmem:[%s2 + $0x338] sm:$0xff] %v3037
  %4154 = vst [vmem:[%s2 + $0x340] sm:$0xff] %v3932
  %4155 = vst [vmem:[%s2 + $0x348] sm:$0xff] %v3039
  %4156 = vst [vmem:[%s2 + $0x350] sm:$0xff] %v3041
  %4157 = vst [vmem:[%s2 + $0x358] sm:$0xff] %v3935
  %4158 = vst [vmem:[%s2 + $0x360] sm:$0xff] %v3045
  %4159 = vst [vmem:[%s2 + $0x368] sm:$0xff] %v3047
  %4160 = vst [vmem:[%s2 + $0x370] sm:$0xff] %v3940
  %4161 = vst [vmem:[%s2 + $0x378] sm:$0xff] %v3049
  %4162 = vst [vmem:[%s2 + $0x380] sm:$0xff] %v3051
  %4163 = vst [vmem:[%s2 + $0x388] sm:$0xff] %v3943
  %4164 = vst [vmem:[%s2 + $0x390] sm:$0xff] %v3055
  %4165 = vst [vmem:[%s2 + $0x398] sm:$0xff] %v3057
  %4166 = vst [vmem:[%s2 + $0x3a0] sm:$0xff] %v3948
  %4167 = vst [vmem:[%s2 + $0x3a8] sm:$0xff] %v3059
  %4168 = vst [vmem:[%s2 + $0x3b0] sm:$0xff] %v3061
  %4169 = vst [vmem:[%s2 + $0x3b8] sm:$0xff] %v3951
  %4170 = vst [vmem:[%s2 + $0x3c0] sm:$0xff] %v3065
  %4171 = vst [vmem:[%s2 + $0x3c8] sm:$0xff] %v3067
  %4172 = vst [vmem:[%s2 + $0x3d0] sm:$0xff] %v3956
  %4173 = vst [vmem:[%s2 + $0x3d8] sm:$0xff] %v3069
  %4174 = vst [vmem:[%s2 + $0x3e0] sm:$0xff] %v3071
  %4175 = vst [vmem:[%s2 + $0x3e8] sm:$0xff] %v3959
  %4176 = vst [vmem:[%s2 + $0x3f0] sm:$0xff] %v3075
  %4177 = vst [vmem:[%s2 + $0x3f8] sm:$0xff] %v3077
  %4178 = vst [vmem:[%s2 + $0x400] sm:$0xff] %v3964
  %4179 = vst [vmem:[%s2 + $0x408] sm:$0xff] %v3079
  %4180 = vst [vmem:[%s2 + $0x410] sm:$0xff] %v3081
  %4181 = vst [vmem:[%s2 + $0x418] sm:$0xff] %v3967
  %4182 = vst [vmem:[%s2 + $0x420] sm:$0xff] %v3085
  %4183 = vst [vmem:[%s2 + $0x428] sm:$0xff] %v3087
  %4184 = vst [vmem:[%s2 + $0x430] sm:$0xff] %v3972
  %4185 = vst [vmem:[%s2 + $0x438] sm:$0xff] %v3089
  %4186 = vst [vmem:[%s2 + $0x440] sm:$0xff] %v3091
  %4187 = vst [vmem:[%s2 + $0x448] sm:$0xff] %v3975
  %4188 = vst [vmem:[%s2 + $0x450] sm:$0xff] %v3095
  %4189 = vst [vmem:[%s2 + $0x458] sm:$0xff] %v3097
  %4190 = vst [vmem:[%s2 + $0x460] sm:$0xff] %v3980
  %4191 = vst [vmem:[%s2 + $0x468] sm:$0xff] %v3099
  %4192 = vst [vmem:[%s2 + $0x470] sm:$0xff] %v3101
  %4193 = vst [vmem:[%s2 + $0x478] sm:$0xff] %v3983
  %4194 = vst [vmem:[%s2 + $0x480] sm:$0xff] %v3105
  %4195 = vst [vmem:[%s2 + $0x488] sm:$0xff] %v3107
  %4196 = vst [vmem:[%s2 + $0x490] sm:$0xff] %v3988
  %4197 = vst [vmem:[%s2 + $0x498] sm:$0xff] %v3109
  %4198 = vst [vmem:[%s2 + $0x4a0] sm:$0xff] %v3111
  %4199 = vst [vmem:[%s2 + $0x4a8] sm:$0xff] %v3991
  %4200 = vst [vmem:[%s2 + $0x4b0] sm:$0xff] %v3115
  %4201 = vst [vmem:[%s2 + $0x4b8] sm:$0xff] %v3117
  %4202 = vst [vmem:[%s2 + $0x4c0] sm:$0xff] %v3996
  %4203 = vst [vmem:[%s2 + $0x4c8] sm:$0xff] %v3119
  %4204 = vst [vmem:[%s2 + $0x4d0] sm:$0xff] %v3121
  %4205 = vst [vmem:[%s2 + $0x4d8] sm:$0xff] %v3999
  %4206 = vst [vmem:[%s2 + $0x4e0] sm:$0xff] %v3125
  %4207 = vst [vmem:[%s2 + $0x4e8] sm:$0xff] %v3127
  %4208 = vst [vmem:[%s2 + $0x4f0] sm:$0xff] %v4004
  %4209 = vst [vmem:[%s2 + $0x4f8] sm:$0xff] %v3129
  %4210 = vst [vmem:[%s2 + $0x500] sm:$0xff] %v3131
  %4211 = vst [vmem:[%s2 + $0x508] sm:$0xff] %v4007
  %4212 = vst [vmem:[%s2 + $0x510] sm:$0xff] %v3135
  %4213 = vst [vmem:[%s2 + $0x518] sm:$0xff] %v3137
  %4214 = vst [vmem:[%s2 + $0x520] sm:$0xff] %v4012
  %4215 = vst [vmem:[%s2 + $0x528] sm:$0xff] %v3139
  %4216 = vst [vmem:[%s2 + $0x530] sm:$0xff] %v3141
  %4217 = vst [vmem:[%s2 + $0x538] sm:$0xff] %v4015
  %4218 = vst [vmem:[%s2 + $0x540] sm:$0xff] %v3145
  %4219 = vst [vmem:[%s2 + $0x548] sm:$0xff] %v3147
  %4220 = vst [vmem:[%s2 + $0x550] sm:$0xff] %v4020
  %4221 = vst [vmem:[%s2 + $0x558] sm:$0xff] %v3149
  %4222 = vst [vmem:[%s2 + $0x560] sm:$0xff] %v3151
  %4223 = vst [vmem:[%s2 + $0x568] sm:$0xff] %v4023
  %4224 = vst [vmem:[%s2 + $0x570] sm:$0xff] %v3155
  %4225 = vst [vmem:[%s2 + $0x578] sm:$0xff] %v3157
  %4226 = vst [vmem:[%s2 + $0x580] sm:$0xff] %v4028
  %4227 = vst [vmem:[%s2 + $0x588] sm:$0xff] %v3159
  %4228 = vst [vmem:[%s2 + $0x590] sm:$0xff] %v3161
  %4229 = vst [vmem:[%s2 + $0x598] sm:$0xff] %v4031
  %4230 = vst [vmem:[%s2 + $0x5a0] sm:$0xff] %v3165
  %4231 = vst [vmem:[%s2 + $0x5a8] sm:$0xff] %v3167
  %4232 = vst [vmem:[%s2 + $0x5b0] sm:$0xff] %v4036
  %4233 = vst [vmem:[%s2 + $0x5b8] sm:$0xff] %v3169
  %4234 = vst [vmem:[%s2 + $0x5c0] sm:$0xff] %v3171
  %4235 = vst [vmem:[%s2 + $0x5c8] sm:$0xff] %v4039
  %4236 = vst [vmem:[%s2 + $0x5d0] sm:$0xff] %v3175
  %4237 = vst [vmem:[%s2 + $0x5d8] sm:$0xff] %v3177
  %4238 = vst [vmem:[%s2 + $0x5e0] sm:$0xff] %v4044
  %4239 = vst [vmem:[%s2 + $0x5e8] sm:$0xff] %v3179
  %4240 = vst [vmem:[%s2 + $0x5f0] sm:$0xff] %v3181
  %4241 = vst [vmem:[%s2 + $0x5f8] sm:$0xff] %v4047
  // Predicated region
  $region10: #{union_model_forward.3} parent=0 // pred_check
    _
  $region11: #{union_model_forward.3} parent=0 // pred_check_branch
    %4243 = sbr.rel (0) target = $region13
  $region12: #{union_model_forward.3} parent=0 // pred_region
    _
  $region13: #{union_model_forward.3} parent=0 // pred_fallthru
    _
  // Predicated region
  $region14: #{union_model_forward.3} parent=0 // pred_check
    _
  $region15: #{union_model_forward.3} parent=0 // pred_check_branch
    %4245 = sbr.rel (0) target = $region17
  $region16: #{union_model_forward.3} parent=0 // pred_region
    _
  $region17: #{union_model_forward.3} parent=0 // pred_fallthru
    _

// kernel: union_model_forward.5
$region0: #{union_model_forward.5}
  #allocation0 [shape = 'u32[]', space=smem, size = 0x4, offset = 0x4, fixed_abs, tag = 'smem constant byte address 0x4 - core index']
  #allocation1 [shape = 'u32[144,128]{1,0:T(1,128)}', space=vmem, size = 0x12000, scoped, tag = 'internal scratch']
  %s0 = inlined_call_operand.vmem [shape: bf16[1536,384], index: 0, kind: input, shape index: {}]
  %s1 = inlined_call_operand.vmem [shape: bf16[384,256], index: 1, kind: input, shape index: {}]
  %s2 = inlined_call_operand.vmem [shape: f32[1536,256], index: 2, kind: output, shape index: {}]
  %s3 = sld [smem:[#allocation0]]
  $region41: #{union_model_forward.5} parent=0
    _
  %s5 = ssub.s32 1, %s3
  %s6 = scalar_select 0, %s5, %s3
  loop: start=0, step=1, limit=5
  $region2: #{union_model_forward.5} parent=0 // loop_pre_header
    _
  $region3: #{union_model_forward.5} parent=0 // loop_header
    %s8 = sphi 0, %s12
    %p9 = scmp.ge.s32.totalorder %s8, 5
    %s18 = sphi 0, %s20
    %s21 = sphi 0, %s18
    %s22 = sphi 0, %s21
    %s38 = sphi 0, %s22
    %s42 = sphi 0, %s42
    %s44 = sphi 0, %s42
    %s45 = sphi 0, %s44
    %s59 = sphi 0, %s45
    %s65 = sphi 0, %s67
    %s68 = sphi 0, %s65
    %s69 = sphi 0, %s68
    %s85 = sphi 0, %s69
  $region4: #{union_model_forward.5} parent=0 // loop_header_branch
    %11 = sbr.rel (%p9) target = $region8
  $region5: #{union_model_forward.5} parent=0 // loop_body
    %s13 = ssub.s32 %s8, 1
    %s14 = ssub.s32 %s8, 2
    %s15 = sadd.s32 %s8, 1
    %s16 = ssub.s32 %s8, %s15
    %p17 = scmp.eq.s32.totalorder %s16, 0
    %s19 = sadd.s32 %s18, 1
    %s20 = scalar_select %p17, %s18, %s19
    %p23 = pneg %p17
    %p24 = scmp.eq.s32.totalorder %s8, 2
    %p25 = por %p23, %p24
    %p26 = scmp.ne.s32.totalorder %s18, %s21
    %p27 = scmp.eq.s32.totalorder %s8, 0
    %p28 = por %p26, %p27
    %p29 = scmp.ne.s32.totalorder %s18, %s21
    %p30 = scmp.eq.s32.totalorder %s13, 2
    %p31 = por %p29, %p30
    %p32 = scmp.ne.s32.totalorder %s21, %s22
    %p33 = scmp.eq.s32.totalorder %s13, 0
    %p34 = por %p32, %p33
    %p35 = scmp.ne.s32.totalorder %s21, %s22
    %p36 = scmp.eq.s32.totalorder %s14, 2
    %p37 = por %p35, %p36
    %p39 = scmp.ne.s32.totalorder %s22, %s38
    %p40 = scmp.eq.s32.totalorder %s14, 0
    %p41 = por %p39, %p40
    %s43 = sadd.s32 %s42, 1
    %p46 = scmp.eq.s32.totalorder %s8, 2
    %p47 = scmp.ne.s32.totalorder %s42, %s44
    %p48 = scmp.eq.s32.totalorder %s8, 0
    %p49 = por %p47, %p48
    %p50 = scmp.ne.s32.totalorder %s42, %s44
    %p51 = scmp.eq.s32.totalorder %s13, 2
    %p52 = por %p50, %p51
    %p53 = scmp.ne.s32.totalorder %s44, %s45
    %p54 = scmp.eq.s32.totalorder %s13, 0
    %p55 = por %p53, %p54
    %p56 = scmp.ne.s32.totalorder %s44, %s45
    %p57 = scmp.eq.s32.totalorder %s14, 2
    %p58 = por %p56, %p57
    %p60 = scmp.ne.s32.totalorder %s45, %s59
    %p61 = scmp.eq.s32.totalorder %s14, 0
    %p62 = por %p60, %p61
    %s63 = ssub.s32 %s8, %s15
    %p64 = scmp.eq.s32.totalorder %s63, 0
    %s66 = sadd.s32 %s65, 1
    %s67 = scalar_select %p64, %s65, %s66
    %p70 = pneg %p64
    %p71 = scmp.eq.s32.totalorder %s8, 2
    %p72 = por %p70, %p71
    %p73 = scmp.ne.s32.totalorder %s65, %s68
    %p74 = scmp.eq.s32.totalorder %s8, 0
    %p75 = por %p73, %p74
    %p76 = scmp.ne.s32.totalorder %s65, %s68
    %p77 = scmp.eq.s32.totalorder %s13, 2
    %p78 = por %p76, %p77
    %p79 = scmp.ne.s32.totalorder %s68, %s69
    %p80 = scmp.eq.s32.totalorder %s13, 0
    %p81 = por %p79, %p80
    %p82 = scmp.ne.s32.totalorder %s68, %s69
    %p83 = scmp.eq.s32.totalorder %s14, 2
    %p84 = por %p82, %p83
    %p86 = scmp.ne.s32.totalorder %s69, %s85
    %p87 = scmp.eq.s32.totalorder %s14, 0
    %p88 = por %p86, %p87
    %p89 = scmp.le.s32.totalorder 1, %s8
    %p90 = scmp.lt.s32.totalorder %s8, 4
    %p91 = pnand %p89, %p90
    %p92 = pneg %p91
    // Predicated region
    $region9: #{union_model_forward.5} parent=5 // pred_check
      _
    $region10: #{union_model_forward.5} parent=5 // pred_check_branch
      %94 = sbr.rel (%p91) target = $region12
    $region11: #{union_model_forward.5} parent=5 // pred_region
      %s95 = ssub.s32 %s8, 1
      // Predicated region
      $region13: #{union_model_forward.5} parent=11 // pred_check
        %p96 = pneg %p55
      $region14: #{union_model_forward.5} parent=11 // pred_check_branch
        %98 = sbr.rel (%p96) target = $region16
      $region15: #{union_model_forward.5} parent=11 // pred_region
        _
      $region16: #{union_model_forward.5} parent=11 // pred_fallthru
        _
    $region12: #{union_model_forward.5} parent=5 // pred_fallthru
      _
    %p99 = scmp.lt.s32.totalorder %s8, 3
    // Predicated region
    $region17: #{union_model_forward.5} parent=5 // pred_check
      %p100 = pneg %p99
    $region18: #{union_model_forward.5} parent=5 // pred_check_branch
      %102 = sbr.rel (%p100) target = $region20
    $region19: #{union_model_forward.5} parent=5 // pred_region
      // Predicated region
      $region21: #{union_model_forward.5} parent=19 // pred_check
        %p103 = pneg %p28
      $region22: #{union_model_forward.5} parent=19 // pred_check_branch
        %105 = sbr.rel (%p103) target = $region24
      $region23: #{union_model_forward.5} parent=19 // pred_region
        %s106 = smul.u32 64, %s8
        %p107 = scmp.lt.s32.totalorder %s106, 191
        %s108 = scalar_select %p107, %s106, 191
        %s109 = smul.addr %s108, 3
        %s110 = smul.addr %s109, 4
        %s111 = scalar_lea.vmem %s0, %s110
        %s112 = smul.u32 64, %s8
      $region24: #{union_model_forward.5} parent=19 // pred_fallthru
        _
    $region20: #{union_model_forward.5} parent=5 // pred_fallthru
      _
    %p113 = scmp.le.s32.totalorder 1, %s8
    %p114 = scmp.lt.s32.totalorder %s8, 4
    %p115 = pnand %p113, %p114
    %p116 = pneg %p115
    // Predicated region
    $region25: #{union_model_forward.5} parent=5 // pred_check
      _
    $region26: #{union_model_forward.5} parent=5 // pred_check_branch
      %118 = sbr.rel (%p115) target = $region28
    $region27: #{union_model_forward.5} parent=5 // pred_region
      %s119 = ssub.s32 %s8, 1
      %s120 = smul.u32 64, %s13
      %p121 = scmp.lt.s32.totalorder %s120, 191
      %s122 = scalar_select %p121, %s120, 191
      %s123 = smul.addr %s122, 3
      %s124 = smul.addr %s123, 4
      %s125 = scalar_lea.vmem %s0, %s124
      %p126 = pneg %p34
      %p127 = pneg %p31
      %p128 = pneg %p55
      %p129 = pneg %p52
      %p130 = pneg %p81
      %p131 = pneg %p78
      %s132 = smul.u32 64, %s13
      %p133 = scmp.lt.s32.totalorder %s132, 191
      %s134 = scalar_select %p133, %s132, 191
      %s135 = smul.addr %s134, 2
      %s136 = smul.addr %s135, 8
      %s137 = scalar_lea.vmem %s2, %s136
      %s138 = smul.u32 64, %s13
      %p139 = scmp.lt.s32.totalorder %s138, 191
      %s140 = scalar_select %p139, %s138, 191
      %s141 = smul.addr %s140, 3
      %s142 = smul.addr %s141, 4
      %s143 = scalar_lea.vmem %s0, %s142
      %s144 = smul.u32 64, %s13
      %s145 = smul.u32 64, %s13
      %p146 = scmp.lt.s32.totalorder %s145, 191
      %s147 = scalar_select %p146, %s145, 191
      %s148 = smul.addr %s147, 2
      %s149 = smul.addr %s148, 8
      %s150 = scalar_lea.vmem %s2, %s149
      %s151 = smul.u32 64, %s13
      %v153 = vld [vmem:[%s143] sm:$0xff]
      %v154 = vld [vmem:[%s143 + $0x8] sm:$0xf]
      %v155 = vld [vmem:[%s143 + $0xc] sm:$0xff]
      %v156 = vld [vmem:[%s143 + $0x14] sm:$0xf]
      %v157 = vld [vmem:[%s143 + $0x18] sm:$0xff]
      %v158 = vld [vmem:[%s143 + $0x20] sm:$0xf]
      %v159 = vld [vmem:[%s143 + $0x24] sm:$0xff]
      %v160 = vld [vmem:[%s143 + $0x2c] sm:$0xf]
      %v161 = vld [vmem:[%s143 + $0x30] sm:$0xff]
      %v162 = vld [vmem:[%s143 + $0x38] sm:$0xf]
      %v163 = vld [vmem:[%s143 + $0x3c] sm:$0xff]
      %v164 = vld [vmem:[%s143 + $0x44] sm:$0xf]
      %v165 = vld [vmem:[%s143 + $0x48] sm:$0xff]
      %v166 = vld [vmem:[%s143 + $0x50] sm:$0xf]
      %v167 = vld [vmem:[%s143 + $0x54] sm:$0xff]
      %v168 = vld [vmem:[%s143 + $0x5c] sm:$0xf]
      %v169 = vld [vmem:[%s143 + $0x60] sm:$0xff]
      %v170 = vld [vmem:[%s143 + $0x68] sm:$0xf]
      %v171 = vld [vmem:[%s143 + $0x6c] sm:$0xff]
      %v172 = vld [vmem:[%s143 + $0x74] sm:$0xf]
      %v173 = vld [vmem:[%s143 + $0x78] sm:$0xff]
      %v174 = vld [vmem:[%s143 + $0x80] sm:$0xf]
      %v175 = vld [vmem:[%s143 + $0x84] sm:$0xff]
      %v176 = vld [vmem:[%s143 + $0x8c] sm:$0xf]
      %v177 = vld [vmem:[%s143 + $0x90] sm:$0xff]
      %v178 = vld [vmem:[%s143 + $0x98] sm:$0xf]
      %v179 = vld [vmem:[%s143 + $0x9c] sm:$0xff]
      %v180 = vld [vmem:[%s143 + $0xa4] sm:$0xf]
      %v181 = vld [vmem:[%s143 + $0xa8] sm:$0xff]
      %v182 = vld [vmem:[%s143 + $0xb0] sm:$0xf]
      %v183 = vld [vmem:[%s143 + $0xb4] sm:$0xff]
      %v184 = vld [vmem:[%s143 + $0xbc] sm:$0xf]
      %v185 = vld [vmem:[%s143 + $0xc0] sm:$0xff]
      %v186 = vld [vmem:[%s143 + $0xc8] sm:$0xf]
      %v187 = vld [vmem:[%s143 + $0xcc] sm:$0xff]
      %v188 = vld [vmem:[%s143 + $0xd4] sm:$0xf]
      %v189 = vld [vmem:[%s143 + $0xd8] sm:$0xff]
      %v190 = vld [vmem:[%s143 + $0xe0] sm:$0xf]
      %v191 = vld [vmem:[%s143 + $0xe4] sm:$0xff]
      %v192 = vld [vmem:[%s143 + $0xec] sm:$0xf]
      %v193 = vld [vmem:[%s143 + $0xf0] sm:$0xff]
      %v194 = vld [vmem:[%s143 + $0xf8] sm:$0xf]
      %v195 = vld [vmem:[%s143 + $0xfc] sm:$0xff]
      %v196 = vld [vmem:[%s143 + $0x104] sm:$0xf]
      %v197 = vld [vmem:[%s143 + $0x108] sm:$0xff]
      %v198 = vld [vmem:[%s143 + $0x110] sm:$0xf]
      %v199 = vld [vmem:[%s143 + $0x114] sm:$0xff]
      %v200 = vld [vmem:[%s143 + $0x11c] sm:$0xf]
      %v201 = vld [vmem:[%s143 + $0x120] sm:$0xff]
      %v202 = vld [vmem:[%s143 + $0x128] sm:$0xf]
      %v203 = vld [vmem:[%s143 + $0x12c] sm:$0xff]
      %v204 = vld [vmem:[%s143 + $0x134] sm:$0xf]
      %v205 = vld [vmem:[%s143 + $0x138] sm:$0xff]
      %v206 = vld [vmem:[%s143 + $0x140] sm:$0xf]
      %v207 = vld [vmem:[%s143 + $0x144] sm:$0xff]
      %v208 = vld [vmem:[%s143 + $0x14c] sm:$0xf]
      %v209 = vld [vmem:[%s143 + $0x150] sm:$0xff]
      %v210 = vld [vmem:[%s143 + $0x158] sm:$0xf]
      %v211 = vld [vmem:[%s143 + $0x15c] sm:$0xff]
      %v212 = vld [vmem:[%s143 + $0x164] sm:$0xf]
      %v213 = vld [vmem:[%s143 + $0x168] sm:$0xff]
      %v214 = vld [vmem:[%s143 + $0x170] sm:$0xf]
      %v215 = vld [vmem:[%s143 + $0x174] sm:$0xff]
      %v216 = vld [vmem:[%s143 + $0x17c] sm:$0xf]
      %v217 = vld [vmem:[%s143 + $0x180] sm:$0xff]
      %v218 = vld [vmem:[%s143 + $0x188] sm:$0xf]
      %v219 = vld [vmem:[%s143 + $0x18c] sm:$0xff]
      %v220 = vld [vmem:[%s143 + $0x194] sm:$0xf]
      %v221 = vld [vmem:[%s143 + $0x198] sm:$0xff]
      %v222 = vld [vmem:[%s143 + $0x1a0] sm:$0xf]
      %v223 = vld [vmem:[%s143 + $0x1a4] sm:$0xff]
      %v224 = vld [vmem:[%s143 + $0x1ac] sm:$0xf]
      %v225 = vld [vmem:[%s143 + $0x1b0] sm:$0xff]
      %v226 = vld [vmem:[%s143 + $0x1b8] sm:$0xf]
      %v227 = vld [vmem:[%s143 + $0x1bc] sm:$0xff]
      %v228 = vld [vmem:[%s143 + $0x1c4] sm:$0xf]
      %v229 = vld [vmem:[%s143 + $0x1c8] sm:$0xff]
      %v230 = vld [vmem:[%s143 + $0x1d0] sm:$0xf]
      %v231 = vld [vmem:[%s143 + $0x1d4] sm:$0xff]
      %v232 = vld [vmem:[%s143 + $0x1dc] sm:$0xf]
      %v233 = vld [vmem:[%s143 + $0x1e0] sm:$0xff]
      %v234 = vld [vmem:[%s143 + $0x1e8] sm:$0xf]
      %v235 = vld [vmem:[%s143 + $0x1ec] sm:$0xff]
      %v236 = vld [vmem:[%s143 + $0x1f4] sm:$0xf]
      %v237 = vld [vmem:[%s143 + $0x1f8] sm:$0xff]
      %v238 = vld [vmem:[%s143 + $0x200] sm:$0xf]
      %v239 = vld [vmem:[%s143 + $0x204] sm:$0xff]
      %v240 = vld [vmem:[%s143 + $0x20c] sm:$0xf]
      %v241 = vld [vmem:[%s143 + $0x210] sm:$0xff]
      %v242 = vld [vmem:[%s143 + $0x218] sm:$0xf]
      %v243 = vld [vmem:[%s143 + $0x21c] sm:$0xff]
      %v244 = vld [vmem:[%s143 + $0x224] sm:$0xf]
      %v245 = vld [vmem:[%s143 + $0x228] sm:$0xff]
      %v246 = vld [vmem:[%s143 + $0x230] sm:$0xf]
      %v247 = vld [vmem:[%s143 + $0x234] sm:$0xff]
      %v248 = vld [vmem:[%s143 + $0x23c] sm:$0xf]
      %v249 = vld [vmem:[%s143 + $0x240] sm:$0xff]
      %v250 = vld [vmem:[%s143 + $0x248] sm:$0xf]
      %v251 = vld [vmem:[%s143 + $0x24c] sm:$0xff]
      %v252 = vld [vmem:[%s143 + $0x254] sm:$0xf]
      %v253 = vld [vmem:[%s143 + $0x258] sm:$0xff]
      %v254 = vld [vmem:[%s143 + $0x260] sm:$0xf]
      %v255 = vld [vmem:[%s143 + $0x264] sm:$0xff]
      %v256 = vld [vmem:[%s143 + $0x26c] sm:$0xf]
      %v257 = vld [vmem:[%s143 + $0x270] sm:$0xff]
      %v258 = vld [vmem:[%s143 + $0x278] sm:$0xf]
      %v259 = vld [vmem:[%s143 + $0x27c] sm:$0xff]
      %v260 = vld [vmem:[%s143 + $0x284] sm:$0xf]
      %v261 = vld [vmem:[%s143 + $0x288] sm:$0xff]
      %v262 = vld [vmem:[%s143 + $0x290] sm:$0xf]
      %v263 = vld [vmem:[%s143 + $0x294] sm:$0xff]
      %v264 = vld [vmem:[%s143 + $0x29c] sm:$0xf]
      %v265 = vld [vmem:[%s143 + $0x2a0] sm:$0xff]
      %v266 = vld [vmem:[%s143 + $0x2a8] sm:$0xf]
      %v267 = vld [vmem:[%s143 + $0x2ac] sm:$0xff]
      %v268 = vld [vmem:[%s143 + $0x2b4] sm:$0xf]
      %v269 = vld [vmem:[%s143 + $0x2b8] sm:$0xff]
      %v270 = vld [vmem:[%s143 + $0x2c0] sm:$0xf]
      %v271 = vld [vmem:[%s143 + $0x2c4] sm:$0xff]
      %v272 = vld [vmem:[%s143 + $0x2cc] sm:$0xf]
      %v273 = vld [vmem:[%s143 + $0x2d0] sm:$0xff]
      %v274 = vld [vmem:[%s143 + $0x2d8] sm:$0xf]
      %v275 = vld [vmem:[%s143 + $0x2dc] sm:$0xff]
      %v276 = vld [vmem:[%s143 + $0x2e4] sm:$0xf]
      %v277 = vld [vmem:[%s143 + $0x2e8] sm:$0xff]
      %v278 = vld [vmem:[%s143 + $0x2f0] sm:$0xf]
      %v279 = vld [vmem:[%s143 + $0x2f4] sm:$0xff]
      %v280 = vld [vmem:[%s143 + $0x2fc] sm:$0xf]
      %v281 = vld [vmem:[%s1] sm:$0xff]
      %v282 = vld [vmem:[%s1 + $0x8] sm:$0xff]
      %v283 = vld [vmem:[%s1 + $0x10] sm:$0xff]
      %v284 = vld [vmem:[%s1 + $0x18] sm:$0xff]
      %v285 = vld [vmem:[%s1 + $0x20] sm:$0xff]
      %v286 = vld [vmem:[%s1 + $0x28] sm:$0xff]
      %v287 = vld [vmem:[%s1 + $0x30] sm:$0xff]
      %v288 = vld [vmem:[%s1 + $0x38] sm:$0xff]
      %v289 = vld [vmem:[%s1 + $0x40] sm:$0xff]
      %v290 = vld [vmem:[%s1 + $0x48] sm:$0xff]
      %v291 = vld [vmem:[%s1 + $0x50] sm:$0xff]
      %v292 = vld [vmem:[%s1 + $0x58] sm:$0xff]
      %v293 = vld [vmem:[%s1 + $0x60] sm:$0xff]
      %v294 = vld [vmem:[%s1 + $0x68] sm:$0xff]
      %v295 = vld [vmem:[%s1 + $0x70] sm:$0xff]
      %v296 = vld [vmem:[%s1 + $0x78] sm:$0xff]
      %v297 = vld [vmem:[%s1 + $0x80] sm:$0xff]
      %v298 = vld [vmem:[%s1 + $0x88] sm:$0xff]
      %v299 = vld [vmem:[%s1 + $0x90] sm:$0xff]
      %v300 = vld [vmem:[%s1 + $0x98] sm:$0xff]
      %v301 = vld [vmem:[%s1 + $0xa0] sm:$0xff]
      %v302 = vld [vmem:[%s1 + $0xa8] sm:$0xff]
      %v303 = vld [vmem:[%s1 + $0xb0] sm:$0xff]
      %v304 = vld [vmem:[%s1 + $0xb8] sm:$0xff]
      %v305 = vld [vmem:[%s1 + $0xc0] sm:$0xff]
      %v306 = vld [vmem:[%s1 + $0xc8] sm:$0xff]
      %v307 = vld [vmem:[%s1 + $0xd0] sm:$0xff]
      %v308 = vld [vmem:[%s1 + $0xd8] sm:$0xff]
      %v309 = vld [vmem:[%s1 + $0xe0] sm:$0xff]
      %v310 = vld [vmem:[%s1 + $0xe8] sm:$0xff]
      %v311 = vld [vmem:[%s1 + $0xf0] sm:$0xff]
      %v312 = vld [vmem:[%s1 + $0xf8] sm:$0xff]
      %v313 = vld [vmem:[%s1 + $0x100] sm:$0xff]
      %v314 = vld [vmem:[%s1 + $0x108] sm:$0xff]
      %v315 = vld [vmem:[%s1 + $0x110] sm:$0xff]
      %v316 = vld [vmem:[%s1 + $0x118] sm:$0xff]
      %v317 = vld [vmem:[%s1 + $0x120] sm:$0xff]
      %v318 = vld [vmem:[%s1 + $0x128] sm:$0xff]
      %v319 = vld [vmem:[%s1 + $0x130] sm:$0xff]
      %v320 = vld [vmem:[%s1 + $0x138] sm:$0xff]
      %v321 = vld [vmem:[%s1 + $0x140] sm:$0xff]
      %v322 = vld [vmem:[%s1 + $0x148] sm:$0xff]
      %v323 = vld [vmem:[%s1 + $0x150] sm:$0xff]
      %v324 = vld [vmem:[%s1 + $0x158] sm:$0xff]
      %v325 = vld [vmem:[%s1 + $0x160] sm:$0xff]
      %v326 = vld [vmem:[%s1 + $0x168] sm:$0xff]
      %v327 = vld [vmem:[%s1 + $0x170] sm:$0xff]
      %v328 = vld [vmem:[%s1 + $0x178] sm:$0xff]
      %v457 = vunpack.c.l.b16 %v153
      %v458 = vunpack.c.h.b16 %v153
      %v459 = vunpack.c.l.b16 %v154
      %v460 = vunpack.c.l.b16 %v155
      %v461 = vunpack.c.h.b16 %v155
      %v462 = vunpack.c.l.b16 %v156
      %v463 = vunpack.c.l.b16 %v157
      %v464 = vunpack.c.h.b16 %v157
      %v465 = vunpack.c.l.b16 %v158
      %v466 = vunpack.c.l.b16 %v159
      %v467 = vunpack.c.h.b16 %v159
      %v468 = vunpack.c.l.b16 %v160
      %v469 = vunpack.c.l.b16 %v161
      %v470 = vunpack.c.h.b16 %v161
      %v471 = vunpack.c.l.b16 %v162
      %v472 = vunpack.c.l.b16 %v163
      %v473 = vunpack.c.h.b16 %v163
      %v474 = vunpack.c.l.b16 %v164
      %v475 = vunpack.c.l.b16 %v165
      %v476 = vunpack.c.h.b16 %v165
      %v477 = vunpack.c.l.b16 %v166
      %v478 = vunpack.c.l.b16 %v167
      %v479 = vunpack.c.h.b16 %v167
      %v480 = vunpack.c.l.b16 %v168
      %v481 = vunpack.c.l.b16 %v169
      %v482 = vunpack.c.h.b16 %v169
      %v483 = vunpack.c.l.b16 %v170
      %v484 = vunpack.c.l.b16 %v171
      %v485 = vunpack.c.h.b16 %v171
      %v486 = vunpack.c.l.b16 %v172
      %v487 = vunpack.c.l.b16 %v173
      %v488 = vunpack.c.h.b16 %v173
      %v489 = vunpack.c.l.b16 %v174
      %v490 = vunpack.c.l.b16 %v175
      %v491 = vunpack.c.h.b16 %v175
      %v492 = vunpack.c.l.b16 %v176
      %v493 = vunpack.c.l.b16 %v177
      %v494 = vunpack.c.h.b16 %v177
      %v495 = vunpack.c.l.b16 %v178
      %v496 = vunpack.c.l.b16 %v179
      %v497 = vunpack.c.h.b16 %v179
      %v498 = vunpack.c.l.b16 %v180
      %v499 = vunpack.c.l.b16 %v181
      %v500 = vunpack.c.h.b16 %v181
      %v501 = vunpack.c.l.b16 %v182
      %v502 = vunpack.c.l.b16 %v183
      %v503 = vunpack.c.h.b16 %v183
      %v504 = vunpack.c.l.b16 %v184
      %v505 = vunpack.c.l.b16 %v185
      %v506 = vunpack.c.h.b16 %v185
      %v507 = vunpack.c.l.b16 %v186
      %v508 = vunpack.c.l.b16 %v187
      %v509 = vunpack.c.h.b16 %v187
      %v510 = vunpack.c.l.b16 %v188
      %v511 = vunpack.c.l.b16 %v189
      %v512 = vunpack.c.h.b16 %v189
      %v513 = vunpack.c.l.b16 %v190
      %v514 = vunpack.c.l.b16 %v191
      %v515 = vunpack.c.h.b16 %v191
      %v516 = vunpack.c.l.b16 %v192
      %v517 = vunpack.c.l.b16 %v193
      %v518 = vunpack.c.h.b16 %v193
      %v519 = vunpack.c.l.b16 %v194
      %v520 = vunpack.c.l.b16 %v195
      %v521 = vunpack.c.h.b16 %v195
      %v522 = vunpack.c.l.b16 %v196
      %v523 = vunpack.c.l.b16 %v197
      %v524 = vunpack.c.h.b16 %v197
      %v525 = vunpack.c.l.b16 %v198
      %v526 = vunpack.c.l.b16 %v199
      %v527 = vunpack.c.h.b16 %v199
      %v528 = vunpack.c.l.b16 %v200
      %v529 = vunpack.c.l.b16 %v201
      %v530 = vunpack.c.h.b16 %v201
      %v531 = vunpack.c.l.b16 %v202
      %v532 = vunpack.c.l.b16 %v203
      %v533 = vunpack.c.h.b16 %v203
      %v534 = vunpack.c.l.b16 %v204
      %v535 = vunpack.c.l.b16 %v205
      %v536 = vunpack.c.h.b16 %v205
      %v537 = vunpack.c.l.b16 %v206
      %v538 = vunpack.c.l.b16 %v207
      %v539 = vunpack.c.h.b16 %v207
      %v540 = vunpack.c.l.b16 %v208
      %v541 = vunpack.c.l.b16 %v209
      %v542 = vunpack.c.h.b16 %v209
      %v543 = vunpack.c.l.b16 %v210
      %v544 = vunpack.c.l.b16 %v211
      %v545 = vunpack.c.h.b16 %v211
      %v546 = vunpack.c.l.b16 %v212
      %v547 = vunpack.c.l.b16 %v213
      %v548 = vunpack.c.h.b16 %v213
      %v549 = vunpack.c.l.b16 %v214
      %v550 = vunpack.c.l.b16 %v215
      %v551 = vunpack.c.h.b16 %v215
      %v552 = vunpack.c.l.b16 %v216
      %v553 = vunpack.c.l.b16 %v217
      %v554 = vunpack.c.h.b16 %v217
      %v555 = vunpack.c.l.b16 %v218
      %v556 = vunpack.c.l.b16 %v219
      %v557 = vunpack.c.h.b16 %v219
      %v558 = vunpack.c.l.b16 %v220
      %v559 = vunpack.c.l.b16 %v221
      %v560 = vunpack.c.h.b16 %v221
      %v561 = vunpack.c.l.b16 %v222
      %v562 = vunpack.c.l.b16 %v223
      %v563 = vunpack.c.h.b16 %v223
      %v564 = vunpack.c.l.b16 %v224
      %v565 = vunpack.c.l.b16 %v225
      %v566 = vunpack.c.h.b16 %v225
      %v567 = vunpack.c.l.b16 %v226
      %v568 = vunpack.c.l.b16 %v227
      %v569 = vunpack.c.h.b16 %v227
      %v570 = vunpack.c.l.b16 %v228
      %v571 = vunpack.c.l.b16 %v229
      %v572 = vunpack.c.h.b16 %v229
      %v573 = vunpack.c.l.b16 %v230
      %v574 = vunpack.c.l.b16 %v231
      %v575 = vunpack.c.h.b16 %v231
      %v576 = vunpack.c.l.b16 %v232
      %v577 = vunpack.c.l.b16 %v233
      %v578 = vunpack.c.h.b16 %v233
      %v579 = vunpack.c.l.b16 %v234
      %v580 = vunpack.c.l.b16 %v235
      %v581 = vunpack.c.h.b16 %v235
      %v582 = vunpack.c.l.b16 %v236
      %v583 = vunpack.c.l.b16 %v237
      %v584 = vunpack.c.h.b16 %v237
      %v585 = vunpack.c.l.b16 %v238
      %v586 = vunpack.c.l.b16 %v239
      %v587 = vunpack.c.h.b16 %v239
      %v588 = vunpack.c.l.b16 %v240
      %v589 = vunpack.c.l.b16 %v241
      %v590 = vunpack.c.h.b16 %v241
      %v591 = vunpack.c.l.b16 %v242
      %v592 = vunpack.c.l.b16 %v243
      %v593 = vunpack.c.h.b16 %v243
      %v594 = vunpack.c.l.b16 %v244
      %v595 = vunpack.c.l.b16 %v245
      %v596 = vunpack.c.h.b16 %v245
      %v597 = vunpack.c.l.b16 %v246
      %v598 = vunpack.c.l.b16 %v247
      %v599 = vunpack.c.h.b16 %v247
      %v600 = vunpack.c.l.b16 %v248
      %v601 = vunpack.c.l.b16 %v249
      %v602 = vunpack.c.h.b16 %v249
      %v603 = vunpack.c.l.b16 %v250
      %v604 = vunpack.c.l.b16 %v251
      %v605 = vunpack.c.h.b16 %v251
      %v606 = vunpack.c.l.b16 %v252
      %v607 = vunpack.c.l.b16 %v253
      %v608 = vunpack.c.h.b16 %v253
      %v609 = vunpack.c.l.b16 %v254
      %v610 = vunpack.c.l.b16 %v255
      %v611 = vunpack.c.h.b16 %v255
      %v612 = vunpack.c.l.b16 %v256
      %v613 = vunpack.c.l.b16 %v257
      %v614 = vunpack.c.h.b16 %v257
      %v615 = vunpack.c.l.b16 %v258
      %v616 = vunpack.c.l.b16 %v259
      %v617 = vunpack.c.h.b16 %v259
      %v618 = vunpack.c.l.b16 %v260
      %v619 = vunpack.c.l.b16 %v261
      %v620 = vunpack.c.h.b16 %v261
      %v621 = vunpack.c.l.b16 %v262
      %v622 = vunpack.c.l.b16 %v263
      %v623 = vunpack.c.h.b16 %v263
      %v624 = vunpack.c.l.b16 %v264
      %v625 = vunpack.c.l.b16 %v265
      %v626 = vunpack.c.h.b16 %v265
      %v627 = vunpack.c.l.b16 %v266
      %v628 = vunpack.c.l.b16 %v267
      %v629 = vunpack.c.h.b16 %v267
      %v630 = vunpack.c.l.b16 %v268
      %v631 = vunpack.c.l.b16 %v269
      %v632 = vunpack.c.h.b16 %v269
      %v633 = vunpack.c.l.b16 %v270
      %v634 = vunpack.c.l.b16 %v271
      %v635 = vunpack.c.h.b16 %v271
      %v636 = vunpack.c.l.b16 %v272
      %v637 = vunpack.c.l.b16 %v273
      %v638 = vunpack.c.h.b16 %v273
      %v639 = vunpack.c.l.b16 %v274
      %v640 = vunpack.c.l.b16 %v275
      %v641 = vunpack.c.h.b16 %v275
      %v642 = vunpack.c.l.b16 %v276
      %v643 = vunpack.c.l.b16 %v277
      %v644 = vunpack.c.h.b16 %v277
      %v645 = vunpack.c.l.b16 %v278
      %v646 = vunpack.c.l.b16 %v279
      %v647 = vunpack.c.h.b16 %v279
      %v648 = vunpack.c.l.b16 %v280
      %v649 = vpack.c.b16 %v460, %v457
      %v650 = vpack.c.b16 %v461, %v458
      %v651 = vpack.c.b16 %v462, %v459
      %v652 = vpack.c.b16 %v466, %v463
      %v653 = vpack.c.b16 %v467, %v464
      %v654 = vpack.c.b16 %v468, %v465
      %v655 = vpack.c.b16 %v472, %v469
      %v656 = vpack.c.b16 %v473, %v470
      %v657 = vpack.c.b16 %v474, %v471
      %v658 = vpack.c.b16 %v478, %v475
      %v659 = vpack.c.b16 %v479, %v476
      %v660 = vpack.c.b16 %v480, %v477
      %v661 = vpack.c.b16 %v484, %v481
      %v662 = vpack.c.b16 %v485, %v482
      %v663 = vpack.c.b16 %v486, %v483
      %v664 = vpack.c.b16 %v490, %v487
      %v665 = vpack.c.b16 %v491, %v488
      %v666 = vpack.c.b16 %v492, %v489
      %v667 = vpack.c.b16 %v496, %v493
      %v668 = vpack.c.b16 %v497, %v494
      %v669 = vpack.c.b16 %v498, %v495
      %v670 = vpack.c.b16 %v502, %v499
      %v671 = vpack.c.b16 %v503, %v500
      %v672 = vpack.c.b16 %v504, %v501
      %v673 = vpack.c.b16 %v508, %v505
      %v674 = vpack.c.b16 %v509, %v506
      %v675 = vpack.c.b16 %v510, %v507
      %v676 = vpack.c.b16 %v514, %v511
      %v677 = vpack.c.b16 %v515, %v512
      %v678 = vpack.c.b16 %v516, %v513
      %v679 = vpack.c.b16 %v520, %v517
      %v680 = vpack.c.b16 %v521, %v518
      %v681 = vpack.c.b16 %v522, %v519
      %v682 = vpack.c.b16 %v526, %v523
      %v683 = vpack.c.b16 %v527, %v524
      %v684 = vpack.c.b16 %v528, %v525
      %v685 = vpack.c.b16 %v532, %v529
      %v686 = vpack.c.b16 %v533, %v530
      %v687 = vpack.c.b16 %v534, %v531
      %v688 = vpack.c.b16 %v538, %v535
      %v689 = vpack.c.b16 %v539, %v536
      %v690 = vpack.c.b16 %v540, %v537
      %v691 = vpack.c.b16 %v544, %v541
      %v692 = vpack.c.b16 %v545, %v542
      %v693 = vpack.c.b16 %v546, %v543
      %v694 = vpack.c.b16 %v550, %v547
      %v695 = vpack.c.b16 %v551, %v548
      %v696 = vpack.c.b16 %v552, %v549
      %v697 = vpack.c.b16 %v556, %v553
      %v698 = vpack.c.b16 %v557, %v554
      %v699 = vpack.c.b16 %v558, %v555
      %v700 = vpack.c.b16 %v562, %v559
      %v701 = vpack.c.b16 %v563, %v560
      %v702 = vpack.c.b16 %v564, %v561
      %v703 = vpack.c.b16 %v568, %v565
      %v704 = vpack.c.b16 %v569, %v566
      %v705 = vpack.c.b16 %v570, %v567
      %v706 = vpack.c.b16 %v574, %v571
      %v707 = vpack.c.b16 %v575, %v572
      %v708 = vpack.c.b16 %v576, %v573
      %v709 = vpack.c.b16 %v580, %v577
      %v710 = vpack.c.b16 %v581, %v578
      %v711 = vpack.c.b16 %v582, %v579
      %v712 = vpack.c.b16 %v586, %v583
      %v713 = vpack.c.b16 %v587, %v584
      %v714 = vpack.c.b16 %v588, %v585
      %v715 = vpack.c.b16 %v592, %v589
      %v716 = vpack.c.b16 %v593, %v590
      %v717 = vpack.c.b16 %v594, %v591
      %v718 = vpack.c.b16 %v598, %v595
      %v719 = vpack.c.b16 %v599, %v596
      %v720 = vpack.c.b16 %v600, %v597
      %v721 = vpack.c.b16 %v604, %v601
      %v722 = vpack.c.b16 %v605, %v602
      %v723 = vpack.c.b16 %v606, %v603
      %v724 = vpack.c.b16 %v610, %v607
      %v725 = vpack.c.b16 %v611, %v608
      %v726 = vpack.c.b16 %v612, %v609
      %v727 = vpack.c.b16 %v616, %v613
      %v728 = vpack.c.b16 %v617, %v614
      %v729 = vpack.c.b16 %v618, %v615
      %v730 = vpack.c.b16 %v622, %v619
      %v731 = vpack.c.b16 %v623, %v620
      %v732 = vpack.c.b16 %v624, %v621
      %v733 = vpack.c.b16 %v628, %v625
      %v734 = vpack.c.b16 %v629, %v626
      %v735 = vpack.c.b16 %v630, %v627
      %v736 = vpack.c.b16 %v634, %v631
      %v737 = vpack.c.b16 %v635, %v632
      %v738 = vpack.c.b16 %v636, %v633
      %v739 = vpack.c.b16 %v640, %v637
      %v740 = vpack.c.b16 %v641, %v638
      %v741 = vpack.c.b16 %v642, %v639
      %v742 = vpack.c.b16 %v646, %v643
      %v743 = vpack.c.b16 %v647, %v644
      %v744 = vpack.c.b16 %v648, %v645
      %v889 = vunpack.c.l.b16 %v281
      %v890 = vunpack.c.h.b16 %v281
      %v891 = vunpack.c.l.b16 %v282
      %v892 = vunpack.c.h.b16 %v282
      %v893 = vunpack.c.l.b16 %v283
      %v894 = vunpack.c.h.b16 %v283
      %v895 = vunpack.c.l.b16 %v284
      %v896 = vunpack.c.h.b16 %v284
      %v897 = vunpack.c.l.b16 %v285
      %v898 = vunpack.c.h.b16 %v285
      %v899 = vunpack.c.l.b16 %v286
      %v900 = vunpack.c.h.b16 %v286
      %v901 = vunpack.c.l.b16 %v287
      %v902 = vunpack.c.h.b16 %v287
      %v903 = vunpack.c.l.b16 %v288
      %v904 = vunpack.c.h.b16 %v288
      %v905 = vunpack.c.l.b16 %v289
      %v906 = vunpack.c.h.b16 %v289
      %v907 = vunpack.c.l.b16 %v290
      %v908 = vunpack.c.h.b16 %v290
      %v909 = vunpack.c.l.b16 %v291
      %v910 = vunpack.c.h.b16 %v291
      %v911 = vunpack.c.l.b16 %v292
      %v912 = vunpack.c.h.b16 %v292
      %v913 = vunpack.c.l.b16 %v293
      %v914 = vunpack.c.h.b16 %v293
      %v915 = vunpack.c.l.b16 %v294
      %v916 = vunpack.c.h.b16 %v294
      %v917 = vunpack.c.l.b16 %v295
      %v918 = vunpack.c.h.b16 %v295
      %v919 = vunpack.c.l.b16 %v296
      %v920 = vunpack.c.h.b16 %v296
      %v921 = vunpack.c.l.b16 %v297
      %v922 = vunpack.c.h.b16 %v297
      %v923 = vunpack.c.l.b16 %v298
      %v924 = vunpack.c.h.b16 %v298
      %v925 = vunpack.c.l.b16 %v299
      %v926 = vunpack.c.h.b16 %v299
      %v927 = vunpack.c.l.b16 %v300
      %v928 = vunpack.c.h.b16 %v300
      %v929 = vunpack.c.l.b16 %v301
      %v930 = vunpack.c.h.b16 %v301
      %v931 = vunpack.c.l.b16 %v302
      %v932 = vunpack.c.h.b16 %v302
      %v933 = vunpack.c.l.b16 %v303
      %v934 = vunpack.c.h.b16 %v303
      %v935 = vunpack.c.l.b16 %v304
      %v936 = vunpack.c.h.b16 %v304
      %v937 = vunpack.c.l.b16 %v305
      %v938 = vunpack.c.h.b16 %v305
      %v939 = vunpack.c.l.b16 %v306
      %v940 = vunpack.c.h.b16 %v306
      %v941 = vunpack.c.l.b16 %v307
      %v942 = vunpack.c.h.b16 %v307
      %v943 = vunpack.c.l.b16 %v308
      %v944 = vunpack.c.h.b16 %v308
      %v945 = vunpack.c.l.b16 %v309
      %v946 = vunpack.c.h.b16 %v309
      %v947 = vunpack.c.l.b16 %v310
      %v948 = vunpack.c.h.b16 %v310
      %v949 = vunpack.c.l.b16 %v311
      %v950 = vunpack.c.h.b16 %v311
      %v951 = vunpack.c.l.b16 %v312
      %v952 = vunpack.c.h.b16 %v312
      %v953 = vunpack.c.l.b16 %v313
      %v954 = vunpack.c.h.b16 %v313
      %v955 = vunpack.c.l.b16 %v314
      %v956 = vunpack.c.h.b16 %v314
      %v957 = vunpack.c.l.b16 %v315
      %v958 = vunpack.c.h.b16 %v315
      %v959 = vunpack.c.l.b16 %v316
      %v960 = vunpack.c.h.b16 %v316
      %v961 = vunpack.c.l.b16 %v317
      %v962 = vunpack.c.h.b16 %v317
      %v963 = vunpack.c.l.b16 %v318
      %v964 = vunpack.c.h.b16 %v318
      %v965 = vunpack.c.l.b16 %v319
      %v966 = vunpack.c.h.b16 %v319
      %v967 = vunpack.c.l.b16 %v320
      %v968 = vunpack.c.h.b16 %v320
      %v969 = vunpack.c.l.b16 %v321
      %v970 = vunpack.c.h.b16 %v321
      %v971 = vunpack.c.l.b16 %v322
      %v972 = vunpack.c.h.b16 %v322
      %v973 = vunpack.c.l.b16 %v323
      %v974 = vunpack.c.h.b16 %v323
      %v975 = vunpack.c.l.b16 %v324
      %v976 = vunpack.c.h.b16 %v324
      %v977 = vunpack.c.l.b16 %v325
      %v978 = vunpack.c.h.b16 %v325
      %v979 = vunpack.c.l.b16 %v326
      %v980 = vunpack.c.h.b16 %v326
      %v981 = vunpack.c.l.b16 %v327
      %v982 = vunpack.c.h.b16 %v327
      %v983 = vunpack.c.l.b16 %v328
      %v984 = vunpack.c.h.b16 %v328
      %v985 = vpack.c.b16 %v891, %v889
      %v986 = vpack.c.b16 %v892, %v890
      %v987 = vpack.c.b16 %v895, %v893
      %v988 = vpack.c.b16 %v896, %v894
      %v989 = vpack.c.b16 %v899, %v897
      %v990 = vpack.c.b16 %v900, %v898
      %v991 = vpack.c.b16 %v903, %v901
      %v992 = vpack.c.b16 %v904, %v902
      %v993 = vpack.c.b16 %v907, %v905
      %v994 = vpack.c.b16 %v908, %v906
      %v995 = vpack.c.b16 %v911, %v909
      %v996 = vpack.c.b16 %v912, %v910
      %v997 = vpack.c.b16 %v915, %v913
      %v998 = vpack.c.b16 %v916, %v914
      %v999 = vpack.c.b16 %v919, %v917
      %v1000 = vpack.c.b16 %v920, %v918
      %v1001 = vpack.c.b16 %v923, %v921
      %v1002 = vpack.c.b16 %v924, %v922
      %v1003 = vpack.c.b16 %v927, %v925
      %v1004 = vpack.c.b16 %v928, %v926
      %v1005 = vpack.c.b16 %v931, %v929
      %v1006 = vpack.c.b16 %v932, %v930
      %v1007 = vpack.c.b16 %v935, %v933
      %v1008 = vpack.c.b16 %v936, %v934
      %v1009 = vpack.c.b16 %v939, %v937
      %v1010 = vpack.c.b16 %v940, %v938
      %v1011 = vpack.c.b16 %v943, %v941
      %v1012 = vpack.c.b16 %v944, %v942
      %v1013 = vpack.c.b16 %v947, %v945
      %v1014 = vpack.c.b16 %v948, %v946
      %v1015 = vpack.c.b16 %v951, %v949
      %v1016 = vpack.c.b16 %v952, %v950
      %v1017 = vpack.c.b16 %v955, %v953
      %v1018 = vpack.c.b16 %v956, %v954
      %v1019 = vpack.c.b16 %v959, %v957
      %v1020 = vpack.c.b16 %v960, %v958
      %v1021 = vpack.c.b16 %v963, %v961
      %v1022 = vpack.c.b16 %v964, %v962
      %v1023 = vpack.c.b16 %v967, %v965
      %v1024 = vpack.c.b16 %v968, %v966
      %v1025 = vpack.c.b16 %v971, %v969
      %v1026 = vpack.c.b16 %v972, %v970
      %v1027 = vpack.c.b16 %v975, %v973
      %v1028 = vpack.c.b16 %v976, %v974
      %v1029 = vpack.c.b16 %v979, %v977
      %v1030 = vpack.c.b16 %v980, %v978
      %v1031 = vpack.c.b16 %v983, %v981
      %v1032 = vpack.c.b16 %v984, %v982
      %1081 = vmatprep.subr.bf16.mxu0 %v986
      %1082 = vmatpush1.bf16.msra.mxu0 %v985
      %1083 = vmatprep.subr.bf16.mxu0 %v988
      %1084 = vmatpush1.bf16.msra.mxu0 %v987
      %1085 = vmatprep.subr.bf16.mxu0 %v990
      %1086 = vmatpush1.bf16.msra.mxu0 %v989
      %1087 = vmatprep.subr.bf16.mxu0 %v992
      %1088 = vmatpush1.bf16.msra.mxu0 %v991
      %1089 = vmatprep.subr.bf16.mxu0 %v994
      %1090 = vmatpush1.bf16.msra.mxu0 %v993
      %1091 = vmatprep.subr.bf16.mxu0 %v996
      %1092 = vmatpush1.bf16.msra.mxu0 %v995
      %1093 = vmatprep.subr.bf16.mxu0 %v998
      %1094 = vmatpush1.bf16.msra.mxu0 %v997
      %1095 = vmatprep.subr.bf16.mxu0 %v1000
      %1096 = vmatpush1.bf16.msra.mxu0 %v999
      %1097 = vmatprep.subr.bf16.mxu0 %v1002
      %1098 = vmatpush1.bf16.msra.mxu0 %v1001
      %1099 = vmatprep.subr.bf16.mxu0 %v1004
      %1100 = vmatpush1.bf16.msra.mxu0 %v1003
      %1101 = vmatprep.subr.bf16.mxu0 %v1006
      %1102 = vmatpush1.bf16.msra.mxu0 %v1005
      %1103 = vmatprep.subr.bf16.mxu0 %v1008
      %1104 = vmatpush1.bf16.msra.mxu0 %v1007
      %1105 = vmatprep.subr.bf16.mxu0 %v1010
      %1106 = vmatpush1.bf16.msra.mxu0 %v1009
      %1107 = vmatprep.subr.bf16.mxu0 %v1012
      %1108 = vmatpush1.bf16.msra.mxu0 %v1011
      %1109 = vmatprep.subr.bf16.mxu0 %v1014
      %1110 = vmatpush1.bf16.msra.mxu0 %v1013
      %1111 = vmatprep.subr.bf16.mxu0 %v1016
      %1112 = vmatpush1.bf16.msra.mxu0 %v1015
      %1113 = vmatprep.mubr.bf16.mxu0 %v650
      %1114 = vmatmul.mubr.bf16.gmra.mrb[0].mxu0 %v649
      %v1115 = vpop.f32.mrb[0].mxu0
      %v1116 = vadd.f32 0.0, %v1115
      %v1117 = vpop.f32.mrb[0].mxu0
      %v1118 = vadd.f32 0.0, %v1117
      %v1119 = vpop.f32.mrb[0].mxu0
      %v1120 = vadd.f32 0.0, %v1119
      %v1121 = vpop.f32.mrb[0].mxu0
      %v1122 = vadd.f32 0.0, %v1121
      %1123 = vmatprep.mubr.bf16.mxu0 %v653
      %1124 = vmatmul.mubr.bf16.gmra.mrb[0].mxu0 %v652
      %v1125 = vpop.f32.mrb[0].mxu0
      %v1126 = vadd.f32 0.0, %v1125
      %v1127 = vpop.f32.mrb[0].mxu0
      %v1128 = vadd.f32 0.0, %v1127
      %v1129 = vpop.f32.mrb[0].mxu0
      %v1130 = vadd.f32 0.0, %v1129
      %v1131 = vpop.f32.mrb[0].mxu0
      %v1132 = vadd.f32 0.0, %v1131
      %1133 = vmatprep.mubr.bf16.mxu0 %v656
      %1134 = vmatmul.mubr.bf16.gmra.mrb[0].mxu0 %v655
      %v1135 = vpop.f32.mrb[0].mxu0
      %v1136 = vadd.f32 0.0, %v1135
      %v1137 = vpop.f32.mrb[0].mxu0
      %v1138 = vadd.f32 0.0, %v1137
      %v1139 = vpop.f32.mrb[0].mxu0
      %v1140 = vadd.f32 0.0, %v1139
      %v1141 = vpop.f32.mrb[0].mxu0
      %v1142 = vadd.f32 0.0, %v1141
      %1143 = vmatprep.mubr.bf16.mxu0 %v659
      %1144 = vmatmul.mubr.bf16.gmra.mrb[0].mxu0 %v658
      %v1145 = vpop.f32.mrb[0].mxu0
      %v1146 = vadd.f32 0.0, %v1145
      %v1147 = vpop.f32.mrb[0].mxu0
      %v1148 = vadd.f32 0.0, %v1147
      %v1149 = vpop.f32.mrb[0].mxu0
      %v1150 = vadd.f32 0.0, %v1149
      %v1151 = vpop.f32.mrb[0].mxu0
      %v1152 = vadd.f32 0.0, %v1151
      %1153 = vmatprep.mubr.bf16.mxu0 %v662
      %1154 = vmatmul.mubr.bf16.gmra.mrb[0].mxu0 %v661
      %v1155 = vpop.f32.mrb[0].mxu0
      %v1156 = vadd.f32 0.0, %v1155
      %v1157 = vpop.f32.mrb[0].mxu0
      %v1158 = vadd.f32 0.0, %v1157
      %v1159 = vpop.f32.mrb[0].mxu0
      %v1160 = vadd.f32 0.0, %v1159
      %v1161 = vpop.f32.mrb[0].mxu0
      %v1162 = vadd.f32 0.0, %v1161
      %1163 = vmatprep.mubr.bf16.mxu0 %v665
      %1164 = vmatmul.mubr.bf16.gmra.mrb[0].mxu0 %v664
      %v1165 = vpop.f32.mrb[0].mxu0
      %v1166 = vadd.f32 0.0, %v1165
      %v1167 = vpop.f32.mrb[0].mxu0
      %v1168 = vadd.f32 0.0, %v1167
      %v1169 = vpop.f32.mrb[0].mxu0
      %v1170 = vadd.f32 0.0, %v1169
      %v1171 = vpop.f32.mrb[0].mxu0
      %v1172 = vadd.f32 0.0, %v1171
      %1173 = vmatprep.mubr.bf16.mxu0 %v668
      %1174 = vmatmul.mubr.bf16.gmra.mrb[0].mxu0 %v667
      %v1175 = vpop.f32.mrb[0].mxu0
      %v1176 = vadd.f32 0.0, %v1175
      %v1177 = vpop.f32.mrb[0].mxu0
      %v1178 = vadd.f32 0.0, %v1177
      %v1179 = vpop.f32.mrb[0].mxu0
      %v1180 = vadd.f32 0.0, %v1179
      %v1181 = vpop.f32.mrb[0].mxu0
      %v1182 = vadd.f32 0.0, %v1181
      %1183 = vmatprep.mubr.bf16.mxu0 %v671
      %1184 = vmatmul.mubr.bf16.gmra.mrb[0].mxu0 %v670
      %v1185 = vpop.f32.mrb[0].mxu0
      %v1186 = vadd.f32 0.0, %v1185
      %v1187 = vpop.f32.mrb[0].mxu0
      %v1188 = vadd.f32 0.0, %v1187
      %v1189 = vpop.f32.mrb[0].mxu0
      %v1190 = vadd.f32 0.0, %v1189
      %v1191 = vpop.f32.mrb[0].mxu0
      %v1192 = vadd.f32 0.0, %v1191
      %1193 = vmatprep.mubr.bf16.mxu0 %v674
      %1194 = vmatmul.mubr.bf16.gmra.mrb[0].mxu0 %v673
      %v1195 = vpop.f32.mrb[0].mxu0
      %v1196 = vadd.f32 0.0, %v1195
      %v1197 = vpop.f32.mrb[0].mxu0
      %v1198 = vadd.f32 0.0, %v1197
      %v1199 = vpop.f32.mrb[0].mxu0
      %v1200 = vadd.f32 0.0, %v1199
      %v1201 = vpop.f32.mrb[0].mxu0
      %v1202 = vadd.f32 0.0, %v1201
      %1203 = vmatprep.mubr.bf16.mxu0 %v677
      %1204 = vmatmul.mubr.bf16.gmra.mrb[0].mxu0 %v676
      %v1205 = vpop.f32.mrb[0].mxu0
      %v1206 = vadd.f32 0.0, %v1205
      %v1207 = vpop.f32.mrb[0].mxu0
      %v1208 = vadd.f32 0.0, %v1207
      %v1209 = vpop.f32.mrb[0].mxu0
      %v1210 = vadd.f32 0.0, %v1209
      %v1211 = vpop.f32.mrb[0].mxu0
      %v1212 = vadd.f32 0.0, %v1211
      %1213 = vmatprep.mubr.bf16.mxu0 %v680
      %1214 = vmatmul.mubr.bf16.gmra.mrb[0].mxu0 %v679
      %v1215 = vpop.f32.mrb[0].mxu0
      %v1216 = vadd.f32 0.0, %v1215
      %v1217 = vpop.f32.mrb[0].mxu0
      %v1218 = vadd.f32 0.0, %v1217
      %v1219 = vpop.f32.mrb[0].mxu0
      %v1220 = vadd.f32 0.0, %v1219
      %v1221 = vpop.f32.mrb[0].mxu0
      %v1222 = vadd.f32 0.0, %v1221
      %1223 = vmatprep.mubr.bf16.mxu0 %v683
      %1224 = vmatmul.mubr.bf16.gmra.mrb[0].mxu0 %v682
      %v1225 = vpop.f32.mrb[0].mxu0
      %v1226 = vadd.f32 0.0, %v1225
      %v1227 = vpop.f32.mrb[0].mxu0
      %v1228 = vadd.f32 0.0, %v1227
      %v1229 = vpop.f32.mrb[0].mxu0
      %v1230 = vadd.f32 0.0, %v1229
      %v1231 = vpop.f32.mrb[0].mxu0
      %v1232 = vadd.f32 0.0, %v1231
      %1233 = vmatprep.mubr.bf16.mxu0 %v686
      %1234 = vmatmul.mubr.bf16.gmra.mrb[0].mxu0 %v685
      %v1235 = vpop.f32.mrb[0].mxu0
      %v1236 = vadd.f32 0.0, %v1235
      %v1237 = vpop.f32.mrb[0].mxu0
      %v1238 = vadd.f32 0.0, %v1237
      %v1239 = vpop.f32.mrb[0].mxu0
      %v1240 = vadd.f32 0.0, %v1239
      %v1241 = vpop.f32.mrb[0].mxu0
      %v1242 = vadd.f32 0.0, %v1241
      %1243 = vmatprep.mubr.bf16.mxu0 %v689
      %1244 = vmatmul.mubr.bf16.gmra.mrb[0].mxu0 %v688
      %v1245 = vpop.f32.mrb[0].mxu0
      %v1246 = vadd.f32 0.0, %v1245
      %v1247 = vpop.f32.mrb[0].mxu0
      %v1248 = vadd.f32 0.0, %v1247
      %v1249 = vpop.f32.mrb[0].mxu0
      %v1250 = vadd.f32 0.0, %v1249
      %v1251 = vpop.f32.mrb[0].mxu0
      %v1252 = vadd.f32 0.0, %v1251
      %1253 = vmatprep.mubr.bf16.mxu0 %v692
      %1254 = vmatmul.mubr.bf16.gmra.mrb[0].mxu0 %v691
      %v1255 = vpop.f32.mrb[0].mxu0
      %v1256 = vadd.f32 0.0, %v1255
      %v1257 = vpop.f32.mrb[0].mxu0
      %v1258 = vadd.f32 0.0, %v1257
      %v1259 = vpop.f32.mrb[0].mxu0
      %v1260 = vadd.f32 0.0, %v1259
      %v1261 = vpop.f32.mrb[0].mxu0
      %v1262 = vadd.f32 0.0, %v1261
      %1263 = vmatprep.mubr.bf16.mxu0 %v695
      %1264 = vmatmul.mubr.bf16.gmra.mrb[0].mxu0 %v694
      %v1265 = vpop.f32.mrb[0].mxu0
      %v1266 = vadd.f32 0.0, %v1265
      %v1267 = vpop.f32.mrb[0].mxu0
      %v1268 = vadd.f32 0.0, %v1267
      %v1269 = vpop.f32.mrb[0].mxu0
      %v1270 = vadd.f32 0.0, %v1269
      %v1271 = vpop.f32.mrb[0].mxu0
      %v1272 = vadd.f32 0.0, %v1271
      %1273 = vmatprep.mubr.bf16.mxu0 %v698
      %1274 = vmatmul.mubr.bf16.gmra.mrb[0].mxu0 %v697
      %v1275 = vpop.f32.mrb[0].mxu0
      %v1276 = vadd.f32 0.0, %v1275
      %v1277 = vpop.f32.mrb[0].mxu0
      %v1278 = vadd.f32 0.0, %v1277
      %v1279 = vpop.f32.mrb[0].mxu0
      %v1280 = vadd.f32 0.0, %v1279
      %v1281 = vpop.f32.mrb[0].mxu0
      %v1282 = vadd.f32 0.0, %v1281
      %1283 = vmatprep.mubr.bf16.mxu0 %v701
      %1284 = vmatmul.mubr.bf16.gmra.mrb[0].mxu0 %v700
      %v1285 = vpop.f32.mrb[0].mxu0
      %v1286 = vadd.f32 0.0, %v1285
      %v1287 = vpop.f32.mrb[0].mxu0
      %v1288 = vadd.f32 0.0, %v1287
      %v1289 = vpop.f32.mrb[0].mxu0
      %v1290 = vadd.f32 0.0, %v1289
      %v1291 = vpop.f32.mrb[0].mxu0
      %v1292 = vadd.f32 0.0, %v1291
      %1293 = vmatprep.mubr.bf16.mxu0 %v704
      %1294 = vmatmul.mubr.bf16.gmra.mrb[0].mxu0 %v703
      %v1295 = vpop.f32.mrb[0].mxu0
      %v1296 = vadd.f32 0.0, %v1295
      %v1297 = vpop.f32.mrb[0].mxu0
      %v1298 = vadd.f32 0.0, %v1297
      %v1299 = vpop.f32.mrb[0].mxu0
      %v1300 = vadd.f32 0.0, %v1299
      %v1301 = vpop.f32.mrb[0].mxu0
      %v1302 = vadd.f32 0.0, %v1301
      %1303 = vmatprep.mubr.bf16.mxu0 %v707
      %1304 = vmatmul.mubr.bf16.gmra.mrb[0].mxu0 %v706
      %v1305 = vpop.f32.mrb[0].mxu0
      %v1306 = vadd.f32 0.0, %v1305
      %v1307 = vpop.f32.mrb[0].mxu0
      %v1308 = vadd.f32 0.0, %v1307
      %v1309 = vpop.f32.mrb[0].mxu0
      %v1310 = vadd.f32 0.0, %v1309
      %v1311 = vpop.f32.mrb[0].mxu0
      %v1312 = vadd.f32 0.0, %v1311
      %1313 = vmatprep.mubr.bf16.mxu0 %v710
      %1314 = vmatmul.mubr.bf16.gmra.mrb[0].mxu0 %v709
      %v1315 = vpop.f32.mrb[0].mxu0
      %v1316 = vadd.f32 0.0, %v1315
      %v1317 = vpop.f32.mrb[0].mxu0
      %v1318 = vadd.f32 0.0, %v1317
      %v1319 = vpop.f32.mrb[0].mxu0
      %v1320 = vadd.f32 0.0, %v1319
      %v1321 = vpop.f32.mrb[0].mxu0
      %v1322 = vadd.f32 0.0, %v1321
      %1323 = vmatprep.mubr.bf16.mxu0 %v713
      %1324 = vmatmul.mubr.bf16.gmra.mrb[0].mxu0 %v712
      %v1325 = vpop.f32.mrb[0].mxu0
      %v1326 = vadd.f32 0.0, %v1325
      %v1327 = vpop.f32.mrb[0].mxu0
      %v1328 = vadd.f32 0.0, %v1327
      %v1329 = vpop.f32.mrb[0].mxu0
      %v1330 = vadd.f32 0.0, %v1329
      %v1331 = vpop.f32.mrb[0].mxu0
      %v1332 = vadd.f32 0.0, %v1331
      %1333 = vmatprep.mubr.bf16.mxu0 %v716
      %1334 = vmatmul.mubr.bf16.gmra.mrb[0].mxu0 %v715
      %v1335 = vpop.f32.mrb[0].mxu0
      %v1336 = vadd.f32 0.0, %v1335
      %v1337 = vpop.f32.mrb[0].mxu0
      %v1338 = vadd.f32 0.0, %v1337
      %v1339 = vpop.f32.mrb[0].mxu0
      %v1340 = vadd.f32 0.0, %v1339
      %v1341 = vpop.f32.mrb[0].mxu0
      %v1342 = vadd.f32 0.0, %v1341
      %1343 = vmatprep.mubr.bf16.mxu0 %v719
      %1344 = vmatmul.mubr.bf16.gmra.mrb[0].mxu0 %v718
      %v1345 = vpop.f32.mrb[0].mxu0
      %v1346 = vadd.f32 0.0, %v1345
      %v1347 = vpop.f32.mrb[0].mxu0
      %v1348 = vadd.f32 0.0, %v1347
      %v1349 = vpop.f32.mrb[0].mxu0
      %v1350 = vadd.f32 0.0, %v1349
      %v1351 = vpop.f32.mrb[0].mxu0
      %v1352 = vadd.f32 0.0, %v1351
      %1353 = vmatprep.mubr.bf16.mxu0 %v722
      %1354 = vmatmul.mubr.bf16.gmra.mrb[0].mxu0 %v721
      %v1355 = vpop.f32.mrb[0].mxu0
      %v1356 = vadd.f32 0.0, %v1355
      %v1357 = vpop.f32.mrb[0].mxu0
      %v1358 = vadd.f32 0.0, %v1357
      %v1359 = vpop.f32.mrb[0].mxu0
      %v1360 = vadd.f32 0.0, %v1359
      %v1361 = vpop.f32.mrb[0].mxu0
      %v1362 = vadd.f32 0.0, %v1361
      %1363 = vmatprep.mubr.bf16.mxu0 %v725
      %1364 = vmatmul.mubr.bf16.gmra.mrb[0].mxu0 %v724
      %v1365 = vpop.f32.mrb[0].mxu0
      %v1366 = vadd.f32 0.0, %v1365
      %v1367 = vpop.f32.mrb[0].mxu0
      %v1368 = vadd.f32 0.0, %v1367
      %v1369 = vpop.f32.mrb[0].mxu0
      %v1370 = vadd.f32 0.0, %v1369
      %v1371 = vpop.f32.mrb[0].mxu0
      %v1372 = vadd.f32 0.0, %v1371
      %1373 = vmatprep.mubr.bf16.mxu0 %v728
      %1374 = vmatmul.mubr.bf16.gmra.mrb[0].mxu0 %v727
      %v1375 = vpop.f32.mrb[0].mxu0
      %v1376 = vadd.f32 0.0, %v1375
      %v1377 = vpop.f32.mrb[0].mxu0
      %v1378 = vadd.f32 0.0, %v1377
      %v1379 = vpop.f32.mrb[0].mxu0
      %v1380 = vadd.f32 0.0, %v1379
      %v1381 = vpop.f32.mrb[0].mxu0
      %v1382 = vadd.f32 0.0, %v1381
      %1383 = vmatprep.mubr.bf16.mxu0 %v731
      %1384 = vmatmul.mubr.bf16.gmra.mrb[0].mxu0 %v730
      %v1385 = vpop.f32.mrb[0].mxu0
      %v1386 = vadd.f32 0.0, %v1385
      %v1387 = vpop.f32.mrb[0].mxu0
      %v1388 = vadd.f32 0.0, %v1387
      %v1389 = vpop.f32.mrb[0].mxu0
      %v1390 = vadd.f32 0.0, %v1389
      %v1391 = vpop.f32.mrb[0].mxu0
      %v1392 = vadd.f32 0.0, %v1391
      %1393 = vmatprep.mubr.bf16.mxu0 %v734
      %1394 = vmatmul.mubr.bf16.gmra.mrb[0].mxu0 %v733
      %v1395 = vpop.f32.mrb[0].mxu0
      %v1396 = vadd.f32 0.0, %v1395
      %v1397 = vpop.f32.mrb[0].mxu0
      %v1398 = vadd.f32 0.0, %v1397
      %v1399 = vpop.f32.mrb[0].mxu0
      %v1400 = vadd.f32 0.0, %v1399
      %v1401 = vpop.f32.mrb[0].mxu0
      %v1402 = vadd.f32 0.0, %v1401
      %1403 = vmatprep.mubr.bf16.mxu0 %v737
      %1404 = vmatmul.mubr.bf16.gmra.mrb[0].mxu0 %v736
      %v1405 = vpop.f32.mrb[0].mxu0
      %v1406 = vadd.f32 0.0, %v1405
      %v1407 = vpop.f32.mrb[0].mxu0
      %v1408 = vadd.f32 0.0, %v1407
      %v1409 = vpop.f32.mrb[0].mxu0
      %v1410 = vadd.f32 0.0, %v1409
      %v1411 = vpop.f32.mrb[0].mxu0
      %v1412 = vadd.f32 0.0, %v1411
      %1413 = vmatprep.mubr.bf16.mxu0 %v740
      %1414 = vmatmul.mubr.bf16.gmra.mrb[0].mxu0 %v739
      %v1415 = vpop.f32.mrb[0].mxu0
      %v1416 = vadd.f32 0.0, %v1415
      %v1417 = vpop.f32.mrb[0].mxu0
      %v1418 = vadd.f32 0.0, %v1417
      %v1419 = vpop.f32.mrb[0].mxu0
      %v1420 = vadd.f32 0.0, %v1419
      %v1421 = vpop.f32.mrb[0].mxu0
      %v1422 = vadd.f32 0.0, %v1421
      %1423 = vmatprep.mubr.bf16.mxu0 %v743
      %1424 = vmatmul.mubr.bf16.gmra.mrb[0].mxu0 %v742
      %v1425 = vpop.f32.mrb[0].mxu0
      %v1426 = vadd.f32 0.0, %v1425
      %v1427 = vpop.f32.mrb[0].mxu0
      %v1428 = vadd.f32 0.0, %v1427
      %v1429 = vpop.f32.mrb[0].mxu0
      %v1430 = vadd.f32 0.0, %v1429
      %v1431 = vpop.f32.mrb[0].mxu0
      %v1432 = vadd.f32 0.0, %v1431
      %1433 = vdwg.mxu0
      %1434 = vmatprep.subr.bf16.mxu0 %v1018
      %1435 = vmatpush1.bf16.msra.mxu0 %v1017
      %1436 = vmatprep.subr.bf16.mxu0 %v1020
      %1437 = vmatpush1.bf16.msra.mxu0 %v1019
      %1438 = vmatprep.subr.bf16.mxu0 %v1022
      %1439 = vmatpush1.bf16.msra.mxu0 %v1021
      %1440 = vmatprep.subr.bf16.mxu0 %v1024
      %1441 = vmatpush1.bf16.msra.mxu0 %v1023
      %1442 = vmatprep.subr.bf16.mxu0 %v1026
      %1443 = vmatpush1.bf16.msra.mxu0 %v1025
      %1444 = vmatprep.subr.bf16.mxu0 %v1028
      %1445 = vmatpush1.bf16.msra.mxu0 %v1027
      %1446 = vmatprep.subr.bf16.mxu0 %v1030
      %1447 = vmatpush1.bf16.msra.mxu0 %v1029
      %1448 = vmatprep.subr.bf16.mxu0 %v1032
      %1449 = vmatpush1.bf16.msra.mxu0 %v1031
      %1450 = vmatprep.subr.bf16.mxu0 0
      %1451 = vmatpush1.bf16.msra.mxu0 0
      %1452 = vmatprep.subr.bf16.mxu0 0
      %1453 = vmatpush1.bf16.msra.mxu0 0
      %1454 = vmatprep.subr.bf16.mxu0 0
      %1455 = vmatpush1.bf16.msra.mxu0 0
      %1456 = vmatprep.subr.bf16.mxu0 0
      %1457 = vmatpush1.bf16.msra.mxu0 0
      %1458 = vmatprep.subr.bf16.mxu0 0
      %1459 = vmatpush1.bf16.msra.mxu0 0
      %1460 = vmatprep.subr.bf16.mxu0 0
      %1461 = vmatpush1.bf16.msra.mxu0 0
      %1462 = vmatprep.subr.bf16.mxu0 0
      %1463 = vmatpush1.bf16.msra.mxu0 0
      %1464 = vmatprep.subr.bf16.mxu0 0
      %1465 = vmatpush1.bf16.msra.mxu0 0
      %1466 = vmatprep.mubr.bf16.mxu0 0
      %1467 = vmatmul.mubr.bf16.gmra.mrb[0].mxu0 %v651
      %v1468 = vpop.f32.mrb[0].mxu0
      %v1469 = vadd.f32 %v1116, %v1468
      %v1470 = vpop.f32.mrb[0].mxu0
      %v1471 = vadd.f32 %v1118, %v1470
      %v1472 = vpop.f32.mrb[0].mxu0
      %v1473 = vadd.f32 %v1120, %v1472
      %v1474 = vpop.f32.mrb[0].mxu0
      %v1475 = vadd.f32 %v1122, %v1474
      %1476 = vmatprep.mubr.bf16.mxu0 0
      %1477 = vmatmul.mubr.bf16.gmra.mrb[0].mxu0 %v654
      %v1478 = vpop.f32.mrb[0].mxu0
      %v1479 = vadd.f32 %v1126, %v1478
      %v1480 = vpop.f32.mrb[0].mxu0
      %v1481 = vadd.f32 %v1128, %v1480
      %v1482 = vpop.f32.mrb[0].mxu0
      %v1483 = vadd.f32 %v1130, %v1482
      %v1484 = vpop.f32.mrb[0].mxu0
      %v1485 = vadd.f32 %v1132, %v1484
      %1486 = vmatprep.mubr.bf16.mxu0 0
      %1487 = vmatmul.mubr.bf16.gmra.mrb[0].mxu0 %v657
      %v1488 = vpop.f32.mrb[0].mxu0
      %v1489 = vadd.f32 %v1136, %v1488
      %v1490 = vpop.f32.mrb[0].mxu0
      %v1491 = vadd.f32 %v1138, %v1490
      %v1492 = vpop.f32.mrb[0].mxu0
      %v1493 = vadd.f32 %v1140, %v1492
      %v1494 = vpop.f32.mrb[0].mxu0
      %v1495 = vadd.f32 %v1142, %v1494
      %1496 = vmatprep.mubr.bf16.mxu0 0
      %1497 = vmatmul.mubr.bf16.gmra.mrb[0].mxu0 %v660
      %v1498 = vpop.f32.mrb[0].mxu0
      %v1499 = vadd.f32 %v1146, %v1498
      %v1500 = vpop.f32.mrb[0].mxu0
      %v1501 = vadd.f32 %v1148, %v1500
      %v1502 = vpop.f32.mrb[0].mxu0
      %v1503 = vadd.f32 %v1150, %v1502
      %v1504 = vpop.f32.mrb[0].mxu0
      %v1505 = vadd.f32 %v1152, %v1504
      %1506 = vmatprep.mubr.bf16.mxu0 0
      %1507 = vmatmul.mubr.bf16.gmra.mrb[0].mxu0 %v663
      %v1508 = vpop.f32.mrb[0].mxu0
      %v1509 = vadd.f32 %v1156, %v1508
      %v1510 = vpop.f32.mrb[0].mxu0
      %v1511 = vadd.f32 %v1158, %v1510
      %v1512 = vpop.f32.mrb[0].mxu0
      %v1513 = vadd.f32 %v1160, %v1512
      %v1514 = vpop.f32.mrb[0].mxu0
      %v1515 = vadd.f32 %v1162, %v1514
      %1516 = vmatprep.mubr.bf16.mxu0 0
      %1517 = vmatmul.mubr.bf16.gmra.mrb[0].mxu0 %v666
      %v1518 = vpop.f32.mrb[0].mxu0
      %v1519 = vadd.f32 %v1166, %v1518
      %v1520 = vpop.f32.mrb[0].mxu0
      %v1521 = vadd.f32 %v1168, %v1520
      %v1522 = vpop.f32.mrb[0].mxu0
      %v1523 = vadd.f32 %v1170, %v1522
      %v1524 = vpop.f32.mrb[0].mxu0
      %v1525 = vadd.f32 %v1172, %v1524
      %1526 = vmatprep.mubr.bf16.mxu0 0
      %1527 = vmatmul.mubr.bf16.gmra.mrb[0].mxu0 %v669
      %v1528 = vpop.f32.mrb[0].mxu0
      %v1529 = vadd.f32 %v1176, %v1528
      %v1530 = vpop.f32.mrb[0].mxu0
      %v1531 = vadd.f32 %v1178, %v1530
      %v1532 = vpop.f32.mrb[0].mxu0
      %v1533 = vadd.f32 %v1180, %v1532
      %v1534 = vpop.f32.mrb[0].mxu0
      %v1535 = vadd.f32 %v1182, %v1534
      %1536 = vmatprep.mubr.bf16.mxu0 0
      %1537 = vmatmul.mubr.bf16.gmra.mrb[0].mxu0 %v672
      %v1538 = vpop.f32.mrb[0].mxu0
      %v1539 = vadd.f32 %v1186, %v1538
      %v1540 = vpop.f32.mrb[0].mxu0
      %v1541 = vadd.f32 %v1188, %v1540
      %v1542 = vpop.f32.mrb[0].mxu0
      %v1543 = vadd.f32 %v1190, %v1542
      %v1544 = vpop.f32.mrb[0].mxu0
      %v1545 = vadd.f32 %v1192, %v1544
      %1546 = vmatprep.mubr.bf16.mxu0 0
      %1547 = vmatmul.mubr.bf16.gmra.mrb[0].mxu0 %v675
      %v1548 = vpop.f32.mrb[0].mxu0
      %v1549 = vadd.f32 %v1196, %v1548
      %v1550 = vpop.f32.mrb[0].mxu0
      %v1551 = vadd.f32 %v1198, %v1550
      %v1552 = vpop.f32.mrb[0].mxu0
      %v1553 = vadd.f32 %v1200, %v1552
      %v1554 = vpop.f32.mrb[0].mxu0
      %v1555 = vadd.f32 %v1202, %v1554
      %1556 = vmatprep.mubr.bf16.mxu0 0
      %1557 = vmatmul.mubr.bf16.gmra.mrb[0].mxu0 %v678
      %v1558 = vpop.f32.mrb[0].mxu0
      %v1559 = vadd.f32 %v1206, %v1558
      %v1560 = vpop.f32.mrb[0].mxu0
      %v1561 = vadd.f32 %v1208, %v1560
      %v1562 = vpop.f32.mrb[0].mxu0
      %v1563 = vadd.f32 %v1210, %v1562
      %v1564 = vpop.f32.mrb[0].mxu0
      %v1565 = vadd.f32 %v1212, %v1564
      %1566 = vmatprep.mubr.bf16.mxu0 0
      %1567 = vmatmul.mubr.bf16.gmra.mrb[0].mxu0 %v681
      %v1568 = vpop.f32.mrb[0].mxu0
      %v1569 = vadd.f32 %v1216, %v1568
      %v1570 = vpop.f32.mrb[0].mxu0
      %v1571 = vadd.f32 %v1218, %v1570
      %v1572 = vpop.f32.mrb[0].mxu0
      %v1573 = vadd.f32 %v1220, %v1572
      %v1574 = vpop.f32.mrb[0].mxu0
      %v1575 = vadd.f32 %v1222, %v1574
      %1576 = vmatprep.mubr.bf16.mxu0 0
      %1577 = vmatmul.mubr.bf16.gmra.mrb[0].mxu0 %v684
      %v1578 = vpop.f32.mrb[0].mxu0
      %v1579 = vadd.f32 %v1226, %v1578
      %v1580 = vpop.f32.mrb[0].mxu0
      %v1581 = vadd.f32 %v1228, %v1580
      %v1582 = vpop.f32.mrb[0].mxu0
      %v1583 = vadd.f32 %v1230, %v1582
      %v1584 = vpop.f32.mrb[0].mxu0
      %v1585 = vadd.f32 %v1232, %v1584
      %1586 = vmatprep.mubr.bf16.mxu0 0
      %1587 = vmatmul.mubr.bf16.gmra.mrb[0].mxu0 %v687
      %v1588 = vpop.f32.mrb[0].mxu0
      %v1589 = vadd.f32 %v1236, %v1588
      %v1590 = vpop.f32.mrb[0].mxu0
      %v1591 = vadd.f32 %v1238, %v1590
      %v1592 = vpop.f32.mrb[0].mxu0
      %v1593 = vadd.f32 %v1240, %v1592
      %v1594 = vpop.f32.mrb[0].mxu0
      %v1595 = vadd.f32 %v1242, %v1594
      %1596 = vmatprep.mubr.bf16.mxu0 0
      %1597 = vmatmul.mubr.bf16.gmra.mrb[0].mxu0 %v690
      %v1598 = vpop.f32.mrb[0].mxu0
      %v1599 = vadd.f32 %v1246, %v1598
      %v1600 = vpop.f32.mrb[0].mxu0
      %v1601 = vadd.f32 %v1248, %v1600
      %v1602 = vpop.f32.mrb[0].mxu0
      %v1603 = vadd.f32 %v1250, %v1602
      %v1604 = vpop.f32.mrb[0].mxu0
      %v1605 = vadd.f32 %v1252, %v1604
      %1606 = vmatprep.mubr.bf16.mxu0 0
      %1607 = vmatmul.mubr.bf16.gmra.mrb[0].mxu0 %v693
      %v1608 = vpop.f32.mrb[0].mxu0
      %v1609 = vadd.f32 %v1256, %v1608
      %v1610 = vpop.f32.mrb[0].mxu0
      %v1611 = vadd.f32 %v1258, %v1610
      %v1612 = vpop.f32.mrb[0].mxu0
      %v1613 = vadd.f32 %v1260, %v1612
      %v1614 = vpop.f32.mrb[0].mxu0
      %v1615 = vadd.f32 %v1262, %v1614
      %1616 = vmatprep.mubr.bf16.mxu0 0
      %1617 = vmatmul.mubr.bf16.gmra.mrb[0].mxu0 %v696
      %v1618 = vpop.f32.mrb[0].mxu0
      %v1619 = vadd.f32 %v1266, %v1618
      %v1620 = vpop.f32.mrb[0].mxu0
      %v1621 = vadd.f32 %v1268, %v1620
      %v1622 = vpop.f32.mrb[0].mxu0
      %v1623 = vadd.f32 %v1270, %v1622
      %v1624 = vpop.f32.mrb[0].mxu0
      %v1625 = vadd.f32 %v1272, %v1624
      %1626 = vmatprep.mubr.bf16.mxu0 0
      %1627 = vmatmul.mubr.bf16.gmra.mrb[0].mxu0 %v699
      %v1628 = vpop.f32.mrb[0].mxu0
      %v1629 = vadd.f32 %v1276, %v1628
      %v1630 = vpop.f32.mrb[0].mxu0
      %v1631 = vadd.f32 %v1278, %v1630
      %v1632 = vpop.f32.mrb[0].mxu0
      %v1633 = vadd.f32 %v1280, %v1632
      %v1634 = vpop.f32.mrb[0].mxu0
      %v1635 = vadd.f32 %v1282, %v1634
      %1636 = vmatprep.mubr.bf16.mxu0 0
      %1637 = vmatmul.mubr.bf16.gmra.mrb[0].mxu0 %v702
      %v1638 = vpop.f32.mrb[0].mxu0
      %v1639 = vadd.f32 %v1286, %v1638
      %v1640 = vpop.f32.mrb[0].mxu0
      %v1641 = vadd.f32 %v1288, %v1640
      %v1642 = vpop.f32.mrb[0].mxu0
      %v1643 = vadd.f32 %v1290, %v1642
      %v1644 = vpop.f32.mrb[0].mxu0
      %v1645 = vadd.f32 %v1292, %v1644
      %1646 = vmatprep.mubr.bf16.mxu0 0
      %1647 = vmatmul.mubr.bf16.gmra.mrb[0].mxu0 %v705
      %v1648 = vpop.f32.mrb[0].mxu0
      %v1649 = vadd.f32 %v1296, %v1648
      %v1650 = vpop.f32.mrb[0].mxu0
      %v1651 = vadd.f32 %v1298, %v1650
      %v1652 = vpop.f32.mrb[0].mxu0
      %v1653 = vadd.f32 %v1300, %v1652
      %v1654 = vpop.f32.mrb[0].mxu0
      %v1655 = vadd.f32 %v1302, %v1654
      %1656 = vmatprep.mubr.bf16.mxu0 0
      %1657 = vmatmul.mubr.bf16.gmra.mrb[0].mxu0 %v708
      %v1658 = vpop.f32.mrb[0].mxu0
      %v1659 = vadd.f32 %v1306, %v1658
      %v1660 = vpop.f32.mrb[0].mxu0
      %v1661 = vadd.f32 %v1308, %v1660
      %v1662 = vpop.f32.mrb[0].mxu0
      %v1663 = vadd.f32 %v1310, %v1662
      %v1664 = vpop.f32.mrb[0].mxu0
      %v1665 = vadd.f32 %v1312, %v1664
      %1666 = vmatprep.mubr.bf16.mxu0 0
      %1667 = vmatmul.mubr.bf16.gmra.mrb[0].mxu0 %v711
      %v1668 = vpop.f32.mrb[0].mxu0
      %v1669 = vadd.f32 %v1316, %v1668
      %v1670 = vpop.f32.mrb[0].mxu0
      %v1671 = vadd.f32 %v1318, %v1670
      %v1672 = vpop.f32.mrb[0].mxu0
      %v1673 = vadd.f32 %v1320, %v1672
      %v1674 = vpop.f32.mrb[0].mxu0
      %v1675 = vadd.f32 %v1322, %v1674
      %1676 = vmatprep.mubr.bf16.mxu0 0
      %1677 = vmatmul.mubr.bf16.gmra.mrb[0].mxu0 %v714
      %v1678 = vpop.f32.mrb[0].mxu0
      %v1679 = vadd.f32 %v1326, %v1678
      %v1680 = vpop.f32.mrb[0].mxu0
      %v1681 = vadd.f32 %v1328, %v1680
      %v1682 = vpop.f32.mrb[0].mxu0
      %v1683 = vadd.f32 %v1330, %v1682
      %v1684 = vpop.f32.mrb[0].mxu0
      %v1685 = vadd.f32 %v1332, %v1684
      %1686 = vmatprep.mubr.bf16.mxu0 0
      %1687 = vmatmul.mubr.bf16.gmra.mrb[0].mxu0 %v717
      %v1688 = vpop.f32.mrb[0].mxu0
      %v1689 = vadd.f32 %v1336, %v1688
      %v1690 = vpop.f32.mrb[0].mxu0
      %v1691 = vadd.f32 %v1338, %v1690
      %v1692 = vpop.f32.mrb[0].mxu0
      %v1693 = vadd.f32 %v1340, %v1692
      %v1694 = vpop.f32.mrb[0].mxu0
      %v1695 = vadd.f32 %v1342, %v1694
      %1696 = vmatprep.mubr.bf16.mxu0 0
      %1697 = vmatmul.mubr.bf16.gmra.mrb[0].mxu0 %v720
      %v1698 = vpop.f32.mrb[0].mxu0
      %v1699 = vadd.f32 %v1346, %v1698
      %v1700 = vpop.f32.mrb[0].mxu0
      %v1701 = vadd.f32 %v1348, %v1700
      %v1702 = vpop.f32.mrb[0].mxu0
      %v1703 = vadd.f32 %v1350, %v1702
      %v1704 = vpop.f32.mrb[0].mxu0
      %v1705 = vadd.f32 %v1352, %v1704
      %1706 = vmatprep.mubr.bf16.mxu0 0
      %1707 = vmatmul.mubr.bf16.gmra.mrb[0].mxu0 %v723
      %v1708 = vpop.f32.mrb[0].mxu0
      %v1709 = vadd.f32 %v1356, %v1708
      %v1710 = vpop.f32.mrb[0].mxu0
      %v1711 = vadd.f32 %v1358, %v1710
      %v1712 = vpop.f32.mrb[0].mxu0
      %v1713 = vadd.f32 %v1360, %v1712
      %v1714 = vpop.f32.mrb[0].mxu0
      %v1715 = vadd.f32 %v1362, %v1714
      %1716 = vmatprep.mubr.bf16.mxu0 0
      %1717 = vmatmul.mubr.bf16.gmra.mrb[0].mxu0 %v726
      %v1718 = vpop.f32.mrb[0].mxu0
      %v1719 = vadd.f32 %v1366, %v1718
      %v1720 = vpop.f32.mrb[0].mxu0
      %v1721 = vadd.f32 %v1368, %v1720
      %v1722 = vpop.f32.mrb[0].mxu0
      %v1723 = vadd.f32 %v1370, %v1722
      %v1724 = vpop.f32.mrb[0].mxu0
      %v1725 = vadd.f32 %v1372, %v1724
      %1726 = vmatprep.mubr.bf16.mxu0 0
      %1727 = vmatmul.mubr.bf16.gmra.mrb[0].mxu0 %v729
      %v1728 = vpop.f32.mrb[0].mxu0
      %v1729 = vadd.f32 %v1376, %v1728
      %v1730 = vpop.f32.mrb[0].mxu0
      %v1731 = vadd.f32 %v1378, %v1730
      %v1732 = vpop.f32.mrb[0].mxu0
      %v1733 = vadd.f32 %v1380, %v1732
      %v1734 = vpop.f32.mrb[0].mxu0
      %v1735 = vadd.f32 %v1382, %v1734
      %1736 = vmatprep.mubr.bf16.mxu0 0
      %1737 = vmatmul.mubr.bf16.gmra.mrb[0].mxu0 %v732
      %v1738 = vpop.f32.mrb[0].mxu0
      %v1739 = vadd.f32 %v1386, %v1738
      %v1740 = vpop.f32.mrb[0].mxu0
      %v1741 = vadd.f32 %v1388, %v1740
      %v1742 = vpop.f32.mrb[0].mxu0
      %v1743 = vadd.f32 %v1390, %v1742
      %v1744 = vpop.f32.mrb[0].mxu0
      %v1745 = vadd.f32 %v1392, %v1744
      %1746 = vmatprep.mubr.bf16.mxu0 0
      %1747 = vmatmul.mubr.bf16.gmra.mrb[0].mxu0 %v735
      %v1748 = vpop.f32.mrb[0].mxu0
      %v1749 = vadd.f32 %v1396, %v1748
      %v1750 = vpop.f32.mrb[0].mxu0
      %v1751 = vadd.f32 %v1398, %v1750
      %v1752 = vpop.f32.mrb[0].mxu0
      %v1753 = vadd.f32 %v1400, %v1752
      %v1754 = vpop.f32.mrb[0].mxu0
      %v1755 = vadd.f32 %v1402, %v1754
      %1756 = vmatprep.mubr.bf16.mxu0 0
      %1757 = vmatmul.mubr.bf16.gmra.mrb[0].mxu0 %v738
      %v1758 = vpop.f32.mrb[0].mxu0
      %v1759 = vadd.f32 %v1406, %v1758
      %v1760 = vpop.f32.mrb[0].mxu0
      %v1761 = vadd.f32 %v1408, %v1760
      %v1762 = vpop.f32.mrb[0].mxu0
      %v1763 = vadd.f32 %v1410, %v1762
      %v1764 = vpop.f32.mrb[0].mxu0
      %v1765 = vadd.f32 %v1412, %v1764
      %1766 = vmatprep.mubr.bf16.mxu0 0
      %1767 = vmatmul.mubr.bf16.gmra.mrb[0].mxu0 %v741
      %v1768 = vpop.f32.mrb[0].mxu0
      %v1769 = vadd.f32 %v1416, %v1768
      %v1770 = vpop.f32.mrb[0].mxu0
      %v1771 = vadd.f32 %v1418, %v1770
      %v1772 = vpop.f32.mrb[0].mxu0
      %v1773 = vadd.f32 %v1420, %v1772
      %v1774 = vpop.f32.mrb[0].mxu0
      %v1775 = vadd.f32 %v1422, %v1774
      %1776 = vmatprep.mubr.bf16.mxu0 0
      %1777 = vmatmul.mubr.bf16.gmra.mrb[0].mxu0 %v744
      %v1778 = vpop.f32.mrb[0].mxu0
      %v1779 = vadd.f32 %v1426, %v1778
      %v1780 = vpop.f32.mrb[0].mxu0
      %v1781 = vadd.f32 %v1428, %v1780
      %v1782 = vpop.f32.mrb[0].mxu0
      %v1783 = vadd.f32 %v1430, %v1782
      %v1784 = vpop.f32.mrb[0].mxu0
      %v1785 = vadd.f32 %v1432, %v1784
      %1786 = vdwg.mxu0
      %1787 = vst [vmem:[%s150] sm:$0xff] %v1469
      %1788 = vst [vmem:[%s150 + $0x8] sm:$0xff] %v1471
      %1789 = vst [vmem:[%s150 + $0x10] sm:$0xff] %v1473
      %1790 = vst [vmem:[%s150 + $0x18] sm:$0xff] %v1475
      %1791 = vst [vmem:[%s150 + $0x20] sm:$0xff] %v1479
      %1792 = vst [vmem:[%s150 + $0x28] sm:$0xff] %v1481
      %1793 = vst [vmem:[%s150 + $0x30] sm:$0xff] %v1483
      %1794 = vst [vmem:[%s150 + $0x38] sm:$0xff] %v1485
      %1795 = vst [vmem:[%s150 + $0x40] sm:$0xff] %v1489
      %1796 = vst [vmem:[%s150 + $0x48] sm:$0xff] %v1491
      %1797 = vst [vmem:[%s150 + $0x50] sm:$0xff] %v1493
      %1798 = vst [vmem:[%s150 + $0x58] sm:$0xff] %v1495
      %1799 = vst [vmem:[%s150 + $0x60] sm:$0xff] %v1499
      %1800 = vst [vmem:[%s150 + $0x68] sm:$0xff] %v1501
      %1801 = vst [vmem:[%s150 + $0x70] sm:$0xff] %v1503
      %1802 = vst [vmem:[%s150 + $0x78] sm:$0xff] %v1505
      %1803 = vst [vmem:[%s150 + $0x80] sm:$0xff] %v1509
      %1804 = vst [vmem:[%s150 + $0x88] sm:$0xff] %v1511
      %1805 = vst [vmem:[%s150 + $0x90] sm:$0xff] %v1513
      %1806 = vst [vmem:[%s150 + $0x98] sm:$0xff] %v1515
      %1807 = vst [vmem:[%s150 + $0xa0] sm:$0xff] %v1519
      %1808 = vst [vmem:[%s150 + $0xa8] sm:$0xff] %v1521
      %1809 = vst [vmem:[%s150 + $0xb0] sm:$0xff] %v1523
      %1810 = vst [vmem:[%s150 + $0xb8] sm:$0xff] %v1525
      %1811 = vst [vmem:[%s150 + $0xc0] sm:$0xff] %v1529
      %1812 = vst [vmem:[%s150 + $0xc8] sm:$0xff] %v1531
      %1813 = vst [vmem:[%s150 + $0xd0] sm:$0xff] %v1533
      %1814 = vst [vmem:[%s150 + $0xd8] sm:$0xff] %v1535
      %1815 = vst [vmem:[%s150 + $0xe0] sm:$0xff] %v1539
      %1816 = vst [vmem:[%s150 + $0xe8] sm:$0xff] %v1541
      %1817 = vst [vmem:[%s150 + $0xf0] sm:$0xff] %v1543
      %1818 = vst [vmem:[%s150 + $0xf8] sm:$0xff] %v1545
      %1819 = vst [vmem:[%s150 + $0x100] sm:$0xff] %v1549
      %1820 = vst [vmem:[%s150 + $0x108] sm:$0xff] %v1551
      %1821 = vst [vmem:[%s150 + $0x110] sm:$0xff] %v1553
      %1822 = vst [vmem:[%s150 + $0x118] sm:$0xff] %v1555
      %1823 = vst [vmem:[%s150 + $0x120] sm:$0xff] %v1559
      %1824 = vst [vmem:[%s150 + $0x128] sm:$0xff] %v1561
      %1825 = vst [vmem:[%s150 + $0x130] sm:$0xff] %v1563
      %1826 = vst [vmem:[%s150 + $0x138] sm:$0xff] %v1565
      %1827 = vst [vmem:[%s150 + $0x140] sm:$0xff] %v1569
      %1828 = vst [vmem:[%s150 + $0x148] sm:$0xff] %v1571
      %1829 = vst [vmem:[%s150 + $0x150] sm:$0xff] %v1573
      %1830 = vst [vmem:[%s150 + $0x158] sm:$0xff] %v1575
      %1831 = vst [vmem:[%s150 + $0x160] sm:$0xff] %v1579
      %1832 = vst [vmem:[%s150 + $0x168] sm:$0xff] %v1581
      %1833 = vst [vmem:[%s150 + $0x170] sm:$0xff] %v1583
      %1834 = vst [vmem:[%s150 + $0x178] sm:$0xff] %v1585
      %1835 = vst [vmem:[%s150 + $0x180] sm:$0xff] %v1589
      %1836 = vst [vmem:[%s150 + $0x188] sm:$0xff] %v1591
      %1837 = vst [vmem:[%s150 + $0x190] sm:$0xff] %v1593
      %1838 = vst [vmem:[%s150 + $0x198] sm:$0xff] %v1595
      %1839 = vst [vmem:[%s150 + $0x1a0] sm:$0xff] %v1599
      %1840 = vst [vmem:[%s150 + $0x1a8] sm:$0xff] %v1601
      %1841 = vst [vmem:[%s150 + $0x1b0] sm:$0xff] %v1603
      %1842 = vst [vmem:[%s150 + $0x1b8] sm:$0xff] %v1605
      %1843 = vst [vmem:[%s150 + $0x1c0] sm:$0xff] %v1609
      %1844 = vst [vmem:[%s150 + $0x1c8] sm:$0xff] %v1611
      %1845 = vst [vmem:[%s150 + $0x1d0] sm:$0xff] %v1613
      %1846 = vst [vmem:[%s150 + $0x1d8] sm:$0xff] %v1615
      %1847 = vst [vmem:[%s150 + $0x1e0] sm:$0xff] %v1619
      %1848 = vst [vmem:[%s150 + $0x1e8] sm:$0xff] %v1621
      %1849 = vst [vmem:[%s150 + $0x1f0] sm:$0xff] %v1623
      %1850 = vst [vmem:[%s150 + $0x1f8] sm:$0xff] %v1625
      %1851 = vst [vmem:[%s150 + $0x200] sm:$0xff] %v1629
      %1852 = vst [vmem:[%s150 + $0x208] sm:$0xff] %v1631
      %1853 = vst [vmem:[%s150 + $0x210] sm:$0xff] %v1633
      %1854 = vst [vmem:[%s150 + $0x218] sm:$0xff] %v1635
      %1855 = vst [vmem:[%s150 + $0x220] sm:$0xff] %v1639
      %1856 = vst [vmem:[%s150 + $0x228] sm:$0xff] %v1641
      %1857 = vst [vmem:[%s150 + $0x230] sm:$0xff] %v1643
      %1858 = vst [vmem:[%s150 + $0x238] sm:$0xff] %v1645
      %1859 = vst [vmem:[%s150 + $0x240] sm:$0xff] %v1649
      %1860 = vst [vmem:[%s150 + $0x248] sm:$0xff] %v1651
      %1861 = vst [vmem:[%s150 + $0x250] sm:$0xff] %v1653
      %1862 = vst [vmem:[%s150 + $0x258] sm:$0xff] %v1655
      %1863 = vst [vmem:[%s150 + $0x260] sm:$0xff] %v1659
      %1864 = vst [vmem:[%s150 + $0x268] sm:$0xff] %v1661
      %1865 = vst [vmem:[%s150 + $0x270] sm:$0xff] %v1663
      %1866 = vst [vmem:[%s150 + $0x278] sm:$0xff] %v1665
      %1867 = vst [vmem:[%s150 + $0x280] sm:$0xff] %v1669
      %1868 = vst [vmem:[%s150 + $0x288] sm:$0xff] %v1671
      %1869 = vst [vmem:[%s150 + $0x290] sm:$0xff] %v1673
      %1870 = vst [vmem:[%s150 + $0x298] sm:$0xff] %v1675
      %1871 = vst [vmem:[%s150 + $0x2a0] sm:$0xff] %v1679
      %1872 = vst [vmem:[%s150 + $0x2a8] sm:$0xff] %v1681
      %1873 = vst [vmem:[%s150 + $0x2b0] sm:$0xff] %v1683
      %1874 = vst [vmem:[%s150 + $0x2b8] sm:$0xff] %v1685
      %1875 = vst [vmem:[%s150 + $0x2c0] sm:$0xff] %v1689
      %1876 = vst [vmem:[%s150 + $0x2c8] sm:$0xff] %v1691
      %1877 = vst [vmem:[%s150 + $0x2d0] sm:$0xff] %v1693
      %1878 = vst [vmem:[%s150 + $0x2d8] sm:$0xff] %v1695
      %1879 = vst [vmem:[%s150 + $0x2e0] sm:$0xff] %v1699
      %1880 = vst [vmem:[%s150 + $0x2e8] sm:$0xff] %v1701
      %1881 = vst [vmem:[%s150 + $0x2f0] sm:$0xff] %v1703
      %1882 = vst [vmem:[%s150 + $0x2f8] sm:$0xff] %v1705
      %1883 = vst [vmem:[%s150 + $0x300] sm:$0xff] %v1709
      %1884 = vst [vmem:[%s150 + $0x308] sm:$0xff] %v1711
      %1885 = vst [vmem:[%s150 + $0x310] sm:$0xff] %v1713
      %1886 = vst [vmem:[%s150 + $0x318] sm:$0xff] %v1715
      %1887 = vst [vmem:[%s150 + $0x320] sm:$0xff] %v1719
      %1888 = vst [vmem:[%s150 + $0x328] sm:$0xff] %v1721
      %1889 = vst [vmem:[%s150 + $0x330] sm:$0xff] %v1723
      %1890 = vst [vmem:[%s150 + $0x338] sm:$0xff] %v1725
      %1891 = vst [vmem:[%s150 + $0x340] sm:$0xff] %v1729
      %1892 = vst [vmem:[%s150 + $0x348] sm:$0xff] %v1731
      %1893 = vst [vmem:[%s150 + $0x350] sm:$0xff] %v1733
      %1894 = vst [vmem:[%s150 + $0x358] sm:$0xff] %v1735
      %1895 = vst [vmem:[%s150 + $0x360] sm:$0xff] %v1739
      %1896 = vst [vmem:[%s150 + $0x368] sm:$0xff] %v1741
      %1897 = vst [vmem:[%s150 + $0x370] sm:$0xff] %v1743
      %1898 = vst [vmem:[%s150 + $0x378] sm:$0xff] %v1745
      %1899 = vst [vmem:[%s150 + $0x380] sm:$0xff] %v1749
      %1900 = vst [vmem:[%s150 + $0x388] sm:$0xff] %v1751
      %1901 = vst [vmem:[%s150 + $0x390] sm:$0xff] %v1753
      %1902 = vst [vmem:[%s150 + $0x398] sm:$0xff] %v1755
      %1903 = vst [vmem:[%s150 + $0x3a0] sm:$0xff] %v1759
      %1904 = vst [vmem:[%s150 + $0x3a8] sm:$0xff] %v1761
      %1905 = vst [vmem:[%s150 + $0x3b0] sm:$0xff] %v1763
      %1906 = vst [vmem:[%s150 + $0x3b8] sm:$0xff] %v1765
      %1907 = vst [vmem:[%s150 + $0x3c0] sm:$0xff] %v1769
      %1908 = vst [vmem:[%s150 + $0x3c8] sm:$0xff] %v1771
      %1909 = vst [vmem:[%s150 + $0x3d0] sm:$0xff] %v1773
      %1910 = vst [vmem:[%s150 + $0x3d8] sm:$0xff] %v1775
      %1911 = vst [vmem:[%s150 + $0x3e0] sm:$0xff] %v1779
      %1912 = vst [vmem:[%s150 + $0x3e8] sm:$0xff] %v1781
      %1913 = vst [vmem:[%s150 + $0x3f0] sm:$0xff] %v1783
      %1914 = vst [vmem:[%s150 + $0x3f8] sm:$0xff] %v1785
      %s1915 = smul.u32 64, %s13
      %p1916 = scmp.lt.s32.totalorder %s1915, 191
      %s1917 = scalar_select %p1916, %s1915, 191
      %s1918 = smul.addr %s1917, 2
      %s1919 = smul.addr %s1918, 8
      %s1920 = scalar_lea.vmem %s2, %s1919
      // Predicated region
      $region29: #{union_model_forward.5} parent=27 // pred_check
        %p1921 = pneg %p78
      $region30: #{union_model_forward.5} parent=27 // pred_check_branch
        %1923 = sbr.rel (%p1921) target = $region32
      $region31: #{union_model_forward.5} parent=27 // pred_region
        %s1924 = smul.u32 64, %s13
      $region32: #{union_model_forward.5} parent=27 // pred_fallthru
        _
    $region28: #{union_model_forward.5} parent=5 // pred_fallthru
      _
    %p1925 = scmp.le.s32.totalorder 2, %s8
    // Predicated region
    $region33: #{union_model_forward.5} parent=5 // pred_check
      %p1926 = pneg %p1925
    $region34: #{union_model_forward.5} parent=5 // pred_check_branch
      %1928 = sbr.rel (%p1926) target = $region36
    $region35: #{union_model_forward.5} parent=5 // pred_region
      %s1929 = ssub.s32 %s8, 2
      // Predicated region
      $region37: #{union_model_forward.5} parent=35 // pred_check
        %p1930 = pneg %p84
      $region38: #{union_model_forward.5} parent=35 // pred_check_branch
        %1932 = sbr.rel (%p1930) target = $region40
      $region39: #{union_model_forward.5} parent=35 // pred_region
        %s1933 = smul.u32 64, %s14
        %p1934 = scmp.lt.s32.totalorder %s1933, 191
        %s1935 = scalar_select %p1934, %s1933, 191
        %s1936 = smul.addr %s1935, 2
        %s1937 = smul.addr %s1936, 8
        %s1938 = scalar_lea.vmem %s2, %s1937
      $region40: #{union_model_forward.5} parent=35 // pred_fallthru
        _
    $region36: #{union_model_forward.5} parent=5 // pred_fallthru
      _
  $region6: #{union_model_forward.5} parent=0 // loop_footer
    %s12 = sadd.s32 1, %s8
  $region7: #{union_model_forward.5} parent=0 // loop_footer_branch
    %7 = sbr.rel target = $region3
  $region8: #{union_model_forward.5} parent=0 // loop_exit
    _

</llo_original>
